<compile_context>
chip_gen: v7x
topology: tpu7x:2x2x1
jax: 0.10.0
libtpu: 0.0.40
codegen_flags: <defaults>
</compile_context>

<pallas_src>
import functools

import numpy as np
import jax
import jax.numpy as jnp
from jax.experimental import pallas as pl
from jax.experimental.pallas import tpu as pltpu


# ---------------------------------------------------------------------------
# Pallas kernel: one wavelength (all B profiles) x one Mx output tile per step.
# ---------------------------------------------------------------------------
def _propagate_kernel(amp_ref, phase_ref, ap_ref, ang_ref,
                      fy_ref, fxT_ref, pre_ref,
                      out0_ref, out1_ref,
                      *, fuse_epilogue, precision):
    dot = functools.partial(jnp.dot, preferred_element_type=jnp.float32,
                            precision=precision)

    def cmm3(ar, ai, asum, br, bi, bsum):
        # (ar + i ai) @ (br + i bi) with 3 real matmuls (Gauss trick).
        t1 = dot(ar, br)
        t2 = dot(ai, bi)
        t3 = dot(asum, bsum)
        return t1 - t2, t3 - t1 - t2

    B, Ny, Nx = amp_ref.shape

    # Field assembly: aperture-masked amplitude, phase already includes the input
    # quadratic phase angle (folded host-side).  U = a * exp(i*(phi + ang)).
    a = amp_ref[...] * ap_ref[...]          # (B,Ny,Nx) * (Ny,Nx) broadcast
    ph = phase_ref[...] + ang_ref[...]
    ur = a * jnp.cos(ph)
    ui = a * jnp.sin(ph)

    fx_r = fxT_ref[0]                       # (Nx, mx_t)
    fx_i = fxT_ref[1]
    fx_s = fx_r + fx_i
    fy_r = fy_ref[0]                        # (My, Ny)
    fy_i = fy_ref[1]
    fy_s = fy_r + fy_i
    pu_r = pre_ref[0]                       # (My, mx_t) unit-magnitude prefactor
    pu_i = pre_ref[1]

    # ---- x-transform:  W = U @ FxT, batched over B as one wide matmul (M = B*Ny)
    if B == 1 or Ny % 8 == 0:
        ur2 = ur.reshape(B * Ny, Nx)
        ui2 = ui.reshape(B * Ny, Nx)
        wr, wi = cmm3(ur2, ui2, ur2 + ui2, fx_r, fx_i, fx_s)
        w_parts = [(wr[b * Ny:(b + 1) * Ny], wi[b * Ny:(b + 1) * Ny])
                   for b in range(B)]
    else:
        # Sublane-unaligned Ny: keep per-profile matmuls (still correct).
        w_parts = [cmm3(ur[b], ui[b], ur[b] + ui[b], fx_r, fx_i, fx_s)
                   for b in range(B)]

    # ---- y-transform + epilogue per profile:  V = Fy @ W[b]
    for b in range(B):
        wrb, wib = w_parts[b]
        vr, vi = cmm3(fy_r, fy_i, fy_s, wrb, wib, wrb + wib)   # (My, mx_t)
        if fuse_epilogue:
            # |pre_u| == 1, and 1/(lambda z) is already folded into Fy/FxT, so
            # amplitude = |V| and phase = angle(V * pre_u).
            out0_ref[b] = jnp.sqrt(vr * vr + vi * vi)
            fr = vr * pu_r - vi * pu_i
            fi = vr * pu_i + vi * pu_r
            out1_ref[b] = jnp.arctan2(fi, fr)
        else:
            # Fallback variant: emit real/imag; sqrt/atan2 done in XLA outside.
            out0_ref[b] = vr * pu_r - vi * pu_i
            out1_ref[b] = vr * pu_i + vi * pu_r


# ---------------------------------------------------------------------------
# Host-side parameter / propagation-term construction (numpy, done once).
# ---------------------------------------------------------------------------
def _centered_coords(n, d):
    return (np.arange(n) - (n - 1) / 2.0) * d


def _gen_aperture_disk(params):
    Ny, Nx = params["ms_samplesM"]["y"], params["ms_samplesM"]["x"]
    dy, dx = params["ms_dx_m"]["y"], params["ms_dx_m"]["x"]
    y = _centered_coords(Ny, dy)[:, None]
    x = _centered_coords(Nx, dx)[None, :]
    radius = 0.5 * min(Ny * dy, Nx * dx)
    return (np.sqrt(x * x + y * y) <= radius).astype(np.float32)


def _make_complex_terms(params):
    """complex128 propagation terms (single source of truth for kernel + reference)."""
    wls = np.asarray(params["wavelength_set_m"], dtype=np.float64)
    z = float(params["sensor_distance_m"])
    Ny, Nx = params["ms_samplesM"]["y"], params["ms_samplesM"]["x"]
    dy, dx = params["ms_dx_m"]["y"], params["ms_dx_m"]["x"]
    My, Mx = params["sensor_pixel_number"]["y"], params["sensor_pixel_number"]["x"]
    dyo, dxo = params["sensor_dx_m"]["y"], params["sensor_dx_m"]["x"]

    y_in, x_in = _centered_coords(Ny, dy), _centered_coords(Nx, dx)
    y_out, x_out = _centered_coords(My, dyo), _centered_coords(Mx, dxo)

    quad, fy, fxT, pre = [], [], [], []
    for lam in wls:
        k = 2.0 * np.pi / lam
        quad.append(np.exp(1j * k * (x_in[None, :] ** 2 + y_in[:, None] ** 2) / (2.0 * z)))
        fy.append(np.exp(-1j * 2.0 * np.pi * np.outer(y_out, y_in) / (lam * z)) * dy)
        fxT.append(np.exp(-1j * 2.0 * np.pi * np.outer(x_in, x_out) / (lam * z)) * dx)
        pre.append((np.exp(1j * k * z) / (1j * lam * z))
                   * np.exp(1j * k * (x_out[None, :] ** 2 + y_out[:, None] ** 2) / (2.0 * z)))
    return dict(quad=np.stack(quad), fy=np.stack(fy), fxT=np.stack(fxT),
                pre=np.stack(pre), shapes=(Ny, Nx, My, Mx), wls=wls, z=z)


# ---------------------------------------------------------------------------
# VMEM budgeting / Mx tiling (keeps big problems inside v7x's 64 MiB VMEM).
# ---------------------------------------------------------------------------
def _estimate_vmem_bytes(B, Ny, Nx, My, mx):
    f32 = 4
    blocks = (2 * B * Ny * Nx      # amplitude + phase
              + 2 * Ny * Nx        # aperture + input quad angle
              + 2 * My * Ny        # fy  (re, im)
              + 2 * Nx * mx        # fxT (re, im)
              + 2 * My * mx        # unit prefactor (re, im)
              + 2 * B * My * mx)   # two outputs
    live = 3 * B * Ny * Nx + 3 * B * Ny * mx + 4 * My * mx
    return (2 * blocks + live) * f32      # x2 for double-buffering of blocks


def _choose_mx_tile(B, Ny, Nx, My, Mx, budget_bytes=44 << 20):
    if _estimate_vmem_bytes(B, Ny, Nx, My, Mx) <= budget_bytes or Mx % 128 != 0:
        return Mx
    for t in range(Mx, 0, -128):
        if Mx % t == 0 and _estimate_vmem_bytes(B, Ny, Nx, My, t) <= budget_bytes:
            return t
    return 128


# ---------------------------------------------------------------------------
# Module-equivalent wrapper.
# ---------------------------------------------------------------------------
class PropagatePlanesLayer:
    def __init__(self, params, matmul_precision=None):
        # matmul_precision: None/"default" keeps single-pass bf16 MXU; pass
        # jax.lax.Precision.HIGHEST deliberately if full f32 accuracy is needed.
        self.params = params
        self.matmul_precision = matmul_precision

        terms = _make_complex_terms(params)
        self.Ny, self.Nx, self.My, self.Mx = terms["shapes"]
        self.L = len(terms["wls"])

        # Scale split: fold sqrt(1/(lambda z)) into both propagation matrices so the
        # remaining output prefactor is unit-magnitude and intermediates stay small.
        s = 1.0 / (terms["wls"] * terms["z"])                  # (L,)
        fy_s = terms["fy"] * np.sqrt(s)[:, None, None]
        fxT_s = terms["fxT"] * np.sqrt(s)[:, None, None]
        pre_u = terms["pre"] / np.abs(terms["pre"])

        def pack(c):  # (L, ...) complex -> (L, 2, ...) float32 [real, imag]
            return jnp.asarray(np.stack([c.real, c.imag], axis=1), jnp.float32)

        self.aperture_trans = jnp.asarray(_gen_aperture_disk(params))          # (Ny,Nx)
        self.ang = jnp.asarray(np.angle(terms["quad"]), jnp.float32)           # (L,Ny,Nx)
        self.fy_ri = pack(fy_s)                                                # (L,2,My,Ny)
        self.fxT_ri = pack(fxT_s)                                              # (L,2,Nx,Mx)
        self.pre_ri = pack(pre_u)                                              # (L,2,My,Mx)

        self._fused = None   # decided on first call (arctan2 lowering probe)

    # ---- pallas_call construction -----------------------------------------
    def _propagate(self, amp, phase, fused):
        L, B, Ny, Nx = amp.shape
        My, Mx = self.My, self.Mx
        mx_t = _choose_mx_tile(B, Ny, Nx, My, Mx)
        n_xt = Mx // mx_t
        est = _estimate_vmem_bytes(B, Ny, Nx, My, mx_t)

        per_l4 = lambda l, t: (l, 0, 0, 0)
        per_l3 = lambda l, t: (l, 0, 0)
        per_lt = lambda l, t: (l, 0, 0, t)

        in_specs = [
            pl.BlockSpec((None, B, Ny, Nx), per_l4),          # amplitude
            pl.BlockSpec((None, B, Ny, Nx), per_l4),          # phase
            pl.BlockSpec((Ny, Nx), lambda l, t: (0, 0)),      # aperture (shared)
            pl.BlockSpec((None, Ny, Nx), per_l3),             # input quad-phase angle
            pl.BlockSpec((None, 2, My, Ny), per_l4),          # fy  (re, im)
            pl.BlockSpec((None, 2, Nx, mx_t), per_lt),        # fxT (re, im)
            pl.BlockSpec((None, 2, My, mx_t), per_lt),        # unit prefactor (re, im)
        ]
        out_specs = [
            pl.BlockSpec((None, B, My, mx_t), per_lt),
            pl.BlockSpec((None, B, My, mx_t), per_lt),
        ]
        out_shape = (jax.ShapeDtypeStruct((L, B, My, Mx), jnp.float32),
                     jax.ShapeDtypeStruct((L, B, My, Mx), jnp.float32))

        cp_kwargs = dict(dimension_semantics=("parallel", "parallel"))
        if est > (12 << 20):   # above the smallest default scoped-VMEM limit (v5e)
            cp_kwargs["vmem_limit_bytes"] = int(min(max(est * 5 // 4, 32 << 20), 56 << 20))

        kernel = functools.partial(_propagate_kernel,
                                   fuse_epilogue=fused,
                                   precision=self.matmul_precision)

        return pl.pallas_call(
            kernel,
            out_shape=out_shape,
            grid_spec=pltpu.PrefetchScalarGridSpec(
                num_scalar_prefetch=0,
                grid=(L, n_xt),                     # Mx-tile axis innermost so per-
                in_specs=in_specs,                  # wavelength blocks are DMA'd once
                out_specs=out_specs,
            ),
            compiler_params=pltpu.CompilerParams(**cp_kwargs),
        )(amp, phase, self.aperture_trans, self.ang,
          self.fy_ri, self.fxT_ri, self.pre_ri)

    # ---- forward -----------------------------------------------------------
    def __call__(self, inputs, batch_loop=False):
        amp, phase = inputs
        amp = jnp.asarray(amp, jnp.float32)
        phase = jnp.asarray(phase, jnp.float32)
        # Accept rank-3 (shared across wavelengths) or rank-4 inputs, as in the module.
        if amp.ndim == 3:
            amp = jnp.broadcast_to(amp[None], (self.L,) + amp.shape)
        if phase.ndim == 3:
            phase = jnp.broadcast_to(phase[None], (self.L,) + phase.shape)
        assert amp.shape == phase.shape
        L, B, Ny, Nx = amp.shape
        assert (L, Ny, Nx) == (self.L, self.Ny, self.Nx)

        if self._fused is None:
            # Probe the fully-fused (in-kernel sqrt/atan2) variant; if arctan2 does
            # not lower on this Mosaic build, fall back to the real/imag variant.
            try:
                out_a, out_p = self._propagate(amp, phase, fused=True)
                jax.block_until_ready((out_a, out_p))
                self._fused = True
                return [out_a, out_p]
            except Exception:
                self._fused = False

        if self._fused:
            out_a, out_p = self._propagate(amp, phase, fused=True)
            return [out_a, out_p]

        out_r, out_i = self._propagate(amp, phase, fused=False)
        out_amp = jnp.sqrt(out_r * out_r + out_i * out_i)
        out_phase = jnp.arctan2(out_i, out_r)
        return [out_amp, out_phase]


# ---------------------------------------------------------------------------
# Pure-numpy complex128 reference for the correctness check.
# ---------------------------------------------------------------------------
def _reference(amp, phase, params):
    c = _make_complex_terms(params)
    ap = _gen_aperture_disk(params).astype(np.float64)
    u = amp * ap * np.exp(1j * phase) * c["quad"][:, None]
    t = np.einsum("lmj,lbjn->lbmn", c["fy"], u)
    v = np.einsum("lbmj,ljn->lbmn", t, c["fxT"])
    return v * c["pre"][:, None]


if __name__ == "__main__":
    params = dict(
        wavelength_set_m=[450e-9, 550e-9, 650e-9],          # L = 3
        sensor_distance_m=1e-3,
        ms_samplesM=dict(y=16, x=16),
        ms_dx_m=dict(y=1e-6, x=1e-6),
        sensor_pixel_number=dict(y=16, x=16),
        sensor_dx_m=dict(y=2e-6, x=2e-6),
    )
    layer = PropagatePlanesLayer(params)

    L, B, Ny, Nx = 3, 2, 16, 16
    key = jax.random.PRNGKey(0)
    k_amp, k_ph = jax.random.split(key)
    field_amplitude = jax.random.uniform(k_amp, (L, B, Ny, Nx), jnp.float32, 0.5, 1.5)
    field_phase = jax.random.uniform(k_ph, (L, B, Ny, Nx), jnp.float32, -np.pi, np.pi)

    out_amp, out_phase = layer([field_amplitude, field_phase])
    jax.block_until_ready(out_amp)
    jax.block_until_ready(out_phase)

    # Correctness check against a complex128 reference.  Tolerance accounts for the
    # MXU's single-pass-bf16 default precision plus the 3-mult complex matmuls.
    ref = _reference(np.asarray(field_amplitude, np.float64),
                     np.asarray(field_phase, np.float64), params)
    got = np.asarray(out_amp, np.float64) * np.exp(1j * np.asarray(out_phase, np.float64))
    tol = 2e-3 * np.max(np.abs(ref))
    np.testing.assert_allclose(got.real, ref.real, atol=tol, rtol=0)
    np.testing.assert_allclose(got.imag, ref.imag, atol=tol, rtol=0)

    print("KERNEL_OK")
</pallas_src>

<mosaic_0001>
module attributes {stable_mosaic.version = 11 : i64} {
  func.func @_propagate_kernel(%arg0: i32, %arg1: i32, %arg2: memref<1x2x16x16xf32, #tpu.memory_space<vmem>>, %arg3: memref<1x2x16x16xf32, #tpu.memory_space<vmem>>, %arg4: memref<16x16xf32, #tpu.memory_space<vmem>>, %arg5: memref<1x16x16xf32, #tpu.memory_space<vmem>>, %arg6: memref<1x2x16x16xf32, #tpu.memory_space<vmem>>, %arg7: memref<1x2x16x16xf32, #tpu.memory_space<vmem>>, %arg8: memref<1x2x16x16xf32, #tpu.memory_space<vmem>>, %arg9: memref<1x2x16x16xf32, #tpu.memory_space<vmem>>, %arg10: memref<1x2x16x16xf32, #tpu.memory_space<vmem>>) attributes {dimension_semantics = [#tpu.dimension_semantics<parallel>, #tpu.dimension_semantics<parallel>], iteration_bounds = array<i64: 3, 1>, scalar_prefetch = 0 : i64, scratch_operands = 0 : i64, tpu.core_type = #tpu.core_type<tc>, window_params = [{transform_indices = @transform_0, window_bounds = array<i64: 1, 2, 16, 16>}, {transform_indices = @transform_1, window_bounds = array<i64: 1, 2, 16, 16>}, {pipeline_mode = #tpu.pipeline_mode<synchronous>, transform_indices = @transform_2, window_bounds = array<i64: 16, 16>}, {transform_indices = @transform_3, window_bounds = array<i64: 1, 16, 16>}, {transform_indices = @transform_4, window_bounds = array<i64: 1, 2, 16, 16>}, {transform_indices = @transform_5, window_bounds = array<i64: 1, 2, 16, 16>}, {transform_indices = @transform_6, window_bounds = array<i64: 1, 2, 16, 16>}, {transform_indices = @transform_7, window_bounds = array<i64: 1, 2, 16, 16>}, {transform_indices = @transform_8, window_bounds = array<i64: 1, 2, 16, 16>}]} {
    %c0 = arith.constant 0 : index
    %c0_0 = arith.constant 0 : index
    %c0_1 = arith.constant 0 : index
    %c0_2 = arith.constant 0 : index
    %0 = vector.load %arg2[%c0, %c0_0, %c0_1, %c0_2] : memref<1x2x16x16xf32, #tpu.memory_space<vmem>>, vector<1x2x16x16xf32>
    %1 = vector.shape_cast %0 : vector<1x2x16x16xf32> to vector<2x16x16xf32>
    %c0_3 = arith.constant 0 : index
    %c0_4 = arith.constant 0 : index
    %2 = vector.load %arg4[%c0_3, %c0_4] : memref<16x16xf32, #tpu.memory_space<vmem>>, vector<16x16xf32>
    %3 = vector.shape_cast %2 : vector<16x16xf32> to vector<1x16x16xf32>
    %4 = vector.broadcast %3 : vector<1x16x16xf32> to vector<2x16x16xf32>
    %5 = arith.mulf %1, %4 : vector<2x16x16xf32>
    %c0_5 = arith.constant 0 : index
    %c0_6 = arith.constant 0 : index
    %c0_7 = arith.constant 0 : index
    %c0_8 = arith.constant 0 : index
    %6 = vector.load %arg3[%c0_5, %c0_6, %c0_7, %c0_8] : memref<1x2x16x16xf32, #tpu.memory_space<vmem>>, vector<1x2x16x16xf32>
    %7 = vector.shape_cast %6 : vector<1x2x16x16xf32> to vector<2x16x16xf32>
    %c0_9 = arith.constant 0 : index
    %c0_10 = arith.constant 0 : index
    %c0_11 = arith.constant 0 : index
    %8 = vector.load %arg5[%c0_9, %c0_10, %c0_11] : memref<1x16x16xf32, #tpu.memory_space<vmem>>, vector<1x16x16xf32>
    %9 = vector.shape_cast %8 : vector<1x16x16xf32> to vector<16x16xf32>
    %10 = vector.shape_cast %9 : vector<16x16xf32> to vector<1x16x16xf32>
    %11 = vector.broadcast %10 : vector<1x16x16xf32> to vector<2x16x16xf32>
    %12 = arith.addf %7, %11 : vector<2x16x16xf32>
    %13 = math.cos %12 : vector<2x16x16xf32>
    %14 = arith.mulf %5, %13 : vector<2x16x16xf32>
    %15 = math.sin %12 : vector<2x16x16xf32>
    %16 = arith.mulf %5, %15 : vector<2x16x16xf32>
    %c0_12 = arith.constant 0 : index
    %c0_13 = arith.constant 0 : index
    %c0_14 = arith.constant 0 : index
    %c0_15 = arith.constant 0 : index
    %17 = vector.load %arg7[%c0_12, %c0_13, %c0_14, %c0_15] : memref<1x2x16x16xf32, #tpu.memory_space<vmem>>, vector<1x1x16x16xf32>
    %18 = vector.shape_cast %17 : vector<1x1x16x16xf32> to vector<16x16xf32>
    %c0_16 = arith.constant 0 : index
    %c1 = arith.constant 1 : index
    %c0_17 = arith.constant 0 : index
    %c0_18 = arith.constant 0 : index
    %19 = vector.load %arg7[%c0_16, %c1, %c0_17, %c0_18] : memref<1x2x16x16xf32, #tpu.memory_space<vmem>>, vector<1x1x16x16xf32>
    %20 = vector.shape_cast %19 : vector<1x1x16x16xf32> to vector<16x16xf32>
    %21 = arith.addf %18, %20 : vector<16x16xf32>
    %c0_19 = arith.constant 0 : index
    %c0_20 = arith.constant 0 : index
    %c0_21 = arith.constant 0 : index
    %c0_22 = arith.constant 0 : index
    %22 = vector.load %arg6[%c0_19, %c0_20, %c0_21, %c0_22] : memref<1x2x16x16xf32, #tpu.memory_space<vmem>>, vector<1x1x16x16xf32>
    %23 = vector.shape_cast %22 : vector<1x1x16x16xf32> to vector<16x16xf32>
    %c0_23 = arith.constant 0 : index
    %c1_24 = arith.constant 1 : index
    %c0_25 = arith.constant 0 : index
    %c0_26 = arith.constant 0 : index
    %24 = vector.load %arg6[%c0_23, %c1_24, %c0_25, %c0_26] : memref<1x2x16x16xf32, #tpu.memory_space<vmem>>, vector<1x1x16x16xf32>
    %25 = vector.shape_cast %24 : vector<1x1x16x16xf32> to vector<16x16xf32>
    %26 = arith.addf %23, %25 : vector<16x16xf32>
    %c0_27 = arith.constant 0 : index
    %c0_28 = arith.constant 0 : index
    %c0_29 = arith.constant 0 : index
    %c0_30 = arith.constant 0 : index
    %27 = vector.load %arg8[%c0_27, %c0_28, %c0_29, %c0_30] : memref<1x2x16x16xf32, #tpu.memory_space<vmem>>, vector<1x1x16x16xf32>
    %28 = vector.shape_cast %27 : vector<1x1x16x16xf32> to vector<16x16xf32>
    %c0_31 = arith.constant 0 : index
    %c1_32 = arith.constant 1 : index
    %c0_33 = arith.constant 0 : index
    %c0_34 = arith.constant 0 : index
    %29 = vector.load %arg8[%c0_31, %c1_32, %c0_33, %c0_34] : memref<1x2x16x16xf32, #tpu.memory_space<vmem>>, vector<1x1x16x16xf32>
    %30 = vector.shape_cast %29 : vector<1x1x16x16xf32> to vector<16x16xf32>
    %31 = vector.shape_cast %14 : vector<2x16x16xf32> to vector<32x16xf32>
    %32 = vector.shape_cast %16 : vector<2x16x16xf32> to vector<32x16xf32>
    %33 = arith.addf %31, %32 : vector<32x16xf32>
    %cst = arith.constant dense<0.000000e+00> : vector<32x16xf32>
    %34 = tpu.matmul %31, %18, %cst {dimension_numbers = #tpu.dot_dimension_numbers<[1], [0], [0], [1], [0, 0, 1, 1], [], []>} : vector<32x16xf32>, vector<16x16xf32>, vector<32x16xf32> -> vector<32x16xf32>
    %cst_35 = arith.constant dense<0.000000e+00> : vector<32x16xf32>
    %35 = tpu.matmul %32, %20, %cst_35 {dimension_numbers = #tpu.dot_dimension_numbers<[1], [0], [0], [1], [0, 0, 1, 1], [], []>} : vector<32x16xf32>, vector<16x16xf32>, vector<32x16xf32> -> vector<32x16xf32>
    %cst_36 = arith.constant dense<0.000000e+00> : vector<32x16xf32>
    %36 = tpu.matmul %33, %21, %cst_36 {dimension_numbers = #tpu.dot_dimension_numbers<[1], [0], [0], [1], [0, 0, 1, 1], [], []>} : vector<32x16xf32>, vector<16x16xf32>, vector<32x16xf32> -> vector<32x16xf32>
    %37 = arith.subf %34, %35 : vector<32x16xf32>
    %38 = arith.subf %36, %34 : vector<32x16xf32>
    %39 = arith.subf %38, %35 : vector<32x16xf32>
    %40 = vector.extract_strided_slice %37 {offsets = [0, 0], sizes = [16, 16], strides = [1, 1]} : vector<32x16xf32> to vector<16x16xf32>
    %41 = vector.extract_strided_slice %39 {offsets = [0, 0], sizes = [16, 16], strides = [1, 1]} : vector<32x16xf32> to vector<16x16xf32>
    %42 = vector.extract_strided_slice %37 {offsets = [16, 0], sizes = [16, 16], strides = [1, 1]} : vector<32x16xf32> to vector<16x16xf32>
    %43 = vector.extract_strided_slice %39 {offsets = [16, 0], sizes = [16, 16], strides = [1, 1]} : vector<32x16xf32> to vector<16x16xf32>
    %44 = arith.addf %40, %41 : vector<16x16xf32>
    %cst_37 = arith.constant dense<0.000000e+00> : vector<16x16xf32>
    %45 = tpu.matmul %23, %40, %cst_37 {dimension_numbers = #tpu.dot_dimension_numbers<[1], [0], [0], [1], [0, 0, 1, 1], [], []>} : vector<16x16xf32>, vector<16x16xf32>, vector<16x16xf32> -> vector<16x16xf32>
    %cst_38 = arith.constant dense<0.000000e+00> : vector<16x16xf32>
    %46 = tpu.matmul %25, %41, %cst_38 {dimension_numbers = #tpu.dot_dimension_numbers<[1], [0], [0], [1], [0, 0, 1, 1], [], []>} : vector<16x16xf32>, vector<16x16xf32>, vector<16x16xf32> -> vector<16x16xf32>
    %cst_39 = arith.constant dense<0.000000e+00> : vector<16x16xf32>
    %47 = tpu.matmul %26, %44, %cst_39 {dimension_numbers = #tpu.dot_dimension_numbers<[1], [0], [0], [1], [0, 0, 1, 1], [], []>} : vector<16x16xf32>, vector<16x16xf32>, vector<16x16xf32> -> vector<16x16xf32>
    %48 = arith.subf %45, %46 : vector<16x16xf32>
    %49 = arith.subf %47, %45 : vector<16x16xf32>
    %50 = arith.subf %49, %46 : vector<16x16xf32>
    %51 = arith.mulf %48, %48 : vector<16x16xf32>
    %52 = arith.mulf %50, %50 : vector<16x16xf32>
    %53 = arith.addf %51, %52 : vector<16x16xf32>
    %54 = math.sqrt %53 : vector<16x16xf32>
    %c0_40 = arith.constant 0 : index
    %c0_41 = arith.constant 0 : index
    %c0_42 = arith.constant 0 : index
    %c0_43 = arith.constant 0 : index
    %55 = vector.load %arg9[%c0_40, %c0_41, %c0_42, %c0_43] : memref<1x2x16x16xf32, #tpu.memory_space<vmem>>, vector<1x1x16x16xf32>
    %56 = vector.shape_cast %55 : vector<1x1x16x16xf32> to vector<16x16xf32>
    %57 = vector.shape_cast %54 : vector<16x16xf32> to vector<1x1x16x16xf32>
    tpu.vector_store %arg9[%c0_40, %c0_41, %c0_42, %c0_43], %57 {strides = array<i32>} : memref<1x2x16x16xf32, #tpu.memory_space<vmem>>, vector<1x1x16x16xf32>,
    %58 = arith.mulf %48, %28 : vector<16x16xf32>
    %59 = arith.mulf %50, %30 : vector<16x16xf32>
    %60 = arith.subf %58, %59 : vector<16x16xf32>
    %61 = arith.mulf %48, %30 : vector<16x16xf32>
    %62 = arith.mulf %50, %28 : vector<16x16xf32>
    %63 = arith.addf %61, %62 : vector<16x16xf32>
    %64 = math.atan2 %63, %60 : vector<16x16xf32>
    %c0_44 = arith.constant 0 : index
    %c0_45 = arith.constant 0 : index
    %c0_46 = arith.constant 0 : index
    %c0_47 = arith.constant 0 : index
    %65 = vector.load %arg10[%c0_44, %c0_45, %c0_46, %c0_47] : memref<1x2x16x16xf32, #tpu.memory_space<vmem>>, vector<1x1x16x16xf32>
    %66 = vector.shape_cast %65 : vector<1x1x16x16xf32> to vector<16x16xf32>
    %67 = vector.shape_cast %64 : vector<16x16xf32> to vector<1x1x16x16xf32>
    tpu.vector_store %arg10[%c0_44, %c0_45, %c0_46, %c0_47], %67 {strides = array<i32>} : memref<1x2x16x16xf32, #tpu.memory_space<vmem>>, vector<1x1x16x16xf32>,
    %68 = arith.addf %42, %43 : vector<16x16xf32>
    %cst_48 = arith.constant dense<0.000000e+00> : vector<16x16xf32>
    %69 = tpu.matmul %23, %42, %cst_48 {dimension_numbers = #tpu.dot_dimension_numbers<[1], [0], [0], [1], [0, 0, 1, 1], [], []>} : vector<16x16xf32>, vector<16x16xf32>, vector<16x16xf32> -> vector<16x16xf32>
    %cst_49 = arith.constant dense<0.000000e+00> : vector<16x16xf32>
    %70 = tpu.matmul %25, %43, %cst_49 {dimension_numbers = #tpu.dot_dimension_numbers<[1], [0], [0], [1], [0, 0, 1, 1], [], []>} : vector<16x16xf32>, vector<16x16xf32>, vector<16x16xf32> -> vector<16x16xf32>
    %cst_50 = arith.constant dense<0.000000e+00> : vector<16x16xf32>
    %71 = tpu.matmul %26, %68, %cst_50 {dimension_numbers = #tpu.dot_dimension_numbers<[1], [0], [0], [1], [0, 0, 1, 1], [], []>} : vector<16x16xf32>, vector<16x16xf32>, vector<16x16xf32> -> vector<16x16xf32>
    %72 = arith.subf %69, %70 : vector<16x16xf32>
    %73 = arith.subf %71, %69 : vector<16x16xf32>
    %74 = arith.subf %73, %70 : vector<16x16xf32>
    %75 = arith.mulf %72, %72 : vector<16x16xf32>
    %76 = arith.mulf %74, %74 : vector<16x16xf32>
    %77 = arith.addf %75, %76 : vector<16x16xf32>
    %78 = math.sqrt %77 : vector<16x16xf32>
    %c0_51 = arith.constant 0 : index
    %c1_52 = arith.constant 1 : index
    %c0_53 = arith.constant 0 : index
    %c0_54 = arith.constant 0 : index
    %79 = vector.load %arg9[%c0_51, %c1_52, %c0_53, %c0_54] : memref<1x2x16x16xf32, #tpu.memory_space<vmem>>, vector<1x1x16x16xf32>
    %80 = vector.shape_cast %79 : vector<1x1x16x16xf32> to vector<16x16xf32>
    %81 = vector.shape_cast %78 : vector<16x16xf32> to vector<1x1x16x16xf32>
    tpu.vector_store %arg9[%c0_51, %c1_52, %c0_53, %c0_54], %81 {strides = array<i32>} : memref<1x2x16x16xf32, #tpu.memory_space<vmem>>, vector<1x1x16x16xf32>,
    %82 = arith.mulf %72, %28 : vector<16x16xf32>
    %83 = arith.mulf %74, %30 : vector<16x16xf32>
    %84 = arith.subf %82, %83 : vector<16x16xf32>
    %85 = arith.mulf %72, %30 : vector<16x16xf32>
    %86 = arith.mulf %74, %28 : vector<16x16xf32>
    %87 = arith.addf %85, %86 : vector<16x16xf32>
    %88 = math.atan2 %87, %84 : vector<16x16xf32>
    %c0_55 = arith.constant 0 : index
    %c1_56 = arith.constant 1 : index
    %c0_57 = arith.constant 0 : index
    %c0_58 = arith.constant 0 : index
    %89 = vector.load %arg10[%c0_55, %c1_56, %c0_57, %c0_58] : memref<1x2x16x16xf32, #tpu.memory_space<vmem>>, vector<1x1x16x16xf32>
    %90 = vector.shape_cast %89 : vector<1x1x16x16xf32> to vector<16x16xf32>
    %91 = vector.shape_cast %88 : vector<16x16xf32> to vector<1x1x16x16xf32>
    tpu.vector_store %arg10[%c0_55, %c1_56, %c0_57, %c0_58], %91 {strides = array<i32>} : memref<1x2x16x16xf32, #tpu.memory_space<vmem>>, vector<1x1x16x16xf32>,
    return
  }
  func.func @transform_0(%arg0: i32, %arg1: i32) -> (i32, i32, i32, i32) {
    %c0_i32 = arith.constant 0 : i32
    %c0_i32_0 = arith.constant 0 : i32
    %c0_i32_1 = arith.constant 0 : i32
    %c0_i32_2 = arith.constant 0 : i32
    return %arg0, %c0_i32, %c0_i32_0, %c0_i32_1 : i32, i32, i32, i32
  }
  func.func @transform_1(%arg0: i32, %arg1: i32) -> (i32, i32, i32, i32) {
    %c0_i32 = arith.constant 0 : i32
    %c0_i32_0 = arith.constant 0 : i32
    %c0_i32_1 = arith.constant 0 : i32
    %c0_i32_2 = arith.constant 0 : i32
    return %arg0, %c0_i32, %c0_i32_0, %c0_i32_1 : i32, i32, i32, i32
  }
  func.func @transform_2(%arg0: i32, %arg1: i32) -> (i32, i32) {
    %c0_i32 = arith.constant 0 : i32
    %c0_i32_0 = arith.constant 0 : i32
    %c0_i32_1 = arith.constant 0 : i32
    return %c0_i32, %c0_i32_0 : i32, i32
  }
  func.func @transform_3(%arg0: i32, %arg1: i32) -> (i32, i32, i32) {
    %c0_i32 = arith.constant 0 : i32
    %c0_i32_0 = arith.constant 0 : i32
    %c0_i32_1 = arith.constant 0 : i32
    return %arg0, %c0_i32, %c0_i32_0 : i32, i32, i32
  }
  func.func @transform_4(%arg0: i32, %arg1: i32) -> (i32, i32, i32, i32) {
    %c0_i32 = arith.constant 0 : i32
    %c0_i32_0 = arith.constant 0 : i32
    %c0_i32_1 = arith.constant 0 : i32
    %c0_i32_2 = arith.constant 0 : i32
    return %arg0, %c0_i32, %c0_i32_0, %c0_i32_1 : i32, i32, i32, i32
  }
  func.func @transform_5(%arg0: i32, %arg1: i32) -> (i32, i32, i32, i32) {
    %c0_i32 = arith.constant 0 : i32
    %c0_i32_0 = arith.constant 0 : i32
    %c0_i32_1 = arith.constant 0 : i32
    return %arg0, %c0_i32, %c0_i32_0, %arg1 : i32, i32, i32, i32
  }
  func.func @transform_6(%arg0: i32, %arg1: i32) -> (i32, i32, i32, i32) {
    %c0_i32 = arith.constant 0 : i32
    %c0_i32_0 = arith.constant 0 : i32
    %c0_i32_1 = arith.constant 0 : i32
    return %arg0, %c0_i32, %c0_i32_0, %arg1 : i32, i32, i32, i32
  }
  func.func @transform_7(%arg0: i32, %arg1: i32) -> (i32, i32, i32, i32) {
    %c0_i32 = arith.constant 0 : i32
    %c0_i32_0 = arith.constant 0 : i32
    %c0_i32_1 = arith.constant 0 : i32
    return %arg0, %c0_i32, %c0_i32_0, %arg1 : i32, i32, i32, i32
  }
  func.func @transform_8(%arg0: i32, %arg1: i32) -> (i32, i32, i32, i32) {
    %c0_i32 = arith.constant 0 : i32
    %c0_i32_0 = arith.constant 0 : i32
    %c0_i32_1 = arith.constant 0 : i32
    return %arg0, %c0_i32, %c0_i32_0, %arg1 : i32, i32, i32, i32
  }
}

module attributes {stable_mosaic.version = 11 : i64} {
  func.func @_propagate_kernel(%arg0: i32, %arg1: i32, %arg2: memref<1x2x16x16xf32, #tpu.memory_space<vmem>>, %arg3: memref<1x2x16x16xf32, #tpu.memory_space<vmem>>, %arg4: memref<16x16xf32, #tpu.memory_space<vmem>>, %arg5: memref<1x16x16xf32, #tpu.memory_space<vmem>>, %arg6: memref<1x2x16x16xf32, #tpu.memory_space<vmem>>, %arg7: memref<1x2x16x16xf32, #tpu.memory_space<vmem>>, %arg8: memref<1x2x16x16xf32, #tpu.memory_space<vmem>>, %arg9: memref<1x2x16x16xf32, #tpu.memory_space<vmem>>, %arg10: memref<1x2x16x16xf32, #tpu.memory_space<vmem>>) attributes {dimension_semantics = [#tpu.dimension_semantics<parallel>, #tpu.dimension_semantics<parallel>], iteration_bounds = array<i64: 3, 1>, scalar_prefetch = 0 : i64, scratch_operands = 0 : i64, tpu.core_type = #tpu.core_type<tc>, window_params = [{transform_indices = @transform_0, window_bounds = array<i64: 1, 2, 16, 16>}, {transform_indices = @transform_1, window_bounds = array<i64: 1, 2, 16, 16>}, {pipeline_mode = #tpu.pipeline_mode<synchronous>, transform_indices = @transform_2, window_bounds = array<i64: 16, 16>}, {transform_indices = @transform_3, window_bounds = array<i64: 1, 16, 16>}, {transform_indices = @transform_4, window_bounds = array<i64: 1, 2, 16, 16>}, {transform_indices = @transform_5, window_bounds = array<i64: 1, 2, 16, 16>}, {transform_indices = @transform_6, window_bounds = array<i64: 1, 2, 16, 16>}, {transform_indices = @transform_7, window_bounds = array<i64: 1, 2, 16, 16>}, {transform_indices = @transform_8, window_bounds = array<i64: 1, 2, 16, 16>}]} {
    %c0 = arith.constant 0 : index
    %c0_0 = arith.constant 0 : index
    %c0_1 = arith.constant 0 : index
    %c0_2 = arith.constant 0 : index
    %0 = vector.load %arg2[%c0, %c0_0, %c0_1, %c0_2] : memref<1x2x16x16xf32, #tpu.memory_space<vmem>>, vector<1x2x16x16xf32>
    %1 = vector.shape_cast %0 : vector<1x2x16x16xf32> to vector<2x16x16xf32>
    %c0_3 = arith.constant 0 : index
    %c0_4 = arith.constant 0 : index
    %2 = vector.load %arg4[%c0_3, %c0_4] : memref<16x16xf32, #tpu.memory_space<vmem>>, vector<16x16xf32>
    %3 = vector.shape_cast %2 : vector<16x16xf32> to vector<1x16x16xf32>
    %4 = vector.broadcast %3 : vector<1x16x16xf32> to vector<2x16x16xf32>
    %5 = arith.mulf %1, %4 : vector<2x16x16xf32>
    %c0_5 = arith.constant 0 : index
    %c0_6 = arith.constant 0 : index
    %c0_7 = arith.constant 0 : index
    %c0_8 = arith.constant 0 : index
    %6 = vector.load %arg3[%c0_5, %c0_6, %c0_7, %c0_8] : memref<1x2x16x16xf32, #tpu.memory_space<vmem>>, vector<1x2x16x16xf32>
    %7 = vector.shape_cast %6 : vector<1x2x16x16xf32> to vector<2x16x16xf32>
    %c0_9 = arith.constant 0 : index
    %c0_10 = arith.constant 0 : index
    %c0_11 = arith.constant 0 : index
    %8 = vector.load %arg5[%c0_9, %c0_10, %c0_11] : memref<1x16x16xf32, #tpu.memory_space<vmem>>, vector<1x16x16xf32>
    %9 = vector.shape_cast %8 : vector<1x16x16xf32> to vector<16x16xf32>
    %10 = vector.shape_cast %9 : vector<16x16xf32> to vector<1x16x16xf32>
    %11 = vector.broadcast %10 : vector<1x16x16xf32> to vector<2x16x16xf32>
    %12 = arith.addf %7, %11 : vector<2x16x16xf32>
    %13 = math.cos %12 : vector<2x16x16xf32>
    %14 = arith.mulf %5, %13 : vector<2x16x16xf32>
    %15 = math.sin %12 : vector<2x16x16xf32>
    %16 = arith.mulf %5, %15 : vector<2x16x16xf32>
    %c0_12 = arith.constant 0 : index
    %c0_13 = arith.constant 0 : index
    %c0_14 = arith.constant 0 : index
    %c0_15 = arith.constant 0 : index
    %17 = vector.load %arg7[%c0_12, %c0_13, %c0_14, %c0_15] : memref<1x2x16x16xf32, #tpu.memory_space<vmem>>, vector<1x1x16x16xf32>
    %18 = vector.shape_cast %17 : vector<1x1x16x16xf32> to vector<16x16xf32>
    %c0_16 = arith.constant 0 : index
    %c1 = arith.constant 1 : index
    %c0_17 = arith.constant 0 : index
    %c0_18 = arith.constant 0 : index
    %19 = vector.load %arg7[%c0_16, %c1, %c0_17, %c0_18] : memref<1x2x16x16xf32, #tpu.memory_space<vmem>>, vector<1x1x16x16xf32>
    %20 = vector.shape_cast %19 : vector<1x1x16x16xf32> to vector<16x16xf32>
    %21 = arith.addf %18, %20 : vector<16x16xf32>
    %c0_19 = arith.constant 0 : index
    %c0_20 = arith.constant 0 : index
    %c0_21 = arith.constant 0 : index
    %c0_22 = arith.constant 0 : index
    %22 = vector.load %arg6[%c0_19, %c0_20, %c0_21, %c0_22] : memref<1x2x16x16xf32, #tpu.memory_space<vmem>>, vector<1x1x16x16xf32>
    %23 = vector.shape_cast %22 : vector<1x1x16x16xf32> to vector<16x16xf32>
    %c0_23 = arith.constant 0 : index
    %c1_24 = arith.constant 1 : index
    %c0_25 = arith.constant 0 : index
    %c0_26 = arith.constant 0 : index
    %24 = vector.load %arg6[%c0_23, %c1_24, %c0_25, %c0_26] : memref<1x2x16x16xf32, #tpu.memory_space<vmem>>, vector<1x1x16x16xf32>
    %25 = vector.shape_cast %24 : vector<1x1x16x16xf32> to vector<16x16xf32>
    %26 = arith.addf %23, %25 : vector<16x16xf32>
    %c0_27 = arith.constant 0 : index
    %c0_28 = arith.constant 0 : index
    %c0_29 = arith.constant 0 : index
    %c0_30 = arith.constant 0 : index
    %27 = vector.load %arg8[%c0_27, %c0_28, %c0_29, %c0_30] : memref<1x2x16x16xf32, #tpu.memory_space<vmem>>, vector<1x1x16x16xf32>
    %28 = vector.shape_cast %27 : vector<1x1x16x16xf32> to vector<16x16xf32>
    %c0_31 = arith.constant 0 : index
    %c1_32 = arith.constant 1 : index
    %c0_33 = arith.constant 0 : index
    %c0_34 = arith.constant 0 : index
    %29 = vector.load %arg8[%c0_31, %c1_32, %c0_33, %c0_34] : memref<1x2x16x16xf32, #tpu.memory_space<vmem>>, vector<1x1x16x16xf32>
    %30 = vector.shape_cast %29 : vector<1x1x16x16xf32> to vector<16x16xf32>
    %31 = vector.shape_cast %14 : vector<2x16x16xf32> to vector<32x16xf32>
    %32 = vector.shape_cast %16 : vector<2x16x16xf32> to vector<32x16xf32>
    %33 = arith.addf %31, %32 : vector<32x16xf32>
    %cst = arith.constant dense<0.000000e+00> : vector<32x16xf32>
    %34 = tpu.matmul %31, %18, %cst {dimension_numbers = #tpu.dot_dimension_numbers<[1], [0], [0], [1], [0, 0, 1, 1], [], []>} : vector<32x16xf32>, vector<16x16xf32>, vector<32x16xf32> -> vector<32x16xf32>
    %cst_35 = arith.constant dense<0.000000e+00> : vector<32x16xf32>
    %35 = tpu.matmul %32, %20, %cst_35 {dimension_numbers = #tpu.dot_dimension_numbers<[1], [0], [0], [1], [0, 0, 1, 1], [], []>} : vector<32x16xf32>, vector<16x16xf32>, vector<32x16xf32> -> vector<32x16xf32>
    %cst_36 = arith.constant dense<0.000000e+00> : vector<32x16xf32>
    %36 = tpu.matmul %33, %21, %cst_36 {dimension_numbers = #tpu.dot_dimension_numbers<[1], [0], [0], [1], [0, 0, 1, 1], [], []>} : vector<32x16xf32>, vector<16x16xf32>, vector<32x16xf32> -> vector<32x16xf32>
    %37 = arith.subf %34, %35 : vector<32x16xf32>
    %38 = arith.subf %36, %34 : vector<32x16xf32>
    %39 = arith.subf %38, %35 : vector<32x16xf32>
    %40 = vector.extract_strided_slice %37 {offsets = [0, 0], sizes = [16, 16], strides = [1, 1]} : vector<32x16xf32> to vector<16x16xf32>
    %41 = vector.extract_strided_slice %39 {offsets = [0, 0], sizes = [16, 16], strides = [1, 1]} : vector<32x16xf32> to vector<16x16xf32>
    %42 = vector.extract_strided_slice %37 {offsets = [16, 0], sizes = [16, 16], strides = [1, 1]} : vector<32x16xf32> to vector<16x16xf32>
    %43 = vector.extract_strided_slice %39 {offsets = [16, 0], sizes = [16, 16], strides = [1, 1]} : vector<32x16xf32> to vector<16x16xf32>
    %44 = arith.addf %40, %41 : vector<16x16xf32>
    %cst_37 = arith.constant dense<0.000000e+00> : vector<16x16xf32>
    %45 = tpu.matmul %23, %40, %cst_37 {dimension_numbers = #tpu.dot_dimension_numbers<[1], [0], [0], [1], [0, 0, 1, 1], [], []>} : vector<16x16xf32>, vector<16x16xf32>, vector<16x16xf32> -> vector<16x16xf32>
    %cst_38 = arith.constant dense<0.000000e+00> : vector<16x16xf32>
    %46 = tpu.matmul %25, %41, %cst_38 {dimension_numbers = #tpu.dot_dimension_numbers<[1], [0], [0], [1], [0, 0, 1, 1], [], []>} : vector<16x16xf32>, vector<16x16xf32>, vector<16x16xf32> -> vector<16x16xf32>
    %cst_39 = arith.constant dense<0.000000e+00> : vector<16x16xf32>
    %47 = tpu.matmul %26, %44, %cst_39 {dimension_numbers = #tpu.dot_dimension_numbers<[1], [0], [0], [1], [0, 0, 1, 1], [], []>} : vector<16x16xf32>, vector<16x16xf32>, vector<16x16xf32> -> vector<16x16xf32>
    %48 = arith.subf %45, %46 : vector<16x16xf32>
    %49 = arith.subf %47, %45 : vector<16x16xf32>
    %50 = arith.subf %49, %46 : vector<16x16xf32>
    %51 = arith.mulf %48, %28 : vector<16x16xf32>
    %52 = arith.mulf %50, %30 : vector<16x16xf32>
    %53 = arith.subf %51, %52 : vector<16x16xf32>
    %c0_40 = arith.constant 0 : index
    %c0_41 = arith.constant 0 : index
    %c0_42 = arith.constant 0 : index
    %c0_43 = arith.constant 0 : index
    %54 = vector.load %arg9[%c0_40, %c0_41, %c0_42, %c0_43] : memref<1x2x16x16xf32, #tpu.memory_space<vmem>>, vector<1x1x16x16xf32>
    %55 = vector.shape_cast %54 : vector<1x1x16x16xf32> to vector<16x16xf32>
    %56 = vector.shape_cast %53 : vector<16x16xf32> to vector<1x1x16x16xf32>
    tpu.vector_store %arg9[%c0_40, %c0_41, %c0_42, %c0_43], %56 {strides = array<i32>} : memref<1x2x16x16xf32, #tpu.memory_space<vmem>>, vector<1x1x16x16xf32>,
    %57 = arith.mulf %48, %30 : vector<16x16xf32>
    %58 = arith.mulf %50, %28 : vector<16x16xf32>
    %59 = arith.addf %57, %58 : vector<16x16xf32>
    %c0_44 = arith.constant 0 : index
    %c0_45 = arith.constant 0 : index
    %c0_46 = arith.constant 0 : index
    %c0_47 = arith.constant 0 : index
    %60 = vector.load %arg10[%c0_44, %c0_45, %c0_46, %c0_47] : memref<1x2x16x16xf32, #tpu.memory_space<vmem>>, vector<1x1x16x16xf32>
    %61 = vector.shape_cast %60 : vector<1x1x16x16xf32> to vector<16x16xf32>
    %62 = vector.shape_cast %59 : vector<16x16xf32> to vector<1x1x16x16xf32>
    tpu.vector_store %arg10[%c0_44, %c0_45, %c0_46, %c0_47], %62 {strides = array<i32>} : memref<1x2x16x16xf32, #tpu.memory_space<vmem>>, vector<1x1x16x16xf32>,
    %63 = arith.addf %42, %43 : vector<16x16xf32>
    %cst_48 = arith.constant dense<0.000000e+00> : vector<16x16xf32>
    %64 = tpu.matmul %23, %42, %cst_48 {dimension_numbers = #tpu.dot_dimension_numbers<[1], [0], [0], [1], [0, 0, 1, 1], [], []>} : vector<16x16xf32>, vector<16x16xf32>, vector<16x16xf32> -> vector<16x16xf32>
    %cst_49 = arith.constant dense<0.000000e+00> : vector<16x16xf32>
    %65 = tpu.matmul %25, %43, %cst_49 {dimension_numbers = #tpu.dot_dimension_numbers<[1], [0], [0], [1], [0, 0, 1, 1], [], []>} : vector<16x16xf32>, vector<16x16xf32>, vector<16x16xf32> -> vector<16x16xf32>
    %cst_50 = arith.constant dense<0.000000e+00> : vector<16x16xf32>
    %66 = tpu.matmul %26, %63, %cst_50 {dimension_numbers = #tpu.dot_dimension_numbers<[1], [0], [0], [1], [0, 0, 1, 1], [], []>} : vector<16x16xf32>, vector<16x16xf32>, vector<16x16xf32> -> vector<16x16xf32>
    %67 = arith.subf %64, %65 : vector<16x16xf32>
    %68 = arith.subf %66, %64 : vector<16x16xf32>
    %69 = arith.subf %68, %65 : vector<16x16xf32>
    %70 = arith.mulf %67, %28 : vector<16x16xf32>
    %71 = arith.mulf %69, %30 : vector<16x16xf32>
    %72 = arith.subf %70, %71 : vector<16x16xf32>
    %c0_51 = arith.constant 0 : index
    %c1_52 = arith.constant 1 : index
    %c0_53 = arith.constant 0 : index
    %c0_54 = arith.constant 0 : index
    %73 = vector.load %arg9[%c0_51, %c1_52, %c0_53, %c0_54] : memref<1x2x16x16xf32, #tpu.memory_space<vmem>>, vector<1x1x16x16xf32>
    %74 = vector.shape_cast %73 : vector<1x1x16x16xf32> to vector<16x16xf32>
    %75 = vector.shape_cast %72 : vector<16x16xf32> to vector<1x1x16x16xf32>
    tpu.vector_store %arg9[%c0_51, %c1_52, %c0_53, %c0_54], %75 {strides = array<i32>} : memref<1x2x16x16xf32, #tpu.memory_space<vmem>>, vector<1x1x16x16xf32>,
    %76 = arith.mulf %67, %30 : vector<16x16xf32>
    %77 = arith.mulf %69, %28 : vector<16x16xf32>
    %78 = arith.addf %76, %77 : vector<16x16xf32>
    %c0_55 = arith.constant 0 : index
    %c1_56 = arith.constant 1 : index
    %c0_57 = arith.constant 0 : index
    %c0_58 = arith.constant 0 : index
    %79 = vector.load %arg10[%c0_55, %c1_56, %c0_57, %c0_58] : memref<1x2x16x16xf32, #tpu.memory_space<vmem>>, vector<1x1x16x16xf32>
    %80 = vector.shape_cast %79 : vector<1x1x16x16xf32> to vector<16x16xf32>
    %81 = vector.shape_cast %78 : vector<16x16xf32> to vector<1x1x16x16xf32>
    tpu.vector_store %arg10[%c0_55, %c1_56, %c0_57, %c0_58], %81 {strides = array<i32>} : memref<1x2x16x16xf32, #tpu.memory_space<vmem>>, vector<1x1x16x16xf32>,
    return
  }
  func.func @transform_0(%arg0: i32, %arg1: i32) -> (i32, i32, i32, i32) {
    %c0_i32 = arith.constant 0 : i32
    %c0_i32_0 = arith.constant 0 : i32
    %c0_i32_1 = arith.constant 0 : i32
    %c0_i32_2 = arith.constant 0 : i32
    return %arg0, %c0_i32, %c0_i32_0, %c0_i32_1 : i32, i32, i32, i32
  }
  func.func @transform_1(%arg0: i32, %arg1: i32) -> (i32, i32, i32, i32) {
    %c0_i32 = arith.constant 0 : i32
    %c0_i32_0 = arith.constant 0 : i32
    %c0_i32_1 = arith.constant 0 : i32
    %c0_i32_2 = arith.constant 0 : i32
    return %arg0, %c0_i32, %c0_i32_0, %c0_i32_1 : i32, i32, i32, i32
  }
  func.func @transform_2(%arg0: i32, %arg1: i32) -> (i32, i32) {
    %c0_i32 = arith.constant 0 : i32
    %c0_i32_0 = arith.constant 0 : i32
    %c0_i32_1 = arith.constant 0 : i32
    return %c0_i32, %c0_i32_0 : i32, i32
  }
  func.func @transform_3(%arg0: i32, %arg1: i32) -> (i32, i32, i32) {
    %c0_i32 = arith.constant 0 : i32
    %c0_i32_0 = arith.constant 0 : i32
    %c0_i32_1 = arith.constant 0 : i32
    return %arg0, %c0_i32, %c0_i32_0 : i32, i32, i32
  }
  func.func @transform_4(%arg0: i32, %arg1: i32) -> (i32, i32, i32, i32) {
    %c0_i32 = arith.constant 0 : i32
    %c0_i32_0 = arith.constant 0 : i32
    %c0_i32_1 = arith.constant 0 : i32
    %c0_i32_2 = arith.constant 0 : i32
    return %arg0, %c0_i32, %c0_i32_0, %c0_i32_1 : i32, i32, i32, i32
  }
  func.func @transform_5(%arg0: i32, %arg1: i32) -> (i32, i32, i32, i32) {
    %c0_i32 = arith.constant 0 : i32
    %c0_i32_0 = arith.constant 0 : i32
    %c0_i32_1 = arith.constant 0 : i32
    return %arg0, %c0_i32, %c0_i32_0, %arg1 : i32, i32, i32, i32
  }
  func.func @transform_6(%arg0: i32, %arg1: i32) -> (i32, i32, i32, i32) {
    %c0_i32 = arith.constant 0 : i32
    %c0_i32_0 = arith.constant 0 : i32
    %c0_i32_1 = arith.constant 0 : i32
    return %arg0, %c0_i32, %c0_i32_0, %arg1 : i32, i32, i32, i32
  }
  func.func @transform_7(%arg0: i32, %arg1: i32) -> (i32, i32, i32, i32) {
    %c0_i32 = arith.constant 0 : i32
    %c0_i32_0 = arith.constant 0 : i32
    %c0_i32_1 = arith.constant 0 : i32
    return %arg0, %c0_i32, %c0_i32_0, %arg1 : i32, i32, i32, i32
  }
  func.func @transform_8(%arg0: i32, %arg1: i32) -> (i32, i32, i32, i32) {
    %c0_i32 = arith.constant 0 : i32
    %c0_i32_0 = arith.constant 0 : i32
    %c0_i32_1 = arith.constant 0 : i32
    return %arg0, %c0_i32, %c0_i32_0, %arg1 : i32, i32, i32, i32
  }
}

</mosaic_0001>

<llo_original>
// kernel: tpu_custom_call.1
$region0: #{tpu_custom_call.1}
  #allocation0 [shape = 'u32[]', space=smem, size = 0x4, offset = 0x4, fixed_abs, tag = 'smem constant byte address 0x4 - core index']
  #allocation1 [shape = 'u32[144,128]{1,0:T(1,128)}', space=vmem, size = 0x12000, scoped, tag = 'internal scratch']
  %s0 = inlined_call_operand.hbm [shape: f32[3,2,16,16], index: 0, kind: input, shape index: {}]
  %s1 = inlined_call_operand.hbm [shape: f32[3,2,16,16], index: 1, kind: input, shape index: {}]
  %s2 = inlined_call_operand.hbm [shape: f32[16,16], index: 2, kind: input, shape index: {}]
  %s3 = inlined_call_operand.hbm [shape: f32[3,16,16], index: 3, kind: input, shape index: {}]
  %s4 = inlined_call_operand.hbm [shape: f32[3,2,16,16], index: 4, kind: input, shape index: {}]
  %s5 = inlined_call_operand.hbm [shape: f32[3,2,16,16], index: 5, kind: input, shape index: {}]
  %s6 = inlined_call_operand.hbm [shape: f32[3,2,16,16], index: 6, kind: input, shape index: {}]
  %s7 = inlined_call_operand.hbm [shape: f32[3,2,16,16], index: 7, kind: output, shape index: {0}]
  %s8 = inlined_call_operand.hbm [shape: f32[3,2,16,16], index: 8, kind: output, shape index: {1}]
  %9 = xla_tuple %s7, %s8
  %s10 = sld [smem:[#allocation0]]
  $region97: #{tpu_custom_call.1} parent=0
    _
  %s12 = ssub.s32 1, %s10
  %s13 = scalar_select 0, %s12, %s10
  $region1: #{tpu_custom_call.1} parent=0
    #allocation2 [shape = 'u8[32768]{0}', space=vmem, size = 0x8000, scoped, tag = 'input window, operand 0']
    #allocation3 [shape = 's32[2]{0}', space=sflag, size = 0x8, scoped, tag = 'scoped memory for tpu_custom_call.1']
    #allocation4 [shape = 's32[2]{0}', space=sflag, size = 0x8, scoped, tag = 'scoped memory for tpu_custom_call.1']
    #allocation5 [shape = 'u8[32768]{0}', space=vmem, size = 0x8000, scoped, tag = 'input window, operand 1']
    #allocation6 [shape = 's32[2]{0}', space=sflag, size = 0x8, scoped, tag = 'scoped memory for tpu_custom_call.1']
    #allocation7 [shape = 'u8[8192]{0}', space=vmem, size = 0x2000, scoped, tag = 'input window, operand 2, single buffered']
    #allocation8 [shape = 'u8[16384]{0}', space=vmem, size = 0x4000, scoped, tag = 'input window, operand 3']
    #allocation9 [shape = 's32[2]{0}', space=sflag, size = 0x8, scoped, tag = 'scoped memory for tpu_custom_call.1']
    #allocation10 [shape = 'u8[32768]{0}', space=vmem, size = 0x8000, scoped, tag = 'input window, operand 4']
    #allocation11 [shape = 'u8[32768]{0}', space=vmem, size = 0x8000, scoped, tag = 'input window, operand 5']
    #allocation12 [shape = 's32[2]{0}', space=sflag, size = 0x8, scoped, tag = 'scoped memory for tpu_custom_call.1']
    #allocation13 [shape = 'u8[32768]{0}', space=vmem, size = 0x8000, scoped, tag = 'input window, operand 6']
    #allocation14 [shape = 'u8[32768]{0}', space=vmem, size = 0x8000, scoped, tag = 'output window, operand 0']
    #allocation15 [shape = 'u8[32768]{0}', space=vmem, size = 0x8000, scoped, tag = 'output window, operand 1']
    #allocation16 [shape = 's32[2]{0}', space=sflag, size = 0x8, scoped, tag = 'scoped memory for tpu_custom_call.1']
    %14 = vsyncpa [#allocation3], 0
    %s15 = scalar_lea.sflag [#allocation3], 1
    %16 = vsyncpa %s15, 0
    %17 = vsyncpa [#allocation6], 0
    %s18 = scalar_lea.sflag [#allocation6], 1
    %19 = vsyncpa %s18, 0
    %20 = vsyncpa [#allocation9], 0
    %s21 = scalar_lea.sflag [#allocation9], 1
    %22 = vsyncpa %s21, 0
    %23 = vsyncpa [#allocation12], 0
    %s24 = scalar_lea.sflag [#allocation12], 1
    %25 = vsyncpa %s24, 0
    %26 = vsyncpa [#allocation4], 0
    %s27 = scalar_lea.sflag [#allocation4], 1
    %28 = vsyncpa %s27, 0
    %29 = vsyncpa [#allocation16], 0
    %s30 = scalar_lea.sflag [#allocation16], 1
    %31 = vsyncpa %s30, 0
    loop: start=0, step=1, limit=5
    $region2: #{tpu_custom_call.1} parent=1 // loop_pre_header
      _
    $region3: #{tpu_custom_call.1} parent=1 // loop_header
      %s33 = sphi 0, %s37
      %p34 = scmp.ge.s32.totalorder %s33, 5
      %s40 = sphi 0, %s52
      %s41 = sphi 0, %s48
      %s42 = sphi 0, %s40
      %s43 = sphi 0, %s41
      %s44 = sphi 0, %s42
      %s45 = sphi 0, %s43
      %s55 = sphi 0, %s57
      %s58 = sphi 0, %s55
      %s59 = sphi 0, %s58
      %s75 = sphi 0, %s59
      %s81 = sphi 0, %s83
      %s84 = sphi 0, %s81
      %s85 = sphi 0, %s84
      %s101 = sphi 0, %s85
      %s105 = sphi 0, %s105
      %s107 = sphi 0, %s105
      %s108 = sphi 0, %s107
      %s122 = sphi 0, %s108
      %s128 = sphi 0, %s130
      %s131 = sphi 0, %s128
      %s132 = sphi 0, %s131
      %s148 = sphi 0, %s132
      %s154 = sphi 0, %s156
      %s157 = sphi 0, %s154
      %s158 = sphi 0, %s157
      %s174 = sphi 0, %s158
      %s182 = sphi 0, %s184
      %s185 = sphi 0, %s182
      %s186 = sphi 0, %s185
      %s202 = sphi 0, %s186
      %s210 = sphi 0, %s212
      %s213 = sphi 0, %s210
      %s214 = sphi 0, %s213
      %s230 = sphi 0, %s214
      %s238 = sphi 0, %s240
      %s241 = sphi 0, %s238
      %s242 = sphi 0, %s241
      %s258 = sphi 0, %s242
      %s266 = sphi 0, %s268
      %s269 = sphi 0, %s266
      %s270 = sphi 0, %s269
      %s286 = sphi 0, %s270
    $region4: #{tpu_custom_call.1} parent=1 // loop_header_branch
      %36 = sbr.rel (%p34) target = $region8
    $region5: #{tpu_custom_call.1} parent=1 // loop_body
      %s38 = ssub.s32 %s33, 1
      %s39 = ssub.s32 %s33, 2
      %s46 = sadd.s32 1, %s41
      %p47 = scmp.ge.s32.totalorder %s46, 1
      %s48 = scalar_select %p47, 0, %s46
      %s49 = sadd.s32 1, %s40
      %s50 = scalar_select %p47, %s49, %s40
      %p51 = scmp.ge.s32.totalorder %s50, 3
      %s52 = scalar_select %p51, 0, %s50
      %s53 = ssub.s32 %s40, %s52
      %p54 = scmp.eq.s32.totalorder %s53, 0
      %s56 = sadd.s32 %s55, 1
      %s57 = scalar_select %p54, %s55, %s56
      %p60 = pneg %p54
      %p61 = scmp.eq.s32.totalorder %s33, 2
      %p62 = por %p60, %p61
      %p63 = scmp.ne.s32.totalorder %s55, %s58
      %p64 = scmp.eq.s32.totalorder %s33, 0
      %p65 = por %p63, %p64
      %p66 = scmp.ne.s32.totalorder %s55, %s58
      %p67 = scmp.eq.s32.totalorder %s38, 2
      %p68 = por %p66, %p67
      %p69 = scmp.ne.s32.totalorder %s58, %s59
      %p70 = scmp.eq.s32.totalorder %s38, 0
      %p71 = por %p69, %p70
      %p72 = scmp.ne.s32.totalorder %s58, %s59
      %p73 = scmp.eq.s32.totalorder %s39, 2
      %p74 = por %p72, %p73
      %p76 = scmp.ne.s32.totalorder %s59, %s75
      %p77 = scmp.eq.s32.totalorder %s39, 0
      %p78 = por %p76, %p77
      %s79 = ssub.s32 %s40, %s52
      %p80 = scmp.eq.s32.totalorder %s79, 0
      %s82 = sadd.s32 %s81, 1
      %s83 = scalar_select %p80, %s81, %s82
      %p86 = pneg %p80
      %p87 = scmp.eq.s32.totalorder %s33, 2
      %p88 = por %p86, %p87
      %p89 = scmp.ne.s32.totalorder %s81, %s84
      %p90 = scmp.eq.s32.totalorder %s33, 0
      %p91 = por %p89, %p90
      %p92 = scmp.ne.s32.totalorder %s81, %s84
      %p93 = scmp.eq.s32.totalorder %s38, 2
      %p94 = por %p92, %p93
      %p95 = scmp.ne.s32.totalorder %s84, %s85
      %p96 = scmp.eq.s32.totalorder %s38, 0
      %p97 = por %p95, %p96
      %p98 = scmp.ne.s32.totalorder %s84, %s85
      %p99 = scmp.eq.s32.totalorder %s39, 2
      %p100 = por %p98, %p99
      %p102 = scmp.ne.s32.totalorder %s85, %s101
      %p103 = scmp.eq.s32.totalorder %s39, 0
      %p104 = por %p102, %p103
      %s106 = sadd.s32 %s105, 1
      %p109 = scmp.eq.s32.totalorder %s33, 2
      %p110 = scmp.ne.s32.totalorder %s105, %s107
      %p111 = scmp.eq.s32.totalorder %s33, 0
      %p112 = por %p110, %p111
      %p113 = scmp.ne.s32.totalorder %s105, %s107
      %p114 = scmp.eq.s32.totalorder %s38, 2
      %p115 = por %p113, %p114
      %p116 = scmp.ne.s32.totalorder %s107, %s108
      %p117 = scmp.eq.s32.totalorder %s38, 0
      %p118 = por %p116, %p117
      %p119 = scmp.ne.s32.totalorder %s107, %s108
      %p120 = scmp.eq.s32.totalorder %s39, 2
      %p121 = por %p119, %p120
      %p123 = scmp.ne.s32.totalorder %s108, %s122
      %p124 = scmp.eq.s32.totalorder %s39, 0
      %p125 = por %p123, %p124
      %s126 = ssub.s32 %s40, %s52
      %p127 = scmp.eq.s32.totalorder %s126, 0
      %s129 = sadd.s32 %s128, 1
      %s130 = scalar_select %p127, %s128, %s129
      %p133 = pneg %p127
      %p134 = scmp.eq.s32.totalorder %s33, 2
      %p135 = por %p133, %p134
      %p136 = scmp.ne.s32.totalorder %s128, %s131
      %p137 = scmp.eq.s32.totalorder %s33, 0
      %p138 = por %p136, %p137
      %p139 = scmp.ne.s32.totalorder %s128, %s131
      %p140 = scmp.eq.s32.totalorder %s38, 2
      %p141 = por %p139, %p140
      %p142 = scmp.ne.s32.totalorder %s131, %s132
      %p143 = scmp.eq.s32.totalorder %s38, 0
      %p144 = por %p142, %p143
      %p145 = scmp.ne.s32.totalorder %s131, %s132
      %p146 = scmp.eq.s32.totalorder %s39, 2
      %p147 = por %p145, %p146
      %p149 = scmp.ne.s32.totalorder %s132, %s148
      %p150 = scmp.eq.s32.totalorder %s39, 0
      %p151 = por %p149, %p150
      %s152 = ssub.s32 %s40, %s52
      %p153 = scmp.eq.s32.totalorder %s152, 0
      %s155 = sadd.s32 %s154, 1
      %s156 = scalar_select %p153, %s154, %s155
      %p159 = pneg %p153
      %p160 = scmp.eq.s32.totalorder %s33, 2
      %p161 = por %p159, %p160
      %p162 = scmp.ne.s32.totalorder %s154, %s157
      %p163 = scmp.eq.s32.totalorder %s33, 0
      %p164 = por %p162, %p163
      %p165 = scmp.ne.s32.totalorder %s154, %s157
      %p166 = scmp.eq.s32.totalorder %s38, 2
      %p167 = por %p165, %p166
      %p168 = scmp.ne.s32.totalorder %s157, %s158
      %p169 = scmp.eq.s32.totalorder %s38, 0
      %p170 = por %p168, %p169
      %p171 = scmp.ne.s32.totalorder %s157, %s158
      %p172 = scmp.eq.s32.totalorder %s39, 2
      %p173 = por %p171, %p172
      %p175 = scmp.ne.s32.totalorder %s158, %s174
      %p176 = scmp.eq.s32.totalorder %s39, 0
      %p177 = por %p175, %p176
      %s178 = ssub.s32 %s40, %s52
      %s179 = ssub.s32 %s41, %s48
      %s180 = sor.u32 %s178, %s179
      %p181 = scmp.eq.s32.totalorder %s180, 0
      %s183 = sadd.s32 %s182, 1
      %s184 = scalar_select %p181, %s182, %s183
      %p187 = pneg %p181
      %p188 = scmp.eq.s32.totalorder %s33, 2
      %p189 = por %p187, %p188
      %p190 = scmp.ne.s32.totalorder %s182, %s185
      %p191 = scmp.eq.s32.totalorder %s33, 0
      %p192 = por %p190, %p191
      %p193 = scmp.ne.s32.totalorder %s182, %s185
      %p194 = scmp.eq.s32.totalorder %s38, 2
      %p195 = por %p193, %p194
      %p196 = scmp.ne.s32.totalorder %s185, %s186
      %p197 = scmp.eq.s32.totalorder %s38, 0
      %p198 = por %p196, %p197
      %p199 = scmp.ne.s32.totalorder %s185, %s186
      %p200 = scmp.eq.s32.totalorder %s39, 2
      %p201 = por %p199, %p200
      %p203 = scmp.ne.s32.totalorder %s186, %s202
      %p204 = scmp.eq.s32.totalorder %s39, 0
      %p205 = por %p203, %p204
      %s206 = ssub.s32 %s40, %s52
      %s207 = ssub.s32 %s41, %s48
      %s208 = sor.u32 %s206, %s207
      %p209 = scmp.eq.s32.totalorder %s208, 0
      %s211 = sadd.s32 %s210, 1
      %s212 = scalar_select %p209, %s210, %s211
      %p215 = pneg %p209
      %p216 = scmp.eq.s32.totalorder %s33, 2
      %p217 = por %p215, %p216
      %p218 = scmp.ne.s32.totalorder %s210, %s213
      %p219 = scmp.eq.s32.totalorder %s33, 0
      %p220 = por %p218, %p219
      %p221 = scmp.ne.s32.totalorder %s210, %s213
      %p222 = scmp.eq.s32.totalorder %s38, 2
      %p223 = por %p221, %p222
      %p224 = scmp.ne.s32.totalorder %s213, %s214
      %p225 = scmp.eq.s32.totalorder %s38, 0
      %p226 = por %p224, %p225
      %p227 = scmp.ne.s32.totalorder %s213, %s214
      %p228 = scmp.eq.s32.totalorder %s39, 2
      %p229 = por %p227, %p228
      %p231 = scmp.ne.s32.totalorder %s214, %s230
      %p232 = scmp.eq.s32.totalorder %s39, 0
      %p233 = por %p231, %p232
      %s234 = ssub.s32 %s40, %s52
      %s235 = ssub.s32 %s41, %s48
      %s236 = sor.u32 %s234, %s235
      %p237 = scmp.eq.s32.totalorder %s236, 0
      %s239 = sadd.s32 %s238, 1
      %s240 = scalar_select %p237, %s238, %s239
      %p243 = pneg %p237
      %p244 = scmp.eq.s32.totalorder %s33, 2
      %p245 = por %p243, %p244
      %p246 = scmp.ne.s32.totalorder %s238, %s241
      %p247 = scmp.eq.s32.totalorder %s33, 0
      %p248 = por %p246, %p247
      %p249 = scmp.ne.s32.totalorder %s238, %s241
      %p250 = scmp.eq.s32.totalorder %s38, 2
      %p251 = por %p249, %p250
      %p252 = scmp.ne.s32.totalorder %s241, %s242
      %p253 = scmp.eq.s32.totalorder %s38, 0
      %p254 = por %p252, %p253
      %p255 = scmp.ne.s32.totalorder %s241, %s242
      %p256 = scmp.eq.s32.totalorder %s39, 2
      %p257 = por %p255, %p256
      %p259 = scmp.ne.s32.totalorder %s242, %s258
      %p260 = scmp.eq.s32.totalorder %s39, 0
      %p261 = por %p259, %p260
      %s262 = ssub.s32 %s40, %s52
      %s263 = ssub.s32 %s41, %s48
      %s264 = sor.u32 %s262, %s263
      %p265 = scmp.eq.s32.totalorder %s264, 0
      %s267 = sadd.s32 %s266, 1
      %s268 = scalar_select %p265, %s266, %s267
      %p271 = pneg %p265
      %p272 = scmp.eq.s32.totalorder %s33, 2
      %p273 = por %p271, %p272
      %p274 = scmp.ne.s32.totalorder %s266, %s269
      %p275 = scmp.eq.s32.totalorder %s33, 0
      %p276 = por %p274, %p275
      %p277 = scmp.ne.s32.totalorder %s266, %s269
      %p278 = scmp.eq.s32.totalorder %s38, 2
      %p279 = por %p277, %p278
      %p280 = scmp.ne.s32.totalorder %s269, %s270
      %p281 = scmp.eq.s32.totalorder %s38, 0
      %p282 = por %p280, %p281
      %p283 = scmp.ne.s32.totalorder %s269, %s270
      %p284 = scmp.eq.s32.totalorder %s39, 2
      %p285 = por %p283, %p284
      %p287 = scmp.ne.s32.totalorder %s270, %s286
      %p288 = scmp.eq.s32.totalorder %s39, 0
      %p289 = por %p287, %p288
      %p290 = scmp.le.s32.totalorder 1, %s33
      %p291 = scmp.lt.s32.totalorder %s33, 4
      %p292 = pnand %p290, %p291
      %p293 = pneg %p292
      // Predicated region
      $region9: #{tpu_custom_call.1} parent=5 // pred_check
        _
      $region10: #{tpu_custom_call.1} parent=5 // pred_check_branch
        %295 = sbr.rel (%p292) target = $region12
      $region11: #{tpu_custom_call.1} parent=5 // pred_region
        %s296 = ssub.s32 %s33, 1
        // Predicated region
        $region13: #{tpu_custom_call.1} parent=11 // pred_check
          %p297 = pneg %p118
        $region14: #{tpu_custom_call.1} parent=11 // pred_check_branch
          %299 = sbr.rel (%p297) target = $region16
        $region15: #{tpu_custom_call.1} parent=11 // pred_region
          %s301 = ssub.s32 256, 256
          %302 = vsyncadd [#allocation6], %s301
          %s303 = sshll.u32 [#allocation7], 4
          %s304 = int_to_ptr.vmem [resolvable:$true] %s303
          %309 = dma.hbm_to_vmem [thread:$0]  %s2, 256, %s304, [#allocation6], 128, 128, 8
        $region16: #{tpu_custom_call.1} parent=11 // pred_fallthru
          _
      $region12: #{tpu_custom_call.1} parent=5 // pred_fallthru
        _
      %p310 = scmp.lt.s32.totalorder %s33, 3
      // Predicated region
      $region17: #{tpu_custom_call.1} parent=5 // pred_check
        %p311 = pneg %p310
      $region18: #{tpu_custom_call.1} parent=5 // pred_check_branch
        %313 = sbr.rel (%p311) target = $region20
      $region19: #{tpu_custom_call.1} parent=5 // pred_region
        // Predicated region
        $region21: #{tpu_custom_call.1} parent=19 // pred_check
          %p314 = pneg %p65
        $region22: #{tpu_custom_call.1} parent=19 // pred_check_branch
          %316 = sbr.rel (%p314) target = $region24
        $region23: #{tpu_custom_call.1} parent=19 // pred_region
          %s317 = sand.u32 %s55, 1
          %s318 = scalar_lea.sflag [#allocation3], %s317
          %s319 = sand.u32 %s55, 1
          %s320 = smul.addr %s319, 32
          %s321 = scalar_lea.vmem [#allocation2], %s320
          %s323 = ssub.s32 512, 512
          %324 = vsyncadd %s318, %s323
          %s325 = smul.addr %s40, 4
          %s326 = smul.addr %s325, 128
          %s327 = scalar_lea.hbm %s0, %s326
          %s328 = sshll.u32 %s321, 4
          %s329 = int_to_ptr.vmem [resolvable:$true] %s328
          %334 = dma.hbm_to_vmem [thread:$0]  %s327, 512, %s329, %s318, 128, 128, 8
        $region24: #{tpu_custom_call.1} parent=19 // pred_fallthru
          _
        // Predicated region
        $region25: #{tpu_custom_call.1} parent=19 // pred_check
          %p335 = pneg %p91
        $region26: #{tpu_custom_call.1} parent=19 // pred_check_branch
          %337 = sbr.rel (%p335) target = $region28
        $region27: #{tpu_custom_call.1} parent=19 // pred_region
          %s338 = sand.u32 %s33, 1
          %s339 = scalar_lea.sflag [#allocation6], %s338
          %s340 = sand.u32 %s81, 1
          %s341 = smul.addr %s340, 32
          %s342 = scalar_lea.vmem [#allocation5], %s341
          %s344 = ssub.s32 512, 512
          %345 = vsyncadd %s339, %s344
          %s346 = smul.addr %s40, 4
          %s347 = smul.addr %s346, 128
          %s348 = scalar_lea.hbm %s1, %s347
          %s349 = sshll.u32 %s342, 4
          %s350 = int_to_ptr.vmem [resolvable:$true] %s349
          %355 = dma.hbm_to_vmem [thread:$0]  %s348, 512, %s350, %s339, 128, 128, 8
        $region28: #{tpu_custom_call.1} parent=19 // pred_fallthru
          _
        // Predicated region
        $region29: #{tpu_custom_call.1} parent=19 // pred_check
          %p356 = pneg %p138
        $region30: #{tpu_custom_call.1} parent=19 // pred_check_branch
          %358 = sbr.rel (%p356) target = $region32
        $region31: #{tpu_custom_call.1} parent=19 // pred_region
          %s359 = sand.u32 %s33, 1
          %s360 = scalar_lea.sflag [#allocation9], %s359
          %s361 = sand.u32 %s128, 1
          %s362 = smul.addr %s361, 16
          %s363 = scalar_lea.vmem [#allocation8], %s362
          %s365 = ssub.s32 256, 256
          %366 = vsyncadd %s360, %s365
          %s367 = smul.addr %s40, 2
          %s368 = smul.addr %s367, 128
          %s369 = scalar_lea.hbm %s3, %s368
          %s370 = sshll.u32 %s363, 4
          %s371 = int_to_ptr.vmem [resolvable:$true] %s370
          %376 = dma.hbm_to_vmem [thread:$0]  %s369, 256, %s371, %s360, 128, 128, 8
        $region32: #{tpu_custom_call.1} parent=19 // pred_fallthru
          _
        // Predicated region
        $region33: #{tpu_custom_call.1} parent=19 // pred_check
          %p377 = pneg %p164
        $region34: #{tpu_custom_call.1} parent=19 // pred_check_branch
          %379 = sbr.rel (%p377) target = $region36
        $region35: #{tpu_custom_call.1} parent=19 // pred_region
          %s380 = sand.u32 %s33, 1
          %s381 = scalar_lea.sflag [#allocation9], %s380
          %s382 = sand.u32 %s154, 1
          %s383 = smul.addr %s382, 32
          %s384 = scalar_lea.vmem [#allocation10], %s383
          %s386 = ssub.s32 512, 512
          %387 = vsyncadd %s381, %s386
          %s388 = smul.addr %s40, 4
          %s389 = smul.addr %s388, 128
          %s390 = scalar_lea.hbm %s4, %s389
          %s391 = sshll.u32 %s384, 4
          %s392 = int_to_ptr.vmem [resolvable:$true] %s391
          %397 = dma.hbm_to_vmem [thread:$0]  %s390, 512, %s392, %s381, 128, 128, 8
        $region36: #{tpu_custom_call.1} parent=19 // pred_fallthru
          _
        // Predicated region
        $region37: #{tpu_custom_call.1} parent=19 // pred_check
          %p398 = pneg %p192
        $region38: #{tpu_custom_call.1} parent=19 // pred_check_branch
          %400 = sbr.rel (%p398) target = $region40
        $region39: #{tpu_custom_call.1} parent=19 // pred_region
          %s401 = sand.u32 %s33, 1
          %s402 = scalar_lea.sflag [#allocation12], %s401
          %s403 = sand.u32 %s182, 1
          %s404 = smul.addr %s403, 32
          %s405 = scalar_lea.vmem [#allocation11], %s404
          %s407 = ssub.s32 512, 512
          %408 = vsyncadd %s402, %s407
          %s409 = smul.addr %s40, 4
          %s410 = sadd.s32 %s41, %s409
          %s411 = smul.addr %s410, 128
          %s412 = scalar_lea.hbm %s5, %s411
          %s413 = sshll.u32 %s405, 4
          %s414 = int_to_ptr.vmem [resolvable:$true] %s413
          %419 = dma.hbm_to_vmem [thread:$0]  %s412, 512, %s414, %s402, 128, 128, 8
        $region40: #{tpu_custom_call.1} parent=19 // pred_fallthru
          _
        // Predicated region
        $region41: #{tpu_custom_call.1} parent=19 // pred_check
          %p420 = pneg %p220
        $region42: #{tpu_custom_call.1} parent=19 // pred_check_branch
          %422 = sbr.rel (%p420) target = $region44
        $region43: #{tpu_custom_call.1} parent=19 // pred_region
          %s423 = sand.u32 %s33, 1
          %s424 = scalar_lea.sflag [#allocation12], %s423
          %s425 = sand.u32 %s210, 1
          %s426 = smul.addr %s425, 32
          %s427 = scalar_lea.vmem [#allocation13], %s426
          %s429 = ssub.s32 512, 512
          %430 = vsyncadd %s424, %s429
          %s431 = smul.addr %s40, 4
          %s432 = sadd.s32 %s41, %s431
          %s433 = smul.addr %s432, 128
          %s434 = scalar_lea.hbm %s6, %s433
          %s435 = sshll.u32 %s427, 4
          %s436 = int_to_ptr.vmem [resolvable:$true] %s435
          %441 = dma.hbm_to_vmem [thread:$0]  %s434, 512, %s436, %s424, 128, 128, 8
        $region44: #{tpu_custom_call.1} parent=19 // pred_fallthru
          _
      $region20: #{tpu_custom_call.1} parent=5 // pred_fallthru
        _
      %p442 = scmp.le.s32.totalorder 1, %s33
      %p443 = scmp.lt.s32.totalorder %s33, 4
      %p444 = pnand %p442, %p443
      %p445 = pneg %p444
      // Predicated region
      $region45: #{tpu_custom_call.1} parent=5 // pred_check
        _
      $region46: #{tpu_custom_call.1} parent=5 // pred_check_branch
        %447 = sbr.rel (%p444) target = $region48
      $region47: #{tpu_custom_call.1} parent=5 // pred_region
        %s448 = ssub.s32 %s33, 1
        %s449 = sand.u32 %s58, 1
        %s450 = scalar_lea.sflag [#allocation3], %s449
        %s451 = sand.u32 %s58, 1
        %s452 = smul.addr %s451, 32
        %s453 = scalar_lea.vmem [#allocation2], %s452
        // Predicated region
        $region49: #{tpu_custom_call.1} parent=47 // pred_check
          %p454 = pneg %p71
        $region50: #{tpu_custom_call.1} parent=47 // pred_check_branch
          %456 = sbr.rel (%p454) target = $region52
        $region51: #{tpu_custom_call.1} parent=47 // pred_region
          %457 = dma.done %s450, 512
        $region52: #{tpu_custom_call.1} parent=47 // pred_fallthru
          _
        %s458 = sand.u32 %s38, 1
        %s459 = scalar_lea.sflag [#allocation6], %s458
        %s460 = sand.u32 %s84, 1
        %s461 = smul.addr %s460, 32
        %s462 = scalar_lea.vmem [#allocation5], %s461
        // Predicated region
        $region53: #{tpu_custom_call.1} parent=47 // pred_check
          %p463 = pneg %p97
        $region54: #{tpu_custom_call.1} parent=47 // pred_check_branch
          %465 = sbr.rel (%p463) target = $region56
        $region55: #{tpu_custom_call.1} parent=47 // pred_region
          %466 = dma.done %s459, 512
        $region56: #{tpu_custom_call.1} parent=47 // pred_fallthru
          _
        // Predicated region
        $region57: #{tpu_custom_call.1} parent=47 // pred_check
          %p467 = pneg %p118
        $region58: #{tpu_custom_call.1} parent=47 // pred_check_branch
          %469 = sbr.rel (%p467) target = $region60
        $region59: #{tpu_custom_call.1} parent=47 // pred_region
          %470 = dma.done [#allocation6], 256
        $region60: #{tpu_custom_call.1} parent=47 // pred_fallthru
          _
        %s471 = sand.u32 %s38, 1
        %s472 = scalar_lea.sflag [#allocation9], %s471
        %s473 = sand.u32 %s131, 1
        %s474 = smul.addr %s473, 16
        %s475 = scalar_lea.vmem [#allocation8], %s474
        // Predicated region
        $region61: #{tpu_custom_call.1} parent=47 // pred_check
          %p476 = pneg %p144
        $region62: #{tpu_custom_call.1} parent=47 // pred_check_branch
          %478 = sbr.rel (%p476) target = $region64
        $region63: #{tpu_custom_call.1} parent=47 // pred_region
          %479 = dma.done %s472, 256
        $region64: #{tpu_custom_call.1} parent=47 // pred_fallthru
          _
        %s480 = sand.u32 %s38, 1
        %s481 = scalar_lea.sflag [#allocation9], %s480
        %s482 = sand.u32 %s157, 1
        %s483 = smul.addr %s482, 32
        %s484 = scalar_lea.vmem [#allocation10], %s483
        // Predicated region
        $region65: #{tpu_custom_call.1} parent=47 // pred_check
          %p485 = pneg %p170
        $region66: #{tpu_custom_call.1} parent=47 // pred_check_branch
          %487 = sbr.rel (%p485) target = $region68
        $region67: #{tpu_custom_call.1} parent=47 // pred_region
          %488 = dma.done %s481, 512
        $region68: #{tpu_custom_call.1} parent=47 // pred_fallthru
          _
        %s489 = sand.u32 %s38, 1
        %s490 = scalar_lea.sflag [#allocation12], %s489
        %s491 = sand.u32 %s185, 1
        %s492 = smul.addr %s491, 32
        %s493 = scalar_lea.vmem [#allocation11], %s492
        // Predicated region
        $region69: #{tpu_custom_call.1} parent=47 // pred_check
          %p494 = pneg %p198
        $region70: #{tpu_custom_call.1} parent=47 // pred_check_branch
          %496 = sbr.rel (%p494) target = $region72
        $region71: #{tpu_custom_call.1} parent=47 // pred_region
          %497 = dma.done %s490, 512
        $region72: #{tpu_custom_call.1} parent=47 // pred_fallthru
          _
        %s498 = sand.u32 %s38, 1
        %s499 = scalar_lea.sflag [#allocation12], %s498
        %s500 = sand.u32 %s213, 1
        %s501 = smul.addr %s500, 32
        %s502 = scalar_lea.vmem [#allocation13], %s501
        // Predicated region
        $region73: #{tpu_custom_call.1} parent=47 // pred_check
          %p503 = pneg %p226
        $region74: #{tpu_custom_call.1} parent=47 // pred_check_branch
          %505 = sbr.rel (%p503) target = $region76
        $region75: #{tpu_custom_call.1} parent=47 // pred_region
          %506 = dma.done %s499, 512
        $region76: #{tpu_custom_call.1} parent=47 // pred_fallthru
          _
        %s507 = sand.u32 %s58, 1
        %s508 = scalar_lea.sflag [#allocation3], %s507
        %s509 = sand.u32 %s58, 1
        %s510 = smul.addr %s509, 32
        %s511 = scalar_lea.vmem [#allocation2], %s510
        %p512 = pneg %p71
        %p513 = pneg %p68
        %s514 = sand.u32 %s38, 1
        %s515 = scalar_lea.sflag [#allocation6], %s514
        %s516 = sand.u32 %s84, 1
        %s517 = smul.addr %s516, 32
        %s518 = scalar_lea.vmem [#allocation5], %s517
        %p519 = pneg %p97
        %p520 = pneg %p94
        %p521 = pneg %p118
        %p522 = pneg %p115
        %s523 = sand.u32 %s38, 1
        %s524 = scalar_lea.sflag [#allocation9], %s523
        %s525 = sand.u32 %s131, 1
        %s526 = smul.addr %s525, 16
        %s527 = scalar_lea.vmem [#allocation8], %s526
        %p528 = pneg %p144
        %p529 = pneg %p141
        %s530 = sand.u32 %s38, 1
        %s531 = scalar_lea.sflag [#allocation9], %s530
        %s532 = sand.u32 %s157, 1
        %s533 = smul.addr %s532, 32
        %s534 = scalar_lea.vmem [#allocation10], %s533
        %p535 = pneg %p170
        %p536 = pneg %p167
        %s537 = sand.u32 %s38, 1
        %s538 = scalar_lea.sflag [#allocation12], %s537
        %s539 = sand.u32 %s185, 1
        %s540 = smul.addr %s539, 32
        %s541 = scalar_lea.vmem [#allocation11], %s540
        %p542 = pneg %p198
        %p543 = pneg %p195
        %s544 = sand.u32 %s38, 1
        %s545 = scalar_lea.sflag [#allocation12], %s544
        %s546 = sand.u32 %s213, 1
        %s547 = smul.addr %s546, 32
        %s548 = scalar_lea.vmem [#allocation13], %s547
        %p549 = pneg %p226
        %p550 = pneg %p223
        %p551 = pneg %p254
        %p552 = pneg %p251
        %s553 = sand.u32 %s241, 1
        %s554 = scalar_lea.sflag [#allocation4], %s553
        %s555 = sand.u32 %s241, 1
        %s556 = smul.addr %s555, 32
        %s557 = scalar_lea.vmem [#allocation14], %s556
        %p558 = pneg %p282
        %p559 = pneg %p279
        %s560 = sand.u32 %s269, 1
        %s561 = scalar_lea.sflag [#allocation16], %s560
        %s562 = sand.u32 %s269, 1
        %s563 = smul.addr %s562, 32
        %s564 = scalar_lea.vmem [#allocation15], %s563
        %v565 = vld [vmem:[%s453] sm:$0xff]
        %v566 = vld [vmem:[%s453 + $0x8] sm:$0xff]
        %v567 = vld [vmem:[%s453 + $0x10] sm:$0xff]
        %v568 = vld [vmem:[%s453 + $0x18] sm:$0xff]
        %v569 = vld [vmem:[#allocation7] sm:$0xff]
        %v570 = vld [vmem:[#allocation7 + $0x8] sm:$0xff]
        %v571 = vmul.f32 %v565, %v569
        %v572 = vmul.f32 %v566, %v570
        %v573 = vmul.f32 %v567, %v569
        %v574 = vmul.f32 %v568, %v570
        %v575 = vld [vmem:[%s462] sm:$0xff]
        %v576 = vld [vmem:[%s462 + $0x8] sm:$0xff]
        %v577 = vld [vmem:[%s462 + $0x10] sm:$0xff]
        %v578 = vld [vmem:[%s462 + $0x18] sm:$0xff]
        %v579 = vld [vmem:[%s475] sm:$0xff]
        %v580 = vld [vmem:[%s475 + $0x8] sm:$0xff]
        %v581 = vadd.f32 %v575, %v579
        %v582 = vadd.f32 %v576, %v580
        %v583 = vadd.f32 %v577, %v579
        %v584 = vadd.f32 %v578, %v580
        %v585 = vand.u32 2147483647, %v581
        %vm586 = vcmp.le.f32.partialorder %v585, 0.7853982
        %vm587 = vcmp.lt.s32.totalorder %v581, 0
        %v588 = vand.u32 %v581, 2139095040
        %v589 = vshrl.u32 %v588, 23
        %v590 = vsub.s32 %v589, 127
        %v591 = vand.u32 2147483647, %v581
        %v592 = vand.u32 %v591, 8388607
        %v593 = vor.u32 %v592, 8388608
        %v594 = vsub.s32 0, %v593
        %v595 = vadd.s32 %v590, 1
        %vm596 = vcmp.gt.s32.totalorder %v595, 0
        %v597 = vsel %vm596, %v595, 0
        %v598 = vshrl.u32 %v597, 5
        %v599 = vand.u32 %v597, 31
        %v600 = vsub.s32 32, %v599
        %v601 = vshrl.u32 683565275, %v600
        %v602 = vshll.u32 683565275, %v599
        %v603 = vshrl.u32 2475754826, %v600
        %v604 = vor.u32 %v602, %v603
        %v605 = vshll.u32 2475754826, %v599
        %v606 = vshrl.u32 2131351028, %v600
        %v607 = vor.u32 %v605, %v606
        %v608 = vshll.u32 2131351028, %v599
        %v609 = vshrl.u32 2102212464, %v600
        %v610 = vor.u32 %v608, %v609
        %v611 = vshll.u32 2102212464, %v599
        %v612 = vshrl.u32 920167782, %v600
        %v613 = vor.u32 %v611, %v612
        %v614 = vshll.u32 920167782, %v599
        %v615 = vshrl.u32 1326507024, %v600
        %v616 = vor.u32 %v614, %v615
        %vm617 = vcmp.lt.s32.totalorder %v598, 1
        %vm618 = vcmp.lt.s32.totalorder %v598, 2
        %vm619 = vcmp.lt.s32.totalorder %v598, 3
        %vm620 = vcmp.lt.s32.totalorder %v598, 4
        %v621 = vsel %vm617, %v601, %v604
        %v622 = vsel %vm620, %v610, 2102212464
        %v623 = vsel %vm619, %v607, %v622
        %v624 = vsel %vm618, %v621, %v623
        %v625 = vsel %vm617, %v604, %v607
        %v626 = vsel %vm620, %v613, 920167782
        %v627 = vsel %vm619, %v610, %v626
        %v628 = vsel %vm618, %v625, %v627
        %v629 = vsel %vm617, %v607, %v610
        %v630 = vsel %vm620, %v616, 1326507024
        %v631 = vsel %vm619, %v613, %v630
        %v632 = vsel %vm618, %v629, %v631
        %v633 = vshll.u32 %v593, 8
        %v634 = vmul.u32.u64.compose %v633, %v632
        %v635 = vextract.low.u32 %v634
        %v636 = vextract.high.u32 %v634
        %v637 = vmul.u32.u64.compose %v633, %v628
        %v638 = vextract.low.u32 %v637
        %v639 = vextract.high.u32 %v637
        %v640 = vmul.u32 %v633, %v624
        %v641 = vadd.s32 %v636, %v638
        %vm642 = vc.u32 %v636, %v638
        %v643 = vadd.s32 %v639, 1
        %v644 = vsel %vm642, %v643, %v639
        %v645 = vadd.s32 %v640, %v644
        %v646 = vadd.s32 %v645, 536870912
        %v647 = vshrl.u32 %v646, 30
        %v648 = vshll.u32 %v647, 30
        %v649 = vsub.s32 %v645, %v648
        %vm650 = vcmp.lt.s32.totalorder %v649, 0
        %v651 = vsub.s32 0, %v649
        %v652 = vsel %vm650, %v651, %v649
        %v653 = vclz %v652
        %v654 = vsub.s32 %v653, 2
        %vm655 = vcmp.gt.s32.totalorder 0, %v654
        %v656 = vsel %vm655, 0, %v654
        %v657 = vsub.s32 32, %v656
        %v658 = vshll.u32 %v649, %v656
        %v659 = vshrl.u32 %v641, %v657
        %v660 = vor.u32 %v658, %v659
        %v661 = vsub.s32 4294967266, %v656
        %v662 = vadd.s32 %v661, 127
        %v663 = vshll.u32 %v662, 23
        %v664 = vor.u32 4788187, %v663
        %v665 = vand.u32 2147483647, %v664
        %v667 = vcvt.s32.f32 %v660
        %v668 = vmul.f32 %v667, %v665
        %v669 = vxor.u32 %v668, 2147483648
        %v670 = vsel %vm587, %v669, %v668
        %v671 = vsub.s32 4, %v647
        %v672 = vsel %vm587, %v671, %v647
        %v673 = vsel %vm586, %v581, %v670
        %v674 = vsel %vm586, 0, %v672
        %v675 = vcosq.f32.pop %v673
        %v676 = vsinq.f32.pop %v673
        %vm677 = vweird.f32 %v581
        %v678 = vand.u32 %v674, 3
        %vm679 = vcmp.lt.s32.totalorder %v678, 2
        %vm680 = vcmp.eq.s32.totalorder %v678, 0
        %v681 = vxor.u32 %v676, 2147483648
        %v682 = vsel %vm680, %v675, %v681
        %vm683 = vcmp.eq.s32.totalorder %v678, 2
        %v684 = vxor.u32 %v675, 2147483648
        %v685 = vsel %vm683, %v684, %v676
        %v686 = vsel %vm679, %v682, %v685
        %v687 = vsel %vm677, nan, %v686
        %v688 = vand.u32 2147483647, %v582
        %vm689 = vcmp.le.f32.partialorder %v688, 0.7853982
        %vm690 = vcmp.lt.s32.totalorder %v582, 0
        %v691 = vand.u32 %v582, 2139095040
        %v692 = vshrl.u32 %v691, 23
        %v693 = vsub.s32 %v692, 127
        %v694 = vand.u32 2147483647, %v582
        %v695 = vand.u32 %v694, 8388607
        %v696 = vor.u32 %v695, 8388608
        %v697 = vsub.s32 0, %v696
        %v698 = vadd.s32 %v693, 1
        %vm699 = vcmp.gt.s32.totalorder %v698, 0
        %v700 = vsel %vm699, %v698, 0
        %v701 = vshrl.u32 %v700, 5
        %v702 = vand.u32 %v700, 31
        %v703 = vsub.s32 32, %v702
        %v704 = vshrl.u32 683565275, %v703
        %v705 = vshll.u32 683565275, %v702
        %v706 = vshrl.u32 2475754826, %v703
        %v707 = vor.u32 %v705, %v706
        %v708 = vshll.u32 2475754826, %v702
        %v709 = vshrl.u32 2131351028, %v703
        %v710 = vor.u32 %v708, %v709
        %v711 = vshll.u32 2131351028, %v702
        %v712 = vshrl.u32 2102212464, %v703
        %v713 = vor.u32 %v711, %v712
        %v714 = vshll.u32 2102212464, %v702
        %v715 = vshrl.u32 920167782, %v703
        %v716 = vor.u32 %v714, %v715
        %v717 = vshll.u32 920167782, %v702
        %v718 = vshrl.u32 1326507024, %v703
        %v719 = vor.u32 %v717, %v718
        %vm720 = vcmp.lt.s32.totalorder %v701, 1
        %vm721 = vcmp.lt.s32.totalorder %v701, 2
        %vm722 = vcmp.lt.s32.totalorder %v701, 3
        %vm723 = vcmp.lt.s32.totalorder %v701, 4
        %v724 = vsel %vm720, %v704, %v707
        %v725 = vsel %vm723, %v713, 2102212464
        %v726 = vsel %vm722, %v710, %v725
        %v727 = vsel %vm721, %v724, %v726
        %v728 = vsel %vm720, %v707, %v710
        %v729 = vsel %vm723, %v716, 920167782
        %v730 = vsel %vm722, %v713, %v729
        %v731 = vsel %vm721, %v728, %v730
        %v732 = vsel %vm720, %v710, %v713
        %v733 = vsel %vm723, %v719, 1326507024
        %v734 = vsel %vm722, %v716, %v733
        %v735 = vsel %vm721, %v732, %v734
        %v736 = vshll.u32 %v696, 8
        %v737 = vmul.u32.u64.compose %v736, %v735
        %v738 = vextract.low.u32 %v737
        %v739 = vextract.high.u32 %v737
        %v740 = vmul.u32.u64.compose %v736, %v731
        %v741 = vextract.low.u32 %v740
        %v742 = vextract.high.u32 %v740
        %v743 = vmul.u32 %v736, %v727
        %v744 = vadd.s32 %v739, %v741
        %vm745 = vc.u32 %v739, %v741
        %v746 = vadd.s32 %v742, 1
        %v747 = vsel %vm745, %v746, %v742
        %v748 = vadd.s32 %v743, %v747
        %v749 = vadd.s32 %v748, 536870912
        %v750 = vshrl.u32 %v749, 30
        %v751 = vshll.u32 %v750, 30
        %v752 = vsub.s32 %v748, %v751
        %vm753 = vcmp.lt.s32.totalorder %v752, 0
        %v754 = vsub.s32 0, %v752
        %v755 = vsel %vm753, %v754, %v752
        %v756 = vclz %v755
        %v757 = vsub.s32 %v756, 2
        %vm758 = vcmp.gt.s32.totalorder 0, %v757
        %v759 = vsel %vm758, 0, %v757
        %v760 = vsub.s32 32, %v759
        %v761 = vshll.u32 %v752, %v759
        %v762 = vshrl.u32 %v744, %v760
        %v763 = vor.u32 %v761, %v762
        %v764 = vsub.s32 4294967266, %v759
        %v765 = vadd.s32 %v764, 127
        %v766 = vshll.u32 %v765, 23
        %v767 = vor.u32 4788187, %v766
        %v768 = vand.u32 2147483647, %v767
        %v770 = vcvt.s32.f32 %v763
        %v771 = vmul.f32 %v770, %v768
        %v772 = vxor.u32 %v771, 2147483648
        %v773 = vsel %vm690, %v772, %v771
        %v774 = vsub.s32 4, %v750
        %v775 = vsel %vm690, %v774, %v750
        %v776 = vsel %vm689, %v582, %v773
        %v777 = vsel %vm689, 0, %v775
        %v778 = vcosq.f32.pop %v776
        %v779 = vsinq.f32.pop %v776
        %vm780 = vweird.f32 %v582
        %v781 = vand.u32 %v777, 3
        %vm782 = vcmp.lt.s32.totalorder %v781, 2
        %vm783 = vcmp.eq.s32.totalorder %v781, 0
        %v784 = vxor.u32 %v779, 2147483648
        %v785 = vsel %vm783, %v778, %v784
        %vm786 = vcmp.eq.s32.totalorder %v781, 2
        %v787 = vxor.u32 %v778, 2147483648
        %v788 = vsel %vm786, %v787, %v779
        %v789 = vsel %vm782, %v785, %v788
        %v790 = vsel %vm780, nan, %v789
        %v791 = vand.u32 2147483647, %v583
        %vm792 = vcmp.le.f32.partialorder %v791, 0.7853982
        %vm793 = vcmp.lt.s32.totalorder %v583, 0
        %v794 = vand.u32 %v583, 2139095040
        %v795 = vshrl.u32 %v794, 23
        %v796 = vsub.s32 %v795, 127
        %v797 = vand.u32 2147483647, %v583
        %v798 = vand.u32 %v797, 8388607
        %v799 = vor.u32 %v798, 8388608
        %v800 = vsub.s32 0, %v799
        %v801 = vadd.s32 %v796, 1
        %vm802 = vcmp.gt.s32.totalorder %v801, 0
        %v803 = vsel %vm802, %v801, 0
        %v804 = vshrl.u32 %v803, 5
        %v805 = vand.u32 %v803, 31
        %v806 = vsub.s32 32, %v805
        %v807 = vshrl.u32 683565275, %v806
        %v808 = vshll.u32 683565275, %v805
        %v809 = vshrl.u32 2475754826, %v806
        %v810 = vor.u32 %v808, %v809
        %v811 = vshll.u32 2475754826, %v805
        %v812 = vshrl.u32 2131351028, %v806
        %v813 = vor.u32 %v811, %v812
        %v814 = vshll.u32 2131351028, %v805
        %v815 = vshrl.u32 2102212464, %v806
        %v816 = vor.u32 %v814, %v815
        %v817 = vshll.u32 2102212464, %v805
        %v818 = vshrl.u32 920167782, %v806
        %v819 = vor.u32 %v817, %v818
        %v820 = vshll.u32 920167782, %v805
        %v821 = vshrl.u32 1326507024, %v806
        %v822 = vor.u32 %v820, %v821
        %vm823 = vcmp.lt.s32.totalorder %v804, 1
        %vm824 = vcmp.lt.s32.totalorder %v804, 2
        %vm825 = vcmp.lt.s32.totalorder %v804, 3
        %vm826 = vcmp.lt.s32.totalorder %v804, 4
        %v827 = vsel %vm823, %v807, %v810
        %v828 = vsel %vm826, %v816, 2102212464
        %v829 = vsel %vm825, %v813, %v828
        %v830 = vsel %vm824, %v827, %v829
        %v831 = vsel %vm823, %v810, %v813
        %v832 = vsel %vm826, %v819, 920167782
        %v833 = vsel %vm825, %v816, %v832
        %v834 = vsel %vm824, %v831, %v833
        %v835 = vsel %vm823, %v813, %v816
        %v836 = vsel %vm826, %v822, 1326507024
        %v837 = vsel %vm825, %v819, %v836
        %v838 = vsel %vm824, %v835, %v837
        %v839 = vshll.u32 %v799, 8
        %v840 = vmul.u32.u64.compose %v839, %v838
        %v841 = vextract.low.u32 %v840
        %v842 = vextract.high.u32 %v840
        %v843 = vmul.u32.u64.compose %v839, %v834
        %v844 = vextract.low.u32 %v843
        %v845 = vextract.high.u32 %v843
        %v846 = vmul.u32 %v839, %v830
        %v847 = vadd.s32 %v842, %v844
        %vm848 = vc.u32 %v842, %v844
        %v849 = vadd.s32 %v845, 1
        %v850 = vsel %vm848, %v849, %v845
        %v851 = vadd.s32 %v846, %v850
        %v852 = vadd.s32 %v851, 536870912
        %v853 = vshrl.u32 %v852, 30
        %v854 = vshll.u32 %v853, 30
        %v855 = vsub.s32 %v851, %v854
        %vm856 = vcmp.lt.s32.totalorder %v855, 0
        %v857 = vsub.s32 0, %v855
        %v858 = vsel %vm856, %v857, %v855
        %v859 = vclz %v858
        %v860 = vsub.s32 %v859, 2
        %vm861 = vcmp.gt.s32.totalorder 0, %v860
        %v862 = vsel %vm861, 0, %v860
        %v863 = vsub.s32 32, %v862
        %v864 = vshll.u32 %v855, %v862
        %v865 = vshrl.u32 %v847, %v863
        %v866 = vor.u32 %v864, %v865
        %v867 = vsub.s32 4294967266, %v862
        %v868 = vadd.s32 %v867, 127
        %v869 = vshll.u32 %v868, 23
        %v870 = vor.u32 4788187, %v869
        %v871 = vand.u32 2147483647, %v870
        %v873 = vcvt.s32.f32 %v866
        %v874 = vmul.f32 %v873, %v871
        %v875 = vxor.u32 %v874, 2147483648
        %v876 = vsel %vm793, %v875, %v874
        %v877 = vsub.s32 4, %v853
        %v878 = vsel %vm793, %v877, %v853
        %v879 = vsel %vm792, %v583, %v876
        %v880 = vsel %vm792, 0, %v878
        %v881 = vcosq.f32.pop %v879
        %v882 = vsinq.f32.pop %v879
        %vm883 = vweird.f32 %v583
        %v884 = vand.u32 %v880, 3
        %vm885 = vcmp.lt.s32.totalorder %v884, 2
        %vm886 = vcmp.eq.s32.totalorder %v884, 0
        %v887 = vxor.u32 %v882, 2147483648
        %v888 = vsel %vm886, %v881, %v887
        %vm889 = vcmp.eq.s32.totalorder %v884, 2
        %v890 = vxor.u32 %v881, 2147483648
        %v891 = vsel %vm889, %v890, %v882
        %v892 = vsel %vm885, %v888, %v891
        %v893 = vsel %vm883, nan, %v892
        %v894 = vand.u32 2147483647, %v584
        %vm895 = vcmp.le.f32.partialorder %v894, 0.7853982
        %vm896 = vcmp.lt.s32.totalorder %v584, 0
        %v897 = vand.u32 %v584, 2139095040
        %v898 = vshrl.u32 %v897, 23
        %v899 = vsub.s32 %v898, 127
        %v900 = vand.u32 2147483647, %v584
        %v901 = vand.u32 %v900, 8388607
        %v902 = vor.u32 %v901, 8388608
        %v903 = vsub.s32 0, %v902
        %v904 = vadd.s32 %v899, 1
        %vm905 = vcmp.gt.s32.totalorder %v904, 0
        %v906 = vsel %vm905, %v904, 0
        %v907 = vshrl.u32 %v906, 5
        %v908 = vand.u32 %v906, 31
        %v909 = vsub.s32 32, %v908
        %v910 = vshrl.u32 683565275, %v909
        %v911 = vshll.u32 683565275, %v908
        %v912 = vshrl.u32 2475754826, %v909
        %v913 = vor.u32 %v911, %v912
        %v914 = vshll.u32 2475754826, %v908
        %v915 = vshrl.u32 2131351028, %v909
        %v916 = vor.u32 %v914, %v915
        %v917 = vshll.u32 2131351028, %v908
        %v918 = vshrl.u32 2102212464, %v909
        %v919 = vor.u32 %v917, %v918
        %v920 = vshll.u32 2102212464, %v908
        %v921 = vshrl.u32 920167782, %v909
        %v922 = vor.u32 %v920, %v921
        %v923 = vshll.u32 920167782, %v908
        %v924 = vshrl.u32 1326507024, %v909
        %v925 = vor.u32 %v923, %v924
        %vm926 = vcmp.lt.s32.totalorder %v907, 1
        %vm927 = vcmp.lt.s32.totalorder %v907, 2
        %vm928 = vcmp.lt.s32.totalorder %v907, 3
        %vm929 = vcmp.lt.s32.totalorder %v907, 4
        %v930 = vsel %vm926, %v910, %v913
        %v931 = vsel %vm929, %v919, 2102212464
        %v932 = vsel %vm928, %v916, %v931
        %v933 = vsel %vm927, %v930, %v932
        %v934 = vsel %vm926, %v913, %v916
        %v935 = vsel %vm929, %v922, 920167782
        %v936 = vsel %vm928, %v919, %v935
        %v937 = vsel %vm927, %v934, %v936
        %v938 = vsel %vm926, %v916, %v919
        %v939 = vsel %vm929, %v925, 1326507024
        %v940 = vsel %vm928, %v922, %v939
        %v941 = vsel %vm927, %v938, %v940
        %v942 = vshll.u32 %v902, 8
        %v943 = vmul.u32.u64.compose %v942, %v941
        %v944 = vextract.low.u32 %v943
        %v945 = vextract.high.u32 %v943
        %v946 = vmul.u32.u64.compose %v942, %v937
        %v947 = vextract.low.u32 %v946
        %v948 = vextract.high.u32 %v946
        %v949 = vmul.u32 %v942, %v933
        %v950 = vadd.s32 %v945, %v947
        %vm951 = vc.u32 %v945, %v947
        %v952 = vadd.s32 %v948, 1
        %v953 = vsel %vm951, %v952, %v948
        %v954 = vadd.s32 %v949, %v953
        %v955 = vadd.s32 %v954, 536870912
        %v956 = vshrl.u32 %v955, 30
        %v957 = vshll.u32 %v956, 30
        %v958 = vsub.s32 %v954, %v957
        %vm959 = vcmp.lt.s32.totalorder %v958, 0
        %v960 = vsub.s32 0, %v958
        %v961 = vsel %vm959, %v960, %v958
        %v962 = vclz %v961
        %v963 = vsub.s32 %v962, 2
        %vm964 = vcmp.gt.s32.totalorder 0, %v963
        %v965 = vsel %vm964, 0, %v963
        %v966 = vsub.s32 32, %v965
        %v967 = vshll.u32 %v958, %v965
        %v968 = vshrl.u32 %v950, %v966
        %v969 = vor.u32 %v967, %v968
        %v970 = vsub.s32 4294967266, %v965
        %v971 = vadd.s32 %v970, 127
        %v972 = vshll.u32 %v971, 23
        %v973 = vor.u32 4788187, %v972
        %v974 = vand.u32 2147483647, %v973
        %v976 = vcvt.s32.f32 %v969
        %v977 = vmul.f32 %v976, %v974
        %v978 = vxor.u32 %v977, 2147483648
        %v979 = vsel %vm896, %v978, %v977
        %v980 = vsub.s32 4, %v956
        %v981 = vsel %vm896, %v980, %v956
        %v982 = vsel %vm895, %v584, %v979
        %v983 = vsel %vm895, 0, %v981
        %v984 = vcosq.f32.pop %v982
        %v985 = vsinq.f32.pop %v982
        %vm986 = vweird.f32 %v584
        %v987 = vand.u32 %v983, 3
        %vm988 = vcmp.lt.s32.totalorder %v987, 2
        %vm989 = vcmp.eq.s32.totalorder %v987, 0
        %v990 = vxor.u32 %v985, 2147483648
        %v991 = vsel %vm989, %v984, %v990
        %vm992 = vcmp.eq.s32.totalorder %v987, 2
        %v993 = vxor.u32 %v984, 2147483648
        %v994 = vsel %vm992, %v993, %v985
        %v995 = vsel %vm988, %v991, %v994
        %v996 = vsel %vm986, nan, %v995
        %v997 = vmul.f32 %v571, %v687
        %v998 = vmul.f32 %v572, %v790
        %v999 = vmul.f32 %v573, %v893
        %v1000 = vmul.f32 %v574, %v996
        %v1001 = vand.u32 2147483647, %v581
        %vm1002 = vcmp.le.f32.partialorder %v1001, 0.7853982
        %vm1003 = vcmp.lt.s32.totalorder %v581, 0
        %v1004 = vand.u32 %v581, 2139095040
        %v1005 = vshrl.u32 %v1004, 23
        %v1006 = vsub.s32 %v1005, 127
        %v1007 = vand.u32 2147483647, %v581
        %v1008 = vand.u32 %v1007, 8388607
        %v1009 = vor.u32 %v1008, 8388608
        %v1010 = vsub.s32 0, %v1009
        %v1011 = vadd.s32 %v1006, 1
        %vm1012 = vcmp.gt.s32.totalorder %v1011, 0
        %v1013 = vsel %vm1012, %v1011, 0
        %v1014 = vshrl.u32 %v1013, 5
        %v1015 = vand.u32 %v1013, 31
        %v1016 = vsub.s32 32, %v1015
        %v1017 = vshrl.u32 683565275, %v1016
        %v1018 = vshll.u32 683565275, %v1015
        %v1019 = vshrl.u32 2475754826, %v1016
        %v1020 = vor.u32 %v1018, %v1019
        %v1021 = vshll.u32 2475754826, %v1015
        %v1022 = vshrl.u32 2131351028, %v1016
        %v1023 = vor.u32 %v1021, %v1022
        %v1024 = vshll.u32 2131351028, %v1015
        %v1025 = vshrl.u32 2102212464, %v1016
        %v1026 = vor.u32 %v1024, %v1025
        %v1027 = vshll.u32 2102212464, %v1015
        %v1028 = vshrl.u32 920167782, %v1016
        %v1029 = vor.u32 %v1027, %v1028
        %v1030 = vshll.u32 920167782, %v1015
        %v1031 = vshrl.u32 1326507024, %v1016
        %v1032 = vor.u32 %v1030, %v1031
        %vm1033 = vcmp.lt.s32.totalorder %v1014, 1
        %vm1034 = vcmp.lt.s32.totalorder %v1014, 2
        %vm1035 = vcmp.lt.s32.totalorder %v1014, 3
        %vm1036 = vcmp.lt.s32.totalorder %v1014, 4
        %v1037 = vsel %vm1033, %v1017, %v1020
        %v1038 = vsel %vm1036, %v1026, 2102212464
        %v1039 = vsel %vm1035, %v1023, %v1038
        %v1040 = vsel %vm1034, %v1037, %v1039
        %v1041 = vsel %vm1033, %v1020, %v1023
        %v1042 = vsel %vm1036, %v1029, 920167782
        %v1043 = vsel %vm1035, %v1026, %v1042
        %v1044 = vsel %vm1034, %v1041, %v1043
        %v1045 = vsel %vm1033, %v1023, %v1026
        %v1046 = vsel %vm1036, %v1032, 1326507024
        %v1047 = vsel %vm1035, %v1029, %v1046
        %v1048 = vsel %vm1034, %v1045, %v1047
        %v1049 = vshll.u32 %v1009, 8
        %v1050 = vmul.u32.u64.compose %v1049, %v1048
        %v1051 = vextract.low.u32 %v1050
        %v1052 = vextract.high.u32 %v1050
        %v1053 = vmul.u32.u64.compose %v1049, %v1044
        %v1054 = vextract.low.u32 %v1053
        %v1055 = vextract.high.u32 %v1053
        %v1056 = vmul.u32 %v1049, %v1040
        %v1057 = vadd.s32 %v1052, %v1054
        %vm1058 = vc.u32 %v1052, %v1054
        %v1059 = vadd.s32 %v1055, 1
        %v1060 = vsel %vm1058, %v1059, %v1055
        %v1061 = vadd.s32 %v1056, %v1060
        %v1062 = vadd.s32 %v1061, 536870912
        %v1063 = vshrl.u32 %v1062, 30
        %v1064 = vshll.u32 %v1063, 30
        %v1065 = vsub.s32 %v1061, %v1064
        %vm1066 = vcmp.lt.s32.totalorder %v1065, 0
        %v1067 = vsub.s32 0, %v1065
        %v1068 = vsel %vm1066, %v1067, %v1065
        %v1069 = vclz %v1068
        %v1070 = vsub.s32 %v1069, 2
        %vm1071 = vcmp.gt.s32.totalorder 0, %v1070
        %v1072 = vsel %vm1071, 0, %v1070
        %v1073 = vsub.s32 32, %v1072
        %v1074 = vshll.u32 %v1065, %v1072
        %v1075 = vshrl.u32 %v1057, %v1073
        %v1076 = vor.u32 %v1074, %v1075
        %v1077 = vsub.s32 4294967266, %v1072
        %v1078 = vadd.s32 %v1077, 127
        %v1079 = vshll.u32 %v1078, 23
        %v1080 = vor.u32 4788187, %v1079
        %v1081 = vand.u32 2147483647, %v1080
        %v1083 = vcvt.s32.f32 %v1076
        %v1084 = vmul.f32 %v1083, %v1081
        %v1085 = vxor.u32 %v1084, 2147483648
        %v1086 = vsel %vm1003, %v1085, %v1084
        %v1087 = vsub.s32 4, %v1063
        %v1088 = vsel %vm1003, %v1087, %v1063
        %v1089 = vsel %vm1002, %v581, %v1086
        %v1090 = vsel %vm1002, 0, %v1088
        %v1091 = vcosq.f32.pop %v1089
        %v1092 = vsinq.f32.pop %v1089
        %vm1093 = vweird.f32 %v581
        %v1094 = vadd.s32 %v1090, 3
        %v1095 = vand.u32 %v1094, 3
        %vm1096 = vcmp.lt.s32.totalorder %v1095, 2
        %vm1097 = vcmp.eq.s32.totalorder %v1095, 0
        %v1098 = vxor.u32 %v1092, 2147483648
        %v1099 = vsel %vm1097, %v1091, %v1098
        %vm1100 = vcmp.eq.s32.totalorder %v1095, 2
        %v1101 = vxor.u32 %v1091, 2147483648
        %v1102 = vsel %vm1100, %v1101, %v1092
        %v1103 = vsel %vm1096, %v1099, %v1102
        %v1104 = vsel %vm1093, nan, %v1103
        %v1105 = vand.u32 2147483647, %v582
        %vm1106 = vcmp.le.f32.partialorder %v1105, 0.7853982
        %vm1107 = vcmp.lt.s32.totalorder %v582, 0
        %v1108 = vand.u32 %v582, 2139095040
        %v1109 = vshrl.u32 %v1108, 23
        %v1110 = vsub.s32 %v1109, 127
        %v1111 = vand.u32 2147483647, %v582
        %v1112 = vand.u32 %v1111, 8388607
        %v1113 = vor.u32 %v1112, 8388608
        %v1114 = vsub.s32 0, %v1113
        %v1115 = vadd.s32 %v1110, 1
        %vm1116 = vcmp.gt.s32.totalorder %v1115, 0
        %v1117 = vsel %vm1116, %v1115, 0
        %v1118 = vshrl.u32 %v1117, 5
        %v1119 = vand.u32 %v1117, 31
        %v1120 = vsub.s32 32, %v1119
        %v1121 = vshrl.u32 683565275, %v1120
        %v1122 = vshll.u32 683565275, %v1119
        %v1123 = vshrl.u32 2475754826, %v1120
        %v1124 = vor.u32 %v1122, %v1123
        %v1125 = vshll.u32 2475754826, %v1119
        %v1126 = vshrl.u32 2131351028, %v1120
        %v1127 = vor.u32 %v1125, %v1126
        %v1128 = vshll.u32 2131351028, %v1119
        %v1129 = vshrl.u32 2102212464, %v1120
        %v1130 = vor.u32 %v1128, %v1129
        %v1131 = vshll.u32 2102212464, %v1119
        %v1132 = vshrl.u32 920167782, %v1120
        %v1133 = vor.u32 %v1131, %v1132
        %v1134 = vshll.u32 920167782, %v1119
        %v1135 = vshrl.u32 1326507024, %v1120
        %v1136 = vor.u32 %v1134, %v1135
        %vm1137 = vcmp.lt.s32.totalorder %v1118, 1
        %vm1138 = vcmp.lt.s32.totalorder %v1118, 2
        %vm1139 = vcmp.lt.s32.totalorder %v1118, 3
        %vm1140 = vcmp.lt.s32.totalorder %v1118, 4
        %v1141 = vsel %vm1137, %v1121, %v1124
        %v1142 = vsel %vm1140, %v1130, 2102212464
        %v1143 = vsel %vm1139, %v1127, %v1142
        %v1144 = vsel %vm1138, %v1141, %v1143
        %v1145 = vsel %vm1137, %v1124, %v1127
        %v1146 = vsel %vm1140, %v1133, 920167782
        %v1147 = vsel %vm1139, %v1130, %v1146
        %v1148 = vsel %vm1138, %v1145, %v1147
        %v1149 = vsel %vm1137, %v1127, %v1130
        %v1150 = vsel %vm1140, %v1136, 1326507024
        %v1151 = vsel %vm1139, %v1133, %v1150
        %v1152 = vsel %vm1138, %v1149, %v1151
        %v1153 = vshll.u32 %v1113, 8
        %v1154 = vmul.u32.u64.compose %v1153, %v1152
        %v1155 = vextract.low.u32 %v1154
        %v1156 = vextract.high.u32 %v1154
        %v1157 = vmul.u32.u64.compose %v1153, %v1148
        %v1158 = vextract.low.u32 %v1157
        %v1159 = vextract.high.u32 %v1157
        %v1160 = vmul.u32 %v1153, %v1144
        %v1161 = vadd.s32 %v1156, %v1158
        %vm1162 = vc.u32 %v1156, %v1158
        %v1163 = vadd.s32 %v1159, 1
        %v1164 = vsel %vm1162, %v1163, %v1159
        %v1165 = vadd.s32 %v1160, %v1164
        %v1166 = vadd.s32 %v1165, 536870912
        %v1167 = vshrl.u32 %v1166, 30
        %v1168 = vshll.u32 %v1167, 30
        %v1169 = vsub.s32 %v1165, %v1168
        %vm1170 = vcmp.lt.s32.totalorder %v1169, 0
        %v1171 = vsub.s32 0, %v1169
        %v1172 = vsel %vm1170, %v1171, %v1169
        %v1173 = vclz %v1172
        %v1174 = vsub.s32 %v1173, 2
        %vm1175 = vcmp.gt.s32.totalorder 0, %v1174
        %v1176 = vsel %vm1175, 0, %v1174
        %v1177 = vsub.s32 32, %v1176
        %v1178 = vshll.u32 %v1169, %v1176
        %v1179 = vshrl.u32 %v1161, %v1177
        %v1180 = vor.u32 %v1178, %v1179
        %v1181 = vsub.s32 4294967266, %v1176
        %v1182 = vadd.s32 %v1181, 127
        %v1183 = vshll.u32 %v1182, 23
        %v1184 = vor.u32 4788187, %v1183
        %v1185 = vand.u32 2147483647, %v1184
        %v1187 = vcvt.s32.f32 %v1180
        %v1188 = vmul.f32 %v1187, %v1185
        %v1189 = vxor.u32 %v1188, 2147483648
        %v1190 = vsel %vm1107, %v1189, %v1188
        %v1191 = vsub.s32 4, %v1167
        %v1192 = vsel %vm1107, %v1191, %v1167
        %v1193 = vsel %vm1106, %v582, %v1190
        %v1194 = vsel %vm1106, 0, %v1192
        %v1195 = vcosq.f32.pop %v1193
        %v1196 = vsinq.f32.pop %v1193
        %vm1197 = vweird.f32 %v582
        %v1198 = vadd.s32 %v1194, 3
        %v1199 = vand.u32 %v1198, 3
        %vm1200 = vcmp.lt.s32.totalorder %v1199, 2
        %vm1201 = vcmp.eq.s32.totalorder %v1199, 0
        %v1202 = vxor.u32 %v1196, 2147483648
        %v1203 = vsel %vm1201, %v1195, %v1202
        %vm1204 = vcmp.eq.s32.totalorder %v1199, 2
        %v1205 = vxor.u32 %v1195, 2147483648
        %v1206 = vsel %vm1204, %v1205, %v1196
        %v1207 = vsel %vm1200, %v1203, %v1206
        %v1208 = vsel %vm1197, nan, %v1207
        %v1209 = vand.u32 2147483647, %v583
        %vm1210 = vcmp.le.f32.partialorder %v1209, 0.7853982
        %vm1211 = vcmp.lt.s32.totalorder %v583, 0
        %v1212 = vand.u32 %v583, 2139095040
        %v1213 = vshrl.u32 %v1212, 23
        %v1214 = vsub.s32 %v1213, 127
        %v1215 = vand.u32 2147483647, %v583
        %v1216 = vand.u32 %v1215, 8388607
        %v1217 = vor.u32 %v1216, 8388608
        %v1218 = vsub.s32 0, %v1217
        %v1219 = vadd.s32 %v1214, 1
        %vm1220 = vcmp.gt.s32.totalorder %v1219, 0
        %v1221 = vsel %vm1220, %v1219, 0
        %v1222 = vshrl.u32 %v1221, 5
        %v1223 = vand.u32 %v1221, 31
        %v1224 = vsub.s32 32, %v1223
        %v1225 = vshrl.u32 683565275, %v1224
        %v1226 = vshll.u32 683565275, %v1223
        %v1227 = vshrl.u32 2475754826, %v1224
        %v1228 = vor.u32 %v1226, %v1227
        %v1229 = vshll.u32 2475754826, %v1223
        %v1230 = vshrl.u32 2131351028, %v1224
        %v1231 = vor.u32 %v1229, %v1230
        %v1232 = vshll.u32 2131351028, %v1223
        %v1233 = vshrl.u32 2102212464, %v1224
        %v1234 = vor.u32 %v1232, %v1233
        %v1235 = vshll.u32 2102212464, %v1223
        %v1236 = vshrl.u32 920167782, %v1224
        %v1237 = vor.u32 %v1235, %v1236
        %v1238 = vshll.u32 920167782, %v1223
        %v1239 = vshrl.u32 1326507024, %v1224
        %v1240 = vor.u32 %v1238, %v1239
        %vm1241 = vcmp.lt.s32.totalorder %v1222, 1
        %vm1242 = vcmp.lt.s32.totalorder %v1222, 2
        %vm1243 = vcmp.lt.s32.totalorder %v1222, 3
        %vm1244 = vcmp.lt.s32.totalorder %v1222, 4
        %v1245 = vsel %vm1241, %v1225, %v1228
        %v1246 = vsel %vm1244, %v1234, 2102212464
        %v1247 = vsel %vm1243, %v1231, %v1246
        %v1248 = vsel %vm1242, %v1245, %v1247
        %v1249 = vsel %vm1241, %v1228, %v1231
        %v1250 = vsel %vm1244, %v1237, 920167782
        %v1251 = vsel %vm1243, %v1234, %v1250
        %v1252 = vsel %vm1242, %v1249, %v1251
        %v1253 = vsel %vm1241, %v1231, %v1234
        %v1254 = vsel %vm1244, %v1240, 1326507024
        %v1255 = vsel %vm1243, %v1237, %v1254
        %v1256 = vsel %vm1242, %v1253, %v1255
        %v1257 = vshll.u32 %v1217, 8
        %v1258 = vmul.u32.u64.compose %v1257, %v1256
        %v1259 = vextract.low.u32 %v1258
        %v1260 = vextract.high.u32 %v1258
        %v1261 = vmul.u32.u64.compose %v1257, %v1252
        %v1262 = vextract.low.u32 %v1261
        %v1263 = vextract.high.u32 %v1261
        %v1264 = vmul.u32 %v1257, %v1248
        %v1265 = vadd.s32 %v1260, %v1262
        %vm1266 = vc.u32 %v1260, %v1262
        %v1267 = vadd.s32 %v1263, 1
        %v1268 = vsel %vm1266, %v1267, %v1263
        %v1269 = vadd.s32 %v1264, %v1268
        %v1270 = vadd.s32 %v1269, 536870912
        %v1271 = vshrl.u32 %v1270, 30
        %v1272 = vshll.u32 %v1271, 30
        %v1273 = vsub.s32 %v1269, %v1272
        %vm1274 = vcmp.lt.s32.totalorder %v1273, 0
        %v1275 = vsub.s32 0, %v1273
        %v1276 = vsel %vm1274, %v1275, %v1273
        %v1277 = vclz %v1276
        %v1278 = vsub.s32 %v1277, 2
        %vm1279 = vcmp.gt.s32.totalorder 0, %v1278
        %v1280 = vsel %vm1279, 0, %v1278
        %v1281 = vsub.s32 32, %v1280
        %v1282 = vshll.u32 %v1273, %v1280
        %v1283 = vshrl.u32 %v1265, %v1281
        %v1284 = vor.u32 %v1282, %v1283
        %v1285 = vsub.s32 4294967266, %v1280
        %v1286 = vadd.s32 %v1285, 127
        %v1287 = vshll.u32 %v1286, 23
        %v1288 = vor.u32 4788187, %v1287
        %v1289 = vand.u32 2147483647, %v1288
        %v1291 = vcvt.s32.f32 %v1284
        %v1292 = vmul.f32 %v1291, %v1289
        %v1293 = vxor.u32 %v1292, 2147483648
        %v1294 = vsel %vm1211, %v1293, %v1292
        %v1295 = vsub.s32 4, %v1271
        %v1296 = vsel %vm1211, %v1295, %v1271
        %v1297 = vsel %vm1210, %v583, %v1294
        %v1298 = vsel %vm1210, 0, %v1296
        %v1299 = vcosq.f32.pop %v1297
        %v1300 = vsinq.f32.pop %v1297
        %vm1301 = vweird.f32 %v583
        %v1302 = vadd.s32 %v1298, 3
        %v1303 = vand.u32 %v1302, 3
        %vm1304 = vcmp.lt.s32.totalorder %v1303, 2
        %vm1305 = vcmp.eq.s32.totalorder %v1303, 0
        %v1306 = vxor.u32 %v1300, 2147483648
        %v1307 = vsel %vm1305, %v1299, %v1306
        %vm1308 = vcmp.eq.s32.totalorder %v1303, 2
        %v1309 = vxor.u32 %v1299, 2147483648
        %v1310 = vsel %vm1308, %v1309, %v1300
        %v1311 = vsel %vm1304, %v1307, %v1310
        %v1312 = vsel %vm1301, nan, %v1311
        %v1313 = vand.u32 2147483647, %v584
        %vm1314 = vcmp.le.f32.partialorder %v1313, 0.7853982
        %vm1315 = vcmp.lt.s32.totalorder %v584, 0
        %v1316 = vand.u32 %v584, 2139095040
        %v1317 = vshrl.u32 %v1316, 23
        %v1318 = vsub.s32 %v1317, 127
        %v1319 = vand.u32 2147483647, %v584
        %v1320 = vand.u32 %v1319, 8388607
        %v1321 = vor.u32 %v1320, 8388608
        %v1322 = vsub.s32 0, %v1321
        %v1323 = vadd.s32 %v1318, 1
        %vm1324 = vcmp.gt.s32.totalorder %v1323, 0
        %v1325 = vsel %vm1324, %v1323, 0
        %v1326 = vshrl.u32 %v1325, 5
        %v1327 = vand.u32 %v1325, 31
        %v1328 = vsub.s32 32, %v1327
        %v1329 = vshrl.u32 683565275, %v1328
        %v1330 = vshll.u32 683565275, %v1327
        %v1331 = vshrl.u32 2475754826, %v1328
        %v1332 = vor.u32 %v1330, %v1331
        %v1333 = vshll.u32 2475754826, %v1327
        %v1334 = vshrl.u32 2131351028, %v1328
        %v1335 = vor.u32 %v1333, %v1334
        %v1336 = vshll.u32 2131351028, %v1327
        %v1337 = vshrl.u32 2102212464, %v1328
        %v1338 = vor.u32 %v1336, %v1337
        %v1339 = vshll.u32 2102212464, %v1327
        %v1340 = vshrl.u32 920167782, %v1328
        %v1341 = vor.u32 %v1339, %v1340
        %v1342 = vshll.u32 920167782, %v1327
        %v1343 = vshrl.u32 1326507024, %v1328
        %v1344 = vor.u32 %v1342, %v1343
        %vm1345 = vcmp.lt.s32.totalorder %v1326, 1
        %vm1346 = vcmp.lt.s32.totalorder %v1326, 2
        %vm1347 = vcmp.lt.s32.totalorder %v1326, 3
        %vm1348 = vcmp.lt.s32.totalorder %v1326, 4
        %v1349 = vsel %vm1345, %v1329, %v1332
        %v1350 = vsel %vm1348, %v1338, 2102212464
        %v1351 = vsel %vm1347, %v1335, %v1350
        %v1352 = vsel %vm1346, %v1349, %v1351
        %v1353 = vsel %vm1345, %v1332, %v1335
        %v1354 = vsel %vm1348, %v1341, 920167782
        %v1355 = vsel %vm1347, %v1338, %v1354
        %v1356 = vsel %vm1346, %v1353, %v1355
        %v1357 = vsel %vm1345, %v1335, %v1338
        %v1358 = vsel %vm1348, %v1344, 1326507024
        %v1359 = vsel %vm1347, %v1341, %v1358
        %v1360 = vsel %vm1346, %v1357, %v1359
        %v1361 = vshll.u32 %v1321, 8
        %v1362 = vmul.u32.u64.compose %v1361, %v1360
        %v1363 = vextract.low.u32 %v1362
        %v1364 = vextract.high.u32 %v1362
        %v1365 = vmul.u32.u64.compose %v1361, %v1356
        %v1366 = vextract.low.u32 %v1365
        %v1367 = vextract.high.u32 %v1365
        %v1368 = vmul.u32 %v1361, %v1352
        %v1369 = vadd.s32 %v1364, %v1366
        %vm1370 = vc.u32 %v1364, %v1366
        %v1371 = vadd.s32 %v1367, 1
        %v1372 = vsel %vm1370, %v1371, %v1367
        %v1373 = vadd.s32 %v1368, %v1372
        %v1374 = vadd.s32 %v1373, 536870912
        %v1375 = vshrl.u32 %v1374, 30
        %v1376 = vshll.u32 %v1375, 30
        %v1377 = vsub.s32 %v1373, %v1376
        %vm1378 = vcmp.lt.s32.totalorder %v1377, 0
        %v1379 = vsub.s32 0, %v1377
        %v1380 = vsel %vm1378, %v1379, %v1377
        %v1381 = vclz %v1380
        %v1382 = vsub.s32 %v1381, 2
        %vm1383 = vcmp.gt.s32.totalorder 0, %v1382
        %v1384 = vsel %vm1383, 0, %v1382
        %v1385 = vsub.s32 32, %v1384
        %v1386 = vshll.u32 %v1377, %v1384
        %v1387 = vshrl.u32 %v1369, %v1385
        %v1388 = vor.u32 %v1386, %v1387
        %v1389 = vsub.s32 4294967266, %v1384
        %v1390 = vadd.s32 %v1389, 127
        %v1391 = vshll.u32 %v1390, 23
        %v1392 = vor.u32 4788187, %v1391
        %v1393 = vand.u32 2147483647, %v1392
        %v1395 = vcvt.s32.f32 %v1388
        %v1396 = vmul.f32 %v1395, %v1393
        %v1397 = vxor.u32 %v1396, 2147483648
        %v1398 = vsel %vm1315, %v1397, %v1396
        %v1399 = vsub.s32 4, %v1375
        %v1400 = vsel %vm1315, %v1399, %v1375
        %v1401 = vsel %vm1314, %v584, %v1398
        %v1402 = vsel %vm1314, 0, %v1400
        %v1403 = vcosq.f32.pop %v1401
        %v1404 = vsinq.f32.pop %v1401
        %vm1405 = vweird.f32 %v584
        %v1406 = vadd.s32 %v1402, 3
        %v1407 = vand.u32 %v1406, 3
        %vm1408 = vcmp.lt.s32.totalorder %v1407, 2
        %vm1409 = vcmp.eq.s32.totalorder %v1407, 0
        %v1410 = vxor.u32 %v1404, 2147483648
        %v1411 = vsel %vm1409, %v1403, %v1410
        %vm1412 = vcmp.eq.s32.totalorder %v1407, 2
        %v1413 = vxor.u32 %v1403, 2147483648
        %v1414 = vsel %vm1412, %v1413, %v1404
        %v1415 = vsel %vm1408, %v1411, %v1414
        %v1416 = vsel %vm1405, nan, %v1415
        %v1417 = vmul.f32 %v571, %v1104
        %v1418 = vmul.f32 %v572, %v1208
        %v1419 = vmul.f32 %v573, %v1312
        %v1420 = vmul.f32 %v574, %v1416
        %v1421 = vld [vmem:[%s493] sm:$0xff]
        %v1422 = vld [vmem:[%s493 + $0x8] sm:$0xff]
        %s1423 = scalar_lea.vmem %s493, 16 [#allocation11]
        %v1424 = vld [vmem:[%s1423] sm:$0xff]
        %v1425 = vld [vmem:[%s1423 + $0x8] sm:$0xff]
        %v1426 = vadd.f32 %v1421, %v1424
        %v1427 = vadd.f32 %v1422, %v1425
        %v1428 = vld [vmem:[%s484] sm:$0xff]
        %v1429 = vld [vmem:[%s484 + $0x8] sm:$0xff]
        %s1430 = scalar_lea.vmem %s484, 16 [#allocation10]
        %v1431 = vld [vmem:[%s1430] sm:$0xff]
        %v1432 = vld [vmem:[%s1430 + $0x8] sm:$0xff]
        %v1433 = vadd.f32 %v1428, %v1431
        %v1434 = vadd.f32 %v1429, %v1432
        %v1435 = vld [vmem:[%s502] sm:$0xff]
        %v1436 = vld [vmem:[%s502 + $0x8] sm:$0xff]
        %s1437 = scalar_lea.vmem %s502, 16 [#allocation13]
        %v1438 = vld [vmem:[%s1437] sm:$0xff]
        %v1439 = vld [vmem:[%s1437 + $0x8] sm:$0xff]
        %v1440 = vadd.f32 %v997, %v1417
        %v1441 = vadd.f32 %v998, %v1418
        %v1442 = vadd.f32 %v999, %v1419
        %v1443 = vadd.f32 %v1000, %v1420
        %vm1444 = vcmask 130048
        %v1446 = vsel %vm1444, %v997, 0
        %v1449 = vsel %vm1444, %v998, 0
        %v1452 = vsel %vm1444, %v999, 0
        %v1455 = vsel %vm1444, %v1000, 0
        %1457 = vmatprep.subr.mxu0 0.0
        %1458 = vmatpush1.msra.mxu0 %v1421
        %1459 = vmatprep.subr.mxu0 0.0
        %1460 = vmatpush1.msra.mxu0 %v1422
        %1461 = vmatprep.subr.mxu0 0.0
        %1462 = vmatpush1.msra.mxu0 0.0
        %1463 = vmatprep.subr.mxu0 0.0
        %1464 = vmatpush1.msra.mxu0 0.0
        %1465 = vmatprep.subr.mxu0 0.0
        %1466 = vmatpush1.msra.mxu0 0.0
        %1467 = vmatprep.subr.mxu0 0.0
        %1468 = vmatpush1.msra.mxu0 0.0
        %1469 = vmatprep.subr.mxu0 0.0
        %1470 = vmatpush1.msra.mxu0 0.0
        %1471 = vmatprep.subr.mxu0 0.0
        %1472 = vmatpush1.msra.mxu0 0.0
        %1473 = vmatprep.subr.mxu0 0.0
        %1474 = vmatpush1.msra.mxu0 0.0
        %1475 = vmatprep.subr.mxu0 0.0
        %1476 = vmatpush1.msra.mxu0 0.0
        %1477 = vmatprep.subr.mxu0 0.0
        %1478 = vmatpush1.msra.mxu0 0.0
        %1479 = vmatprep.subr.mxu0 0.0
        %1480 = vmatpush1.msra.mxu0 0.0
        %1481 = vmatprep.subr.mxu0 0.0
        %1482 = vmatpush1.msra.mxu0 0.0
        %1483 = vmatprep.subr.mxu0 0.0
        %1484 = vmatpush1.msra.mxu0 0.0
        %1485 = vmatprep.subr.mxu0 0.0
        %1486 = vmatpush1.msra.mxu0 0.0
        %1487 = vmatprep.subr.mxu0 0.0
        %1488 = vmatpush1.msra.mxu0 0.0
        %1489 = vmatprep.subr.mxu0 0.0
        %1490 = vmatpush1.msra.mxu0 0.0
        %1491 = vmatprep.subr.mxu0 0.0
        %1492 = vmatpush1.msra.mxu0 0.0
        %1493 = vmatprep.subr.mxu0 0.0
        %1494 = vmatpush1.msra.mxu0 0.0
        %1495 = vmatprep.subr.mxu0 0.0
        %1496 = vmatpush1.msra.mxu0 0.0
        %1497 = vmatprep.subr.mxu0 0.0
        %1498 = vmatpush1.msra.mxu0 0.0
        %1499 = vmatprep.subr.mxu0 0.0
        %1500 = vmatpush1.msra.mxu0 0.0
        %1501 = vmatprep.subr.mxu0 0.0
        %1502 = vmatpush1.msra.mxu0 0.0
        %1503 = vmatprep.subr.mxu0 0.0
        %1504 = vmatpush1.msra.mxu0 0.0
        %1505 = vmatprep.subr.mxu0 0.0
        %1506 = vmatpush1.msra.mxu0 0.0
        %1507 = vmatprep.subr.mxu0 0.0
        %1508 = vmatpush1.msra.mxu0 0.0
        %1509 = vmatprep.subr.mxu0 0.0
        %1510 = vmatpush1.msra.mxu0 0.0
        %1511 = vmatprep.subr.mxu0 0.0
        %1512 = vmatpush1.msra.mxu0 0.0
        %1513 = vmatprep.subr.mxu0 0.0
        %1514 = vmatpush1.msra.mxu0 0.0
        %1515 = vmatprep.subr.mxu0 0.0
        %1516 = vmatpush1.msra.mxu0 0.0
        %1517 = vmatprep.subr.mxu0 0.0
        %1518 = vmatpush1.msra.mxu0 0.0
        %1519 = vmatprep.subr.mxu0 0.0
        %1520 = vmatpush1.msra.mxu0 0.0
        %1521 = vmatprep.mubr.f32.mxu0 0.0
        %1522 = vmatmul.mubr.f32.gmra.mrb[0].mxu0 %v1446
        %v1523 = vpop.f32.mrb[0].mxu0
        %v1524 = vadd.f32 0.0, %v1523
        %v1525 = vpop.f32.mrb[0].mxu0
        %1526 = vmatprep.mubr.f32.mxu0 0.0
        %1527 = vmatmul.mubr.f32.gmra.mrb[0].mxu0 %v1449
        %v1528 = vpop.f32.mrb[0].mxu0
        %v1529 = vadd.f32 0.0, %v1528
        %v1530 = vpop.f32.mrb[0].mxu0
        %1531 = vmatprep.mubr.f32.mxu0 0.0
        %1532 = vmatmul.mubr.f32.gmra.mrb[0].mxu0 %v1452
        %v1533 = vpop.f32.mrb[0].mxu0
        %v1534 = vadd.f32 0.0, %v1533
        %v1535 = vpop.f32.mrb[0].mxu0
        %1536 = vmatprep.mubr.f32.mxu0 0.0
        %1537 = vmatmul.mubr.f32.gmra.mrb[0].mxu0 %v1455
        %v1538 = vpop.f32.mrb[0].mxu0
        %v1539 = vadd.f32 0.0, %v1538
        %v1540 = vpop.f32.mrb[0].mxu0
        %1541 = vdwg.mxu0
        %v1543 = vsel %vm1444, %v1417, 0
        %v1546 = vsel %vm1444, %v1418, 0
        %v1549 = vsel %vm1444, %v1419, 0
        %v1552 = vsel %vm1444, %v1420, 0
        %1554 = vmatprep.subr.mxu0 0.0
        %1555 = vmatpush1.msra.mxu0 %v1424
        %1556 = vmatprep.subr.mxu0 0.0
        %1557 = vmatpush1.msra.mxu0 %v1425
        %1558 = vmatprep.subr.mxu0 0.0
        %1559 = vmatpush1.msra.mxu0 0.0
        %1560 = vmatprep.subr.mxu0 0.0
        %1561 = vmatpush1.msra.mxu0 0.0
        %1562 = vmatprep.subr.mxu0 0.0
        %1563 = vmatpush1.msra.mxu0 0.0
        %1564 = vmatprep.subr.mxu0 0.0
        %1565 = vmatpush1.msra.mxu0 0.0
        %1566 = vmatprep.subr.mxu0 0.0
        %1567 = vmatpush1.msra.mxu0 0.0
        %1568 = vmatprep.subr.mxu0 0.0
        %1569 = vmatpush1.msra.mxu0 0.0
        %1570 = vmatprep.subr.mxu0 0.0
        %1571 = vmatpush1.msra.mxu0 0.0
        %1572 = vmatprep.subr.mxu0 0.0
        %1573 = vmatpush1.msra.mxu0 0.0
        %1574 = vmatprep.subr.mxu0 0.0
        %1575 = vmatpush1.msra.mxu0 0.0
        %1576 = vmatprep.subr.mxu0 0.0
        %1577 = vmatpush1.msra.mxu0 0.0
        %1578 = vmatprep.subr.mxu0 0.0
        %1579 = vmatpush1.msra.mxu0 0.0
        %1580 = vmatprep.subr.mxu0 0.0
        %1581 = vmatpush1.msra.mxu0 0.0
        %1582 = vmatprep.subr.mxu0 0.0
        %1583 = vmatpush1.msra.mxu0 0.0
        %1584 = vmatprep.subr.mxu0 0.0
        %1585 = vmatpush1.msra.mxu0 0.0
        %1586 = vmatprep.subr.mxu0 0.0
        %1587 = vmatpush1.msra.mxu0 0.0
        %1588 = vmatprep.subr.mxu0 0.0
        %1589 = vmatpush1.msra.mxu0 0.0
        %1590 = vmatprep.subr.mxu0 0.0
        %1591 = vmatpush1.msra.mxu0 0.0
        %1592 = vmatprep.subr.mxu0 0.0
        %1593 = vmatpush1.msra.mxu0 0.0
        %1594 = vmatprep.subr.mxu0 0.0
        %1595 = vmatpush1.msra.mxu0 0.0
        %1596 = vmatprep.subr.mxu0 0.0
        %1597 = vmatpush1.msra.mxu0 0.0
        %1598 = vmatprep.subr.mxu0 0.0
        %1599 = vmatpush1.msra.mxu0 0.0
        %1600 = vmatprep.subr.mxu0 0.0
        %1601 = vmatpush1.msra.mxu0 0.0
        %1602 = vmatprep.subr.mxu0 0.0
        %1603 = vmatpush1.msra.mxu0 0.0
        %1604 = vmatprep.subr.mxu0 0.0
        %1605 = vmatpush1.msra.mxu0 0.0
        %1606 = vmatprep.subr.mxu0 0.0
        %1607 = vmatpush1.msra.mxu0 0.0
        %1608 = vmatprep.subr.mxu0 0.0
        %1609 = vmatpush1.msra.mxu0 0.0
        %1610 = vmatprep.subr.mxu0 0.0
        %1611 = vmatpush1.msra.mxu0 0.0
        %1612 = vmatprep.subr.mxu0 0.0
        %1613 = vmatpush1.msra.mxu0 0.0
        %1614 = vmatprep.subr.mxu0 0.0
        %1615 = vmatpush1.msra.mxu0 0.0
        %1616 = vmatprep.subr.mxu0 0.0
        %1617 = vmatpush1.msra.mxu0 0.0
        %1618 = vmatprep.mubr.f32.mxu0 0.0
        %1619 = vmatmul.mubr.f32.gmra.mrb[0].mxu0 %v1543
        %v1620 = vpop.f32.mrb[0].mxu0
        %v1621 = vadd.f32 0.0, %v1620
        %v1622 = vpop.f32.mrb[0].mxu0
        %1623 = vmatprep.mubr.f32.mxu0 0.0
        %1624 = vmatmul.mubr.f32.gmra.mrb[0].mxu0 %v1546
        %v1625 = vpop.f32.mrb[0].mxu0
        %v1626 = vadd.f32 0.0, %v1625
        %v1627 = vpop.f32.mrb[0].mxu0
        %1628 = vmatprep.mubr.f32.mxu0 0.0
        %1629 = vmatmul.mubr.f32.gmra.mrb[0].mxu0 %v1549
        %v1630 = vpop.f32.mrb[0].mxu0
        %v1631 = vadd.f32 0.0, %v1630
        %v1632 = vpop.f32.mrb[0].mxu0
        %1633 = vmatprep.mubr.f32.mxu0 0.0
        %1634 = vmatmul.mubr.f32.gmra.mrb[0].mxu0 %v1552
        %v1635 = vpop.f32.mrb[0].mxu0
        %v1636 = vadd.f32 0.0, %v1635
        %v1637 = vpop.f32.mrb[0].mxu0
        %1638 = vdwg.mxu0
        %v1640 = vsel %vm1444, %v1440, 0
        %v1643 = vsel %vm1444, %v1441, 0
        %v1646 = vsel %vm1444, %v1442, 0
        %v1649 = vsel %vm1444, %v1443, 0
        %1651 = vmatprep.subr.mxu0 0.0
        %1652 = vmatpush1.msra.mxu0 %v1426
        %1653 = vmatprep.subr.mxu0 0.0
        %1654 = vmatpush1.msra.mxu0 %v1427
        %1655 = vmatprep.subr.mxu0 0.0
        %1656 = vmatpush1.msra.mxu0 0.0
        %1657 = vmatprep.subr.mxu0 0.0
        %1658 = vmatpush1.msra.mxu0 0.0
        %1659 = vmatprep.subr.mxu0 0.0
        %1660 = vmatpush1.msra.mxu0 0.0
        %1661 = vmatprep.subr.mxu0 0.0
        %1662 = vmatpush1.msra.mxu0 0.0
        %1663 = vmatprep.subr.mxu0 0.0
        %1664 = vmatpush1.msra.mxu0 0.0
        %1665 = vmatprep.subr.mxu0 0.0
        %1666 = vmatpush1.msra.mxu0 0.0
        %1667 = vmatprep.subr.mxu0 0.0
        %1668 = vmatpush1.msra.mxu0 0.0
        %1669 = vmatprep.subr.mxu0 0.0
        %1670 = vmatpush1.msra.mxu0 0.0
        %1671 = vmatprep.subr.mxu0 0.0
        %1672 = vmatpush1.msra.mxu0 0.0
        %1673 = vmatprep.subr.mxu0 0.0
        %1674 = vmatpush1.msra.mxu0 0.0
        %1675 = vmatprep.subr.mxu0 0.0
        %1676 = vmatpush1.msra.mxu0 0.0
        %1677 = vmatprep.subr.mxu0 0.0
        %1678 = vmatpush1.msra.mxu0 0.0
        %1679 = vmatprep.subr.mxu0 0.0
        %1680 = vmatpush1.msra.mxu0 0.0
        %1681 = vmatprep.subr.mxu0 0.0
        %1682 = vmatpush1.msra.mxu0 0.0
        %1683 = vmatprep.subr.mxu0 0.0
        %1684 = vmatpush1.msra.mxu0 0.0
        %1685 = vmatprep.subr.mxu0 0.0
        %1686 = vmatpush1.msra.mxu0 0.0
        %1687 = vmatprep.subr.mxu0 0.0
        %1688 = vmatpush1.msra.mxu0 0.0
        %1689 = vmatprep.subr.mxu0 0.0
        %1690 = vmatpush1.msra.mxu0 0.0
        %1691 = vmatprep.subr.mxu0 0.0
        %1692 = vmatpush1.msra.mxu0 0.0
        %1693 = vmatprep.subr.mxu0 0.0
        %1694 = vmatpush1.msra.mxu0 0.0
        %1695 = vmatprep.subr.mxu0 0.0
        %1696 = vmatpush1.msra.mxu0 0.0
        %1697 = vmatprep.subr.mxu0 0.0
        %1698 = vmatpush1.msra.mxu0 0.0
        %1699 = vmatprep.subr.mxu0 0.0
        %1700 = vmatpush1.msra.mxu0 0.0
        %1701 = vmatprep.subr.mxu0 0.0
        %1702 = vmatpush1.msra.mxu0 0.0
        %1703 = vmatprep.subr.mxu0 0.0
        %1704 = vmatpush1.msra.mxu0 0.0
        %1705 = vmatprep.subr.mxu0 0.0
        %1706 = vmatpush1.msra.mxu0 0.0
        %1707 = vmatprep.subr.mxu0 0.0
        %1708 = vmatpush1.msra.mxu0 0.0
        %1709 = vmatprep.subr.mxu0 0.0
        %1710 = vmatpush1.msra.mxu0 0.0
        %1711 = vmatprep.subr.mxu0 0.0
        %1712 = vmatpush1.msra.mxu0 0.0
        %1713 = vmatprep.subr.mxu0 0.0
        %1714 = vmatpush1.msra.mxu0 0.0
        %1715 = vmatprep.mubr.f32.mxu0 0.0
        %1716 = vmatmul.mubr.f32.gmra.mrb[0].mxu0 %v1640
        %v1717 = vpop.f32.mrb[0].mxu0
        %v1718 = vadd.f32 0.0, %v1717
        %v1719 = vpop.f32.mrb[0].mxu0
        %1720 = vmatprep.mubr.f32.mxu0 0.0
        %1721 = vmatmul.mubr.f32.gmra.mrb[0].mxu0 %v1643
        %v1722 = vpop.f32.mrb[0].mxu0
        %v1723 = vadd.f32 0.0, %v1722
        %v1724 = vpop.f32.mrb[0].mxu0
        %1725 = vmatprep.mubr.f32.mxu0 0.0
        %1726 = vmatmul.mubr.f32.gmra.mrb[0].mxu0 %v1646
        %v1727 = vpop.f32.mrb[0].mxu0
        %v1728 = vadd.f32 0.0, %v1727
        %v1729 = vpop.f32.mrb[0].mxu0
        %1730 = vmatprep.mubr.f32.mxu0 0.0
        %1731 = vmatmul.mubr.f32.gmra.mrb[0].mxu0 %v1649
        %v1732 = vpop.f32.mrb[0].mxu0
        %v1733 = vadd.f32 0.0, %v1732
        %v1734 = vpop.f32.mrb[0].mxu0
        %1735 = vdwg.mxu0
        %v1736 = vsub.f32 %v1524, %v1621
        %v1737 = vsub.f32 %v1529, %v1626
        %v1738 = vsub.f32 %v1534, %v1631
        %v1739 = vsub.f32 %v1539, %v1636
        %v1740 = vsub.f32 %v1718, %v1524
        %v1741 = vsub.f32 %v1723, %v1529
        %v1742 = vsub.f32 %v1728, %v1534
        %v1743 = vsub.f32 %v1733, %v1539
        %v1744 = vsub.f32 %v1740, %v1621
        %v1745 = vsub.f32 %v1741, %v1626
        %v1746 = vsub.f32 %v1742, %v1631
        %v1747 = vsub.f32 %v1743, %v1636
        %v1748 = vadd.f32 %v1736, %v1744
        %v1749 = vadd.f32 %v1737, %v1745
        %v1751 = vsel %vm1444, %v1428, 0
        %v1754 = vsel %vm1444, %v1429, 0
        %1756 = vmatprep.subr.mxu0 0.0
        %1757 = vmatpush1.msra.mxu0 %v1736
        %1758 = vmatprep.subr.mxu0 0.0
        %1759 = vmatpush1.msra.mxu0 %v1737
        %1760 = vmatprep.subr.mxu0 0.0
        %1761 = vmatpush1.msra.mxu0 0.0
        %1762 = vmatprep.subr.mxu0 0.0
        %1763 = vmatpush1.msra.mxu0 0.0
        %1764 = vmatprep.subr.mxu0 0.0
        %1765 = vmatpush1.msra.mxu0 0.0
        %1766 = vmatprep.subr.mxu0 0.0
        %1767 = vmatpush1.msra.mxu0 0.0
        %1768 = vmatprep.subr.mxu0 0.0
        %1769 = vmatpush1.msra.mxu0 0.0
        %1770 = vmatprep.subr.mxu0 0.0
        %1771 = vmatpush1.msra.mxu0 0.0
        %1772 = vmatprep.subr.mxu0 0.0
        %1773 = vmatpush1.msra.mxu0 0.0
        %1774 = vmatprep.subr.mxu0 0.0
        %1775 = vmatpush1.msra.mxu0 0.0
        %1776 = vmatprep.subr.mxu0 0.0
        %1777 = vmatpush1.msra.mxu0 0.0
        %1778 = vmatprep.subr.mxu0 0.0
        %1779 = vmatpush1.msra.mxu0 0.0
        %1780 = vmatprep.subr.mxu0 0.0
        %1781 = vmatpush1.msra.mxu0 0.0
        %1782 = vmatprep.subr.mxu0 0.0
        %1783 = vmatpush1.msra.mxu0 0.0
        %1784 = vmatprep.subr.mxu0 0.0
        %1785 = vmatpush1.msra.mxu0 0.0
        %1786 = vmatprep.subr.mxu0 0.0
        %1787 = vmatpush1.msra.mxu0 0.0
        %1788 = vmatprep.subr.mxu0 0.0
        %1789 = vmatpush1.msra.mxu0 0.0
        %1790 = vmatprep.subr.mxu0 0.0
        %1791 = vmatpush1.msra.mxu0 0.0
        %1792 = vmatprep.subr.mxu0 0.0
        %1793 = vmatpush1.msra.mxu0 0.0
        %1794 = vmatprep.subr.mxu0 0.0
        %1795 = vmatpush1.msra.mxu0 0.0
        %1796 = vmatprep.subr.mxu0 0.0
        %1797 = vmatpush1.msra.mxu0 0.0
        %1798 = vmatprep.subr.mxu0 0.0
        %1799 = vmatpush1.msra.mxu0 0.0
        %1800 = vmatprep.subr.mxu0 0.0
        %1801 = vmatpush1.msra.mxu0 0.0
        %1802 = vmatprep.subr.mxu0 0.0
        %1803 = vmatpush1.msra.mxu0 0.0
        %1804 = vmatprep.subr.mxu0 0.0
        %1805 = vmatpush1.msra.mxu0 0.0
        %1806 = vmatprep.subr.mxu0 0.0
        %1807 = vmatpush1.msra.mxu0 0.0
        %1808 = vmatprep.subr.mxu0 0.0
        %1809 = vmatpush1.msra.mxu0 0.0
        %1810 = vmatprep.subr.mxu0 0.0
        %1811 = vmatpush1.msra.mxu0 0.0
        %1812 = vmatprep.subr.mxu0 0.0
        %1813 = vmatpush1.msra.mxu0 0.0
        %1814 = vmatprep.subr.mxu0 0.0
        %1815 = vmatpush1.msra.mxu0 0.0
        %1816 = vmatprep.subr.mxu0 0.0
        %1817 = vmatpush1.msra.mxu0 0.0
        %1818 = vmatprep.subr.mxu0 0.0
        %1819 = vmatpush1.msra.mxu0 0.0
        %1820 = vmatprep.mubr.f32.mxu0 0.0
        %1821 = vmatmul.mubr.f32.gmra.mrb[0].mxu0 %v1751
        %v1822 = vpop.f32.mrb[0].mxu0
        %v1823 = vadd.f32 0.0, %v1822
        %v1824 = vpop.f32.mrb[0].mxu0
        %1825 = vmatprep.mubr.f32.mxu0 0.0
        %1826 = vmatmul.mubr.f32.gmra.mrb[0].mxu0 %v1754
        %v1827 = vpop.f32.mrb[0].mxu0
        %v1828 = vadd.f32 0.0, %v1827
        %v1829 = vpop.f32.mrb[0].mxu0
        %1830 = vdwg.mxu0
        %v1832 = vsel %vm1444, %v1431, 0
        %v1835 = vsel %vm1444, %v1432, 0
        %1837 = vmatprep.subr.mxu0 0.0
        %1838 = vmatpush1.msra.mxu0 %v1744
        %1839 = vmatprep.subr.mxu0 0.0
        %1840 = vmatpush1.msra.mxu0 %v1745
        %1841 = vmatprep.subr.mxu0 0.0
        %1842 = vmatpush1.msra.mxu0 0.0
        %1843 = vmatprep.subr.mxu0 0.0
        %1844 = vmatpush1.msra.mxu0 0.0
        %1845 = vmatprep.subr.mxu0 0.0
        %1846 = vmatpush1.msra.mxu0 0.0
        %1847 = vmatprep.subr.mxu0 0.0
        %1848 = vmatpush1.msra.mxu0 0.0
        %1849 = vmatprep.subr.mxu0 0.0
        %1850 = vmatpush1.msra.mxu0 0.0
        %1851 = vmatprep.subr.mxu0 0.0
        %1852 = vmatpush1.msra.mxu0 0.0
        %1853 = vmatprep.subr.mxu0 0.0
        %1854 = vmatpush1.msra.mxu0 0.0
        %1855 = vmatprep.subr.mxu0 0.0
        %1856 = vmatpush1.msra.mxu0 0.0
        %1857 = vmatprep.subr.mxu0 0.0
        %1858 = vmatpush1.msra.mxu0 0.0
        %1859 = vmatprep.subr.mxu0 0.0
        %1860 = vmatpush1.msra.mxu0 0.0
        %1861 = vmatprep.subr.mxu0 0.0
        %1862 = vmatpush1.msra.mxu0 0.0
        %1863 = vmatprep.subr.mxu0 0.0
        %1864 = vmatpush1.msra.mxu0 0.0
        %1865 = vmatprep.subr.mxu0 0.0
        %1866 = vmatpush1.msra.mxu0 0.0
        %1867 = vmatprep.subr.mxu0 0.0
        %1868 = vmatpush1.msra.mxu0 0.0
        %1869 = vmatprep.subr.mxu0 0.0
        %1870 = vmatpush1.msra.mxu0 0.0
        %1871 = vmatprep.subr.mxu0 0.0
        %1872 = vmatpush1.msra.mxu0 0.0
        %1873 = vmatprep.subr.mxu0 0.0
        %1874 = vmatpush1.msra.mxu0 0.0
        %1875 = vmatprep.subr.mxu0 0.0
        %1876 = vmatpush1.msra.mxu0 0.0
        %1877 = vmatprep.subr.mxu0 0.0
        %1878 = vmatpush1.msra.mxu0 0.0
        %1879 = vmatprep.subr.mxu0 0.0
        %1880 = vmatpush1.msra.mxu0 0.0
        %1881 = vmatprep.subr.mxu0 0.0
        %1882 = vmatpush1.msra.mxu0 0.0
        %1883 = vmatprep.subr.mxu0 0.0
        %1884 = vmatpush1.msra.mxu0 0.0
        %1885 = vmatprep.subr.mxu0 0.0
        %1886 = vmatpush1.msra.mxu0 0.0
        %1887 = vmatprep.subr.mxu0 0.0
        %1888 = vmatpush1.msra.mxu0 0.0
        %1889 = vmatprep.subr.mxu0 0.0
        %1890 = vmatpush1.msra.mxu0 0.0
        %1891 = vmatprep.subr.mxu0 0.0
        %1892 = vmatpush1.msra.mxu0 0.0
        %1893 = vmatprep.subr.mxu0 0.0
        %1894 = vmatpush1.msra.mxu0 0.0
        %1895 = vmatprep.subr.mxu0 0.0
        %1896 = vmatpush1.msra.mxu0 0.0
        %1897 = vmatprep.subr.mxu0 0.0
        %1898 = vmatpush1.msra.mxu0 0.0
        %1899 = vmatprep.subr.mxu0 0.0
        %1900 = vmatpush1.msra.mxu0 0.0
        %1901 = vmatprep.mubr.f32.mxu0 0.0
        %1902 = vmatmul.mubr.f32.gmra.mrb[0].mxu0 %v1832
        %v1903 = vpop.f32.mrb[0].mxu0
        %v1904 = vadd.f32 0.0, %v1903
        %v1905 = vpop.f32.mrb[0].mxu0
        %1906 = vmatprep.mubr.f32.mxu0 0.0
        %1907 = vmatmul.mubr.f32.gmra.mrb[0].mxu0 %v1835
        %v1908 = vpop.f32.mrb[0].mxu0
        %v1909 = vadd.f32 0.0, %v1908
        %v1910 = vpop.f32.mrb[0].mxu0
        %1911 = vdwg.mxu0
        %v1913 = vsel %vm1444, %v1433, 0
        %v1916 = vsel %vm1444, %v1434, 0
        %1918 = vmatprep.subr.mxu0 0.0
        %1919 = vmatpush1.msra.mxu0 %v1748
        %1920 = vmatprep.subr.mxu0 0.0
        %1921 = vmatpush1.msra.mxu0 %v1749
        %1922 = vmatprep.subr.mxu0 0.0
        %1923 = vmatpush1.msra.mxu0 0.0
        %1924 = vmatprep.subr.mxu0 0.0
        %1925 = vmatpush1.msra.mxu0 0.0
        %1926 = vmatprep.subr.mxu0 0.0
        %1927 = vmatpush1.msra.mxu0 0.0
        %1928 = vmatprep.subr.mxu0 0.0
        %1929 = vmatpush1.msra.mxu0 0.0
        %1930 = vmatprep.subr.mxu0 0.0
        %1931 = vmatpush1.msra.mxu0 0.0
        %1932 = vmatprep.subr.mxu0 0.0
        %1933 = vmatpush1.msra.mxu0 0.0
        %1934 = vmatprep.subr.mxu0 0.0
        %1935 = vmatpush1.msra.mxu0 0.0
        %1936 = vmatprep.subr.mxu0 0.0
        %1937 = vmatpush1.msra.mxu0 0.0
        %1938 = vmatprep.subr.mxu0 0.0
        %1939 = vmatpush1.msra.mxu0 0.0
        %1940 = vmatprep.subr.mxu0 0.0
        %1941 = vmatpush1.msra.mxu0 0.0
        %1942 = vmatprep.subr.mxu0 0.0
        %1943 = vmatpush1.msra.mxu0 0.0
        %1944 = vmatprep.subr.mxu0 0.0
        %1945 = vmatpush1.msra.mxu0 0.0
        %1946 = vmatprep.subr.mxu0 0.0
        %1947 = vmatpush1.msra.mxu0 0.0
        %1948 = vmatprep.subr.mxu0 0.0
        %1949 = vmatpush1.msra.mxu0 0.0
        %1950 = vmatprep.subr.mxu0 0.0
        %1951 = vmatpush1.msra.mxu0 0.0
        %1952 = vmatprep.subr.mxu0 0.0
        %1953 = vmatpush1.msra.mxu0 0.0
        %1954 = vmatprep.subr.mxu0 0.0
        %1955 = vmatpush1.msra.mxu0 0.0
        %1956 = vmatprep.subr.mxu0 0.0
        %1957 = vmatpush1.msra.mxu0 0.0
        %1958 = vmatprep.subr.mxu0 0.0
        %1959 = vmatpush1.msra.mxu0 0.0
        %1960 = vmatprep.subr.mxu0 0.0
        %1961 = vmatpush1.msra.mxu0 0.0
        %1962 = vmatprep.subr.mxu0 0.0
        %1963 = vmatpush1.msra.mxu0 0.0
        %1964 = vmatprep.subr.mxu0 0.0
        %1965 = vmatpush1.msra.mxu0 0.0
        %1966 = vmatprep.subr.mxu0 0.0
        %1967 = vmatpush1.msra.mxu0 0.0
        %1968 = vmatprep.subr.mxu0 0.0
        %1969 = vmatpush1.msra.mxu0 0.0
        %1970 = vmatprep.subr.mxu0 0.0
        %1971 = vmatpush1.msra.mxu0 0.0
        %1972 = vmatprep.subr.mxu0 0.0
        %1973 = vmatpush1.msra.mxu0 0.0
        %1974 = vmatprep.subr.mxu0 0.0
        %1975 = vmatpush1.msra.mxu0 0.0
        %1976 = vmatprep.subr.mxu0 0.0
        %1977 = vmatpush1.msra.mxu0 0.0
        %1978 = vmatprep.subr.mxu0 0.0
        %1979 = vmatpush1.msra.mxu0 0.0
        %1980 = vmatprep.subr.mxu0 0.0
        %1981 = vmatpush1.msra.mxu0 0.0
        %1982 = vmatprep.mubr.f32.mxu0 0.0
        %1983 = vmatmul.mubr.f32.gmra.mrb[0].mxu0 %v1913
        %v1984 = vpop.f32.mrb[0].mxu0
        %v1985 = vadd.f32 0.0, %v1984
        %v1986 = vpop.f32.mrb[0].mxu0
        %1987 = vmatprep.mubr.f32.mxu0 0.0
        %1988 = vmatmul.mubr.f32.gmra.mrb[0].mxu0 %v1916
        %v1989 = vpop.f32.mrb[0].mxu0
        %v1990 = vadd.f32 0.0, %v1989
        %v1991 = vpop.f32.mrb[0].mxu0
        %1992 = vdwg.mxu0
        %v1993 = vsub.f32 %v1823, %v1904
        %v1994 = vsub.f32 %v1828, %v1909
        %v1995 = vsub.f32 %v1985, %v1823
        %v1996 = vsub.f32 %v1990, %v1828
        %v1997 = vsub.f32 %v1995, %v1904
        %v1998 = vsub.f32 %v1996, %v1909
        %v1999 = vmul.f32 %v1993, %v1993
        %v2000 = vmul.f32 %v1994, %v1994
        %v2001 = vmul.f32 %v1997, %v1997
        %v2002 = vmul.f32 %v1998, %v1998
        %v2003 = vadd.f32 %v1999, %v2001
        %v2004 = vadd.f32 %v2000, %v2002
        %v2005 = vrsqrt.pop %v2003
        %v2006 = vmul.f32 %v2003, %v2005
        %vm2007 = vcmp.eq.f32.partialorder %v2003, inf
        %v2008 = vsel %vm2007, %v2003, %v2006
        %vm2009 = vcmp.eq.f32.partialorder %v2003, 0.0
        %v2010 = vand.u32 %v2003, 2147483648
        %v2011 = vsel %vm2009, %v2010, %v2008
        %v2012 = vrsqrt.pop %v2004
        %v2013 = vmul.f32 %v2004, %v2012
        %vm2014 = vcmp.eq.f32.partialorder %v2004, inf
        %v2015 = vsel %vm2014, %v2004, %v2013
        %vm2016 = vcmp.eq.f32.partialorder %v2004, 0.0
        %v2017 = vand.u32 %v2004, 2147483648
        %v2018 = vsel %vm2016, %v2017, %v2015
        %2019 = vst.msk [vmem:[%s557] sm:$0xff] %vm1444, %v2011
        %2020 = vst.msk [vmem:[%s557 + $0x8] sm:$0xff] %vm1444, %v2018
        %v2021 = vmul.f32 %v1993, %v1435
        %v2022 = vmul.f32 %v1994, %v1436
        %v2023 = vmul.f32 %v1997, %v1438
        %v2024 = vmul.f32 %v1998, %v1439
        %v2025 = vsub.f32 %v2021, %v2023
        %v2026 = vsub.f32 %v2022, %v2024
        %v2027 = vmul.f32 %v1993, %v1438
        %v2028 = vmul.f32 %v1994, %v1439
        %v2029 = vmul.f32 %v1997, %v1435
        %v2030 = vmul.f32 %v1998, %v1436
        %v2031 = vadd.f32 %v2027, %v2029
        %v2032 = vadd.f32 %v2028, %v2030
        %v2033 = vand.u32 2147483647, %v2025
        %v2034 = vand.u32 2147483647, %v2031
        %v2035 = vmin.f32 %v2033, %v2034
        %v2036 = vmax.f32 %v2033, %v2034
        %v2037 = vrcp.pop %v2036
        %v2038 = vmul.f32 %v2035, %v2037
        %v2039 = vmul.f32 %v2038, %v2038
        %v2040 = vmul.f32 0.002785687, %v2039
        %v2041 = vadd.f32 %v2040, -0.015866
        %v2042 = vmul.f32 %v2041, %v2039
        %v2043 = vadd.f32 %v2042, 0.04247222
        %v2044 = vmul.f32 %v2043, %v2039
        %v2045 = vadd.f32 %v2044, -0.074975304
        %v2046 = vmul.f32 %v2045, %v2039
        %v2047 = vadd.f32 %v2046, 0.1064488
        %v2048 = vmul.f32 %v2047, %v2039
        %v2049 = vadd.f32 %v2048, -0.14207031
        %v2050 = vmul.f32 %v2049, %v2039
        %v2051 = vadd.f32 %v2050, 0.19993454
        %v2052 = vmul.f32 %v2051, %v2039
        %v2053 = vadd.f32 %v2052, -0.33333147
        %v2054 = vmul.f32 %v2053, %v2039
        %v2055 = vmul.f32 %v2054, %v2038
        %v2056 = vadd.f32 %v2055, %v2038
        %vm2057 = vcmp.gt.f32.partialorder %v2034, %v2033
        %v2058 = vsub.f32 1.5707964, %v2056
        %v2059 = vsel %vm2057, %v2058, %v2056
        %vm2060 = vcmp.lt.f32.partialorder %v2025, 0.0
        %v2061 = vsub.f32 3.1415927, %v2059
        %v2062 = vsel %vm2060, %v2061, %v2059
        %vm2063 = vcmp.lt.s32.totalorder %v2025, 0
        %v2064 = vsel %vm2063, 3.1415927, 0.0
        %vm2065 = vcmp.eq.f32.partialorder %v2031, 0.0
        %v2066 = vsel %vm2065, %v2064, %v2062
        %vm2067 = vcmp.ne.f32.partialorder %v2025, %v2025
        %vm2068 = vcmp.ne.f32.partialorder %v2031, %v2031
        %vm2069 = vmor %vm2067, %vm2068
        %v2070 = vsel %vm2069, nan, %v2066
        %vm2071 = vcmp.lt.f32.partialorder %v2025, 0.0
        %v2072 = vsel %vm2071, 2.3561945, 0.7853982
        %vm2073 = vcmp.eq.s32.totalorder %v2033, inf
        %vm2074 = vcmp.eq.s32.totalorder %v2034, inf
        %vm2075 = vmand %vm2073, %vm2074
        %v2076 = vsel %vm2075, %v2072, %v2070
        %v2077 = vand.u32 2147483647, %v2076
        %v2078 = vand.u32 %v2031, 2147483648
        %v2079 = vor.u32 %v2077, %v2078
        %v2080 = vand.u32 2147483647, %v2026
        %v2081 = vand.u32 2147483647, %v2032
        %v2082 = vmin.f32 %v2080, %v2081
        %v2083 = vmax.f32 %v2080, %v2081
        %v2084 = vrcp.pop %v2083
        %v2085 = vmul.f32 %v2082, %v2084
        %v2086 = vmul.f32 %v2085, %v2085
        %v2087 = vmul.f32 0.002785687, %v2086
        %v2088 = vadd.f32 %v2087, -0.015866
        %v2089 = vmul.f32 %v2088, %v2086
        %v2090 = vadd.f32 %v2089, 0.04247222
        %v2091 = vmul.f32 %v2090, %v2086
        %v2092 = vadd.f32 %v2091, -0.074975304
        %v2093 = vmul.f32 %v2092, %v2086
        %v2094 = vadd.f32 %v2093, 0.1064488
        %v2095 = vmul.f32 %v2094, %v2086
        %v2096 = vadd.f32 %v2095, -0.14207031
        %v2097 = vmul.f32 %v2096, %v2086
        %v2098 = vadd.f32 %v2097, 0.19993454
        %v2099 = vmul.f32 %v2098, %v2086
        %v2100 = vadd.f32 %v2099, -0.33333147
        %v2101 = vmul.f32 %v2100, %v2086
        %v2102 = vmul.f32 %v2101, %v2085
        %v2103 = vadd.f32 %v2102, %v2085
        %vm2104 = vcmp.gt.f32.partialorder %v2081, %v2080
        %v2105 = vsub.f32 1.5707964, %v2103
        %v2106 = vsel %vm2104, %v2105, %v2103
        %vm2107 = vcmp.lt.f32.partialorder %v2026, 0.0
        %v2108 = vsub.f32 3.1415927, %v2106
        %v2109 = vsel %vm2107, %v2108, %v2106
        %vm2110 = vcmp.lt.s32.totalorder %v2026, 0
        %v2111 = vsel %vm2110, 3.1415927, 0.0
        %vm2112 = vcmp.eq.f32.partialorder %v2032, 0.0
        %v2113 = vsel %vm2112, %v2111, %v2109
        %vm2114 = vcmp.ne.f32.partialorder %v2026, %v2026
        %vm2115 = vcmp.ne.f32.partialorder %v2032, %v2032
        %vm2116 = vmor %vm2114, %vm2115
        %v2117 = vsel %vm2116, nan, %v2113
        %vm2118 = vcmp.lt.f32.partialorder %v2026, 0.0
        %v2119 = vsel %vm2118, 2.3561945, 0.7853982
        %vm2120 = vcmp.eq.s32.totalorder %v2080, inf
        %vm2121 = vcmp.eq.s32.totalorder %v2081, inf
        %vm2122 = vmand %vm2120, %vm2121
        %v2123 = vsel %vm2122, %v2119, %v2117
        %v2124 = vand.u32 2147483647, %v2123
        %v2125 = vand.u32 %v2032, 2147483648
        %v2126 = vor.u32 %v2124, %v2125
        %2127 = vst.msk [vmem:[%s564] sm:$0xff] %vm1444, %v2079
        %2128 = vst.msk [vmem:[%s564 + $0x8] sm:$0xff] %vm1444, %v2126
        %v2129 = vadd.f32 %v1738, %v1746
        %v2130 = vadd.f32 %v1739, %v1747
        %2131 = vmatprep.subr.mxu0 0.0
        %2132 = vmatpush1.msra.mxu0 %v1738
        %2133 = vmatprep.subr.mxu0 0.0
        %2134 = vmatpush1.msra.mxu0 %v1739
        %2135 = vmatprep.subr.mxu0 0.0
        %2136 = vmatpush1.msra.mxu0 0.0
        %2137 = vmatprep.subr.mxu0 0.0
        %2138 = vmatpush1.msra.mxu0 0.0
        %2139 = vmatprep.subr.mxu0 0.0
        %2140 = vmatpush1.msra.mxu0 0.0
        %2141 = vmatprep.subr.mxu0 0.0
        %2142 = vmatpush1.msra.mxu0 0.0
        %2143 = vmatprep.subr.mxu0 0.0
        %2144 = vmatpush1.msra.mxu0 0.0
        %2145 = vmatprep.subr.mxu0 0.0
        %2146 = vmatpush1.msra.mxu0 0.0
        %2147 = vmatprep.subr.mxu0 0.0
        %2148 = vmatpush1.msra.mxu0 0.0
        %2149 = vmatprep.subr.mxu0 0.0
        %2150 = vmatpush1.msra.mxu0 0.0
        %2151 = vmatprep.subr.mxu0 0.0
        %2152 = vmatpush1.msra.mxu0 0.0
        %2153 = vmatprep.subr.mxu0 0.0
        %2154 = vmatpush1.msra.mxu0 0.0
        %2155 = vmatprep.subr.mxu0 0.0
        %2156 = vmatpush1.msra.mxu0 0.0
        %2157 = vmatprep.subr.mxu0 0.0
        %2158 = vmatpush1.msra.mxu0 0.0
        %2159 = vmatprep.subr.mxu0 0.0
        %2160 = vmatpush1.msra.mxu0 0.0
        %2161 = vmatprep.subr.mxu0 0.0
        %2162 = vmatpush1.msra.mxu0 0.0
        %2163 = vmatprep.subr.mxu0 0.0
        %2164 = vmatpush1.msra.mxu0 0.0
        %2165 = vmatprep.subr.mxu0 0.0
        %2166 = vmatpush1.msra.mxu0 0.0
        %2167 = vmatprep.subr.mxu0 0.0
        %2168 = vmatpush1.msra.mxu0 0.0
        %2169 = vmatprep.subr.mxu0 0.0
        %2170 = vmatpush1.msra.mxu0 0.0
        %2171 = vmatprep.subr.mxu0 0.0
        %2172 = vmatpush1.msra.mxu0 0.0
        %2173 = vmatprep.subr.mxu0 0.0
        %2174 = vmatpush1.msra.mxu0 0.0
        %2175 = vmatprep.subr.mxu0 0.0
        %2176 = vmatpush1.msra.mxu0 0.0
        %2177 = vmatprep.subr.mxu0 0.0
        %2178 = vmatpush1.msra.mxu0 0.0
        %2179 = vmatprep.subr.mxu0 0.0
        %2180 = vmatpush1.msra.mxu0 0.0
        %2181 = vmatprep.subr.mxu0 0.0
        %2182 = vmatpush1.msra.mxu0 0.0
        %2183 = vmatprep.subr.mxu0 0.0
        %2184 = vmatpush1.msra.mxu0 0.0
        %2185 = vmatprep.subr.mxu0 0.0
        %2186 = vmatpush1.msra.mxu0 0.0
        %2187 = vmatprep.subr.mxu0 0.0
        %2188 = vmatpush1.msra.mxu0 0.0
        %2189 = vmatprep.subr.mxu0 0.0
        %2190 = vmatpush1.msra.mxu0 0.0
        %2191 = vmatprep.subr.mxu0 0.0
        %2192 = vmatpush1.msra.mxu0 0.0
        %2193 = vmatprep.subr.mxu0 0.0
        %2194 = vmatpush1.msra.mxu0 0.0
        %2195 = vmatprep.mubr.f32.mxu0 0.0
        %2196 = vmatmul.mubr.f32.gmra.mrb[0].mxu0 %v1751
        %v2197 = vpop.f32.mrb[0].mxu0
        %v2198 = vadd.f32 0.0, %v2197
        %v2199 = vpop.f32.mrb[0].mxu0
        %2200 = vmatprep.mubr.f32.mxu0 0.0
        %2201 = vmatmul.mubr.f32.gmra.mrb[0].mxu0 %v1754
        %v2202 = vpop.f32.mrb[0].mxu0
        %v2203 = vadd.f32 0.0, %v2202
        %v2204 = vpop.f32.mrb[0].mxu0
        %2205 = vdwg.mxu0
        %2206 = vmatprep.subr.mxu0 0.0
        %2207 = vmatpush1.msra.mxu0 %v1746
        %2208 = vmatprep.subr.mxu0 0.0
        %2209 = vmatpush1.msra.mxu0 %v1747
        %2210 = vmatprep.subr.mxu0 0.0
        %2211 = vmatpush1.msra.mxu0 0.0
        %2212 = vmatprep.subr.mxu0 0.0
        %2213 = vmatpush1.msra.mxu0 0.0
        %2214 = vmatprep.subr.mxu0 0.0
        %2215 = vmatpush1.msra.mxu0 0.0
        %2216 = vmatprep.subr.mxu0 0.0
        %2217 = vmatpush1.msra.mxu0 0.0
        %2218 = vmatprep.subr.mxu0 0.0
        %2219 = vmatpush1.msra.mxu0 0.0
        %2220 = vmatprep.subr.mxu0 0.0
        %2221 = vmatpush1.msra.mxu0 0.0
        %2222 = vmatprep.subr.mxu0 0.0
        %2223 = vmatpush1.msra.mxu0 0.0
        %2224 = vmatprep.subr.mxu0 0.0
        %2225 = vmatpush1.msra.mxu0 0.0
        %2226 = vmatprep.subr.mxu0 0.0
        %2227 = vmatpush1.msra.mxu0 0.0
        %2228 = vmatprep.subr.mxu0 0.0
        %2229 = vmatpush1.msra.mxu0 0.0
        %2230 = vmatprep.subr.mxu0 0.0
        %2231 = vmatpush1.msra.mxu0 0.0
        %2232 = vmatprep.subr.mxu0 0.0
        %2233 = vmatpush1.msra.mxu0 0.0
        %2234 = vmatprep.subr.mxu0 0.0
        %2235 = vmatpush1.msra.mxu0 0.0
        %2236 = vmatprep.subr.mxu0 0.0
        %2237 = vmatpush1.msra.mxu0 0.0
        %2238 = vmatprep.subr.mxu0 0.0
        %2239 = vmatpush1.msra.mxu0 0.0
        %2240 = vmatprep.subr.mxu0 0.0
        %2241 = vmatpush1.msra.mxu0 0.0
        %2242 = vmatprep.subr.mxu0 0.0
        %2243 = vmatpush1.msra.mxu0 0.0
        %2244 = vmatprep.subr.mxu0 0.0
        %2245 = vmatpush1.msra.mxu0 0.0
        %2246 = vmatprep.subr.mxu0 0.0
        %2247 = vmatpush1.msra.mxu0 0.0
        %2248 = vmatprep.subr.mxu0 0.0
        %2249 = vmatpush1.msra.mxu0 0.0
        %2250 = vmatprep.subr.mxu0 0.0
        %2251 = vmatpush1.msra.mxu0 0.0
        %2252 = vmatprep.subr.mxu0 0.0
        %2253 = vmatpush1.msra.mxu0 0.0
        %2254 = vmatprep.subr.mxu0 0.0
        %2255 = vmatpush1.msra.mxu0 0.0
        %2256 = vmatprep.subr.mxu0 0.0
        %2257 = vmatpush1.msra.mxu0 0.0
        %2258 = vmatprep.subr.mxu0 0.0
        %2259 = vmatpush1.msra.mxu0 0.0
        %2260 = vmatprep.subr.mxu0 0.0
        %2261 = vmatpush1.msra.mxu0 0.0
        %2262 = vmatprep.subr.mxu0 0.0
        %2263 = vmatpush1.msra.mxu0 0.0
        %2264 = vmatprep.subr.mxu0 0.0
        %2265 = vmatpush1.msra.mxu0 0.0
        %2266 = vmatprep.subr.mxu0 0.0
        %2267 = vmatpush1.msra.mxu0 0.0
        %2268 = vmatprep.subr.mxu0 0.0
        %2269 = vmatpush1.msra.mxu0 0.0
        %2270 = vmatprep.mubr.f32.mxu0 0.0
        %2271 = vmatmul.mubr.f32.gmra.mrb[0].mxu0 %v1832
        %v2272 = vpop.f32.mrb[0].mxu0
        %v2273 = vadd.f32 0.0, %v2272
        %v2274 = vpop.f32.mrb[0].mxu0
        %2275 = vmatprep.mubr.f32.mxu0 0.0
        %2276 = vmatmul.mubr.f32.gmra.mrb[0].mxu0 %v1835
        %v2277 = vpop.f32.mrb[0].mxu0
        %v2278 = vadd.f32 0.0, %v2277
        %v2279 = vpop.f32.mrb[0].mxu0
        %2280 = vdwg.mxu0
        %2281 = vmatprep.subr.mxu0 0.0
        %2282 = vmatpush1.msra.mxu0 %v2129
        %2283 = vmatprep.subr.mxu0 0.0
        %2284 = vmatpush1.msra.mxu0 %v2130
        %2285 = vmatprep.subr.mxu0 0.0
        %2286 = vmatpush1.msra.mxu0 0.0
        %2287 = vmatprep.subr.mxu0 0.0
        %2288 = vmatpush1.msra.mxu0 0.0
        %2289 = vmatprep.subr.mxu0 0.0
        %2290 = vmatpush1.msra.mxu0 0.0
        %2291 = vmatprep.subr.mxu0 0.0
        %2292 = vmatpush1.msra.mxu0 0.0
        %2293 = vmatprep.subr.mxu0 0.0
        %2294 = vmatpush1.msra.mxu0 0.0
        %2295 = vmatprep.subr.mxu0 0.0
        %2296 = vmatpush1.msra.mxu0 0.0
        %2297 = vmatprep.subr.mxu0 0.0
        %2298 = vmatpush1.msra.mxu0 0.0
        %2299 = vmatprep.subr.mxu0 0.0
        %2300 = vmatpush1.msra.mxu0 0.0
        %2301 = vmatprep.subr.mxu0 0.0
        %2302 = vmatpush1.msra.mxu0 0.0
        %2303 = vmatprep.subr.mxu0 0.0
        %2304 = vmatpush1.msra.mxu0 0.0
        %2305 = vmatprep.subr.mxu0 0.0
        %2306 = vmatpush1.msra.mxu0 0.0
        %2307 = vmatprep.subr.mxu0 0.0
        %2308 = vmatpush1.msra.mxu0 0.0
        %2309 = vmatprep.subr.mxu0 0.0
        %2310 = vmatpush1.msra.mxu0 0.0
        %2311 = vmatprep.subr.mxu0 0.0
        %2312 = vmatpush1.msra.mxu0 0.0
        %2313 = vmatprep.subr.mxu0 0.0
        %2314 = vmatpush1.msra.mxu0 0.0
        %2315 = vmatprep.subr.mxu0 0.0
        %2316 = vmatpush1.msra.mxu0 0.0
        %2317 = vmatprep.subr.mxu0 0.0
        %2318 = vmatpush1.msra.mxu0 0.0
        %2319 = vmatprep.subr.mxu0 0.0
        %2320 = vmatpush1.msra.mxu0 0.0
        %2321 = vmatprep.subr.mxu0 0.0
        %2322 = vmatpush1.msra.mxu0 0.0
        %2323 = vmatprep.subr.mxu0 0.0
        %2324 = vmatpush1.msra.mxu0 0.0
        %2325 = vmatprep.subr.mxu0 0.0
        %2326 = vmatpush1.msra.mxu0 0.0
        %2327 = vmatprep.subr.mxu0 0.0
        %2328 = vmatpush1.msra.mxu0 0.0
        %2329 = vmatprep.subr.mxu0 0.0
        %2330 = vmatpush1.msra.mxu0 0.0
        %2331 = vmatprep.subr.mxu0 0.0
        %2332 = vmatpush1.msra.mxu0 0.0
        %2333 = vmatprep.subr.mxu0 0.0
        %2334 = vmatpush1.msra.mxu0 0.0
        %2335 = vmatprep.subr.mxu0 0.0
        %2336 = vmatpush1.msra.mxu0 0.0
        %2337 = vmatprep.subr.mxu0 0.0
        %2338 = vmatpush1.msra.mxu0 0.0
        %2339 = vmatprep.subr.mxu0 0.0
        %2340 = vmatpush1.msra.mxu0 0.0
        %2341 = vmatprep.subr.mxu0 0.0
        %2342 = vmatpush1.msra.mxu0 0.0
        %2343 = vmatprep.subr.mxu0 0.0
        %2344 = vmatpush1.msra.mxu0 0.0
        %2345 = vmatprep.mubr.f32.mxu0 0.0
        %2346 = vmatmul.mubr.f32.gmra.mrb[0].mxu0 %v1913
        %v2347 = vpop.f32.mrb[0].mxu0
        %v2348 = vadd.f32 0.0, %v2347
        %v2349 = vpop.f32.mrb[0].mxu0
        %2350 = vmatprep.mubr.f32.mxu0 0.0
        %2351 = vmatmul.mubr.f32.gmra.mrb[0].mxu0 %v1916
        %v2352 = vpop.f32.mrb[0].mxu0
        %v2353 = vadd.f32 0.0, %v2352
        %v2354 = vpop.f32.mrb[0].mxu0
        %2355 = vdwg.mxu0
        %v2356 = vsub.f32 %v2198, %v2273
        %v2357 = vsub.f32 %v2203, %v2278
        %v2358 = vsub.f32 %v2348, %v2198
        %v2359 = vsub.f32 %v2353, %v2203
        %v2360 = vsub.f32 %v2358, %v2273
        %v2361 = vsub.f32 %v2359, %v2278
        %v2362 = vmul.f32 %v2356, %v2356
        %v2363 = vmul.f32 %v2357, %v2357
        %v2364 = vmul.f32 %v2360, %v2360
        %v2365 = vmul.f32 %v2361, %v2361
        %v2366 = vadd.f32 %v2362, %v2364
        %v2367 = vadd.f32 %v2363, %v2365
        %v2368 = vrsqrt.pop %v2366
        %v2369 = vmul.f32 %v2366, %v2368
        %vm2370 = vcmp.eq.f32.partialorder %v2366, inf
        %v2371 = vsel %vm2370, %v2366, %v2369
        %vm2372 = vcmp.eq.f32.partialorder %v2366, 0.0
        %v2373 = vand.u32 %v2366, 2147483648
        %v2374 = vsel %vm2372, %v2373, %v2371
        %v2375 = vrsqrt.pop %v2367
        %v2376 = vmul.f32 %v2367, %v2375
        %vm2377 = vcmp.eq.f32.partialorder %v2367, inf
        %v2378 = vsel %vm2377, %v2367, %v2376
        %vm2379 = vcmp.eq.f32.partialorder %v2367, 0.0
        %v2380 = vand.u32 %v2367, 2147483648
        %v2381 = vsel %vm2379, %v2380, %v2378
        %s2382 = scalar_lea.vmem %s557, 16 [#allocation14]
        %2383 = vst.msk [vmem:[%s2382] sm:$0xff] %vm1444, %v2374
        %2384 = vst.msk [vmem:[%s2382 + $0x8] sm:$0xff] %vm1444, %v2381
        %v2385 = vmul.f32 %v2356, %v1435
        %v2386 = vmul.f32 %v2357, %v1436
        %v2387 = vmul.f32 %v2360, %v1438
        %v2388 = vmul.f32 %v2361, %v1439
        %v2389 = vsub.f32 %v2385, %v2387
        %v2390 = vsub.f32 %v2386, %v2388
        %v2391 = vmul.f32 %v2356, %v1438
        %v2392 = vmul.f32 %v2357, %v1439
        %v2393 = vmul.f32 %v2360, %v1435
        %v2394 = vmul.f32 %v2361, %v1436
        %v2395 = vadd.f32 %v2391, %v2393
        %v2396 = vadd.f32 %v2392, %v2394
        %v2397 = vand.u32 2147483647, %v2389
        %v2398 = vand.u32 2147483647, %v2395
        %v2399 = vmin.f32 %v2397, %v2398
        %v2400 = vmax.f32 %v2397, %v2398
        %v2401 = vrcp.pop %v2400
        %v2402 = vmul.f32 %v2399, %v2401
        %v2403 = vmul.f32 %v2402, %v2402
        %v2404 = vmul.f32 0.002785687, %v2403
        %v2405 = vadd.f32 %v2404, -0.015866
        %v2406 = vmul.f32 %v2405, %v2403
        %v2407 = vadd.f32 %v2406, 0.04247222
        %v2408 = vmul.f32 %v2407, %v2403
        %v2409 = vadd.f32 %v2408, -0.074975304
        %v2410 = vmul.f32 %v2409, %v2403
        %v2411 = vadd.f32 %v2410, 0.1064488
        %v2412 = vmul.f32 %v2411, %v2403
        %v2413 = vadd.f32 %v2412, -0.14207031
        %v2414 = vmul.f32 %v2413, %v2403
        %v2415 = vadd.f32 %v2414, 0.19993454
        %v2416 = vmul.f32 %v2415, %v2403
        %v2417 = vadd.f32 %v2416, -0.33333147
        %v2418 = vmul.f32 %v2417, %v2403
        %v2419 = vmul.f32 %v2418, %v2402
        %v2420 = vadd.f32 %v2419, %v2402
        %vm2421 = vcmp.gt.f32.partialorder %v2398, %v2397
        %v2422 = vsub.f32 1.5707964, %v2420
        %v2423 = vsel %vm2421, %v2422, %v2420
        %vm2424 = vcmp.lt.f32.partialorder %v2389, 0.0
        %v2425 = vsub.f32 3.1415927, %v2423
        %v2426 = vsel %vm2424, %v2425, %v2423
        %vm2427 = vcmp.lt.s32.totalorder %v2389, 0
        %v2428 = vsel %vm2427, 3.1415927, 0.0
        %vm2429 = vcmp.eq.f32.partialorder %v2395, 0.0
        %v2430 = vsel %vm2429, %v2428, %v2426
        %vm2431 = vcmp.ne.f32.partialorder %v2389, %v2389
        %vm2432 = vcmp.ne.f32.partialorder %v2395, %v2395
        %vm2433 = vmor %vm2431, %vm2432
        %v2434 = vsel %vm2433, nan, %v2430
        %vm2435 = vcmp.lt.f32.partialorder %v2389, 0.0
        %v2436 = vsel %vm2435, 2.3561945, 0.7853982
        %vm2437 = vcmp.eq.s32.totalorder %v2397, inf
        %vm2438 = vcmp.eq.s32.totalorder %v2398, inf
        %vm2439 = vmand %vm2437, %vm2438
        %v2440 = vsel %vm2439, %v2436, %v2434
        %v2441 = vand.u32 2147483647, %v2440
        %v2442 = vand.u32 %v2395, 2147483648
        %v2443 = vor.u32 %v2441, %v2442
        %v2444 = vand.u32 2147483647, %v2390
        %v2445 = vand.u32 2147483647, %v2396
        %v2446 = vmin.f32 %v2444, %v2445
        %v2447 = vmax.f32 %v2444, %v2445
        %v2448 = vrcp.pop %v2447
        %v2449 = vmul.f32 %v2446, %v2448
        %v2450 = vmul.f32 %v2449, %v2449
        %v2451 = vmul.f32 0.002785687, %v2450
        %v2452 = vadd.f32 %v2451, -0.015866
        %v2453 = vmul.f32 %v2452, %v2450
        %v2454 = vadd.f32 %v2453, 0.04247222
        %v2455 = vmul.f32 %v2454, %v2450
        %v2456 = vadd.f32 %v2455, -0.074975304
        %v2457 = vmul.f32 %v2456, %v2450
        %v2458 = vadd.f32 %v2457, 0.1064488
        %v2459 = vmul.f32 %v2458, %v2450
        %v2460 = vadd.f32 %v2459, -0.14207031
        %v2461 = vmul.f32 %v2460, %v2450
        %v2462 = vadd.f32 %v2461, 0.19993454
        %v2463 = vmul.f32 %v2462, %v2450
        %v2464 = vadd.f32 %v2463, -0.33333147
        %v2465 = vmul.f32 %v2464, %v2450
        %v2466 = vmul.f32 %v2465, %v2449
        %v2467 = vadd.f32 %v2466, %v2449
        %vm2468 = vcmp.gt.f32.partialorder %v2445, %v2444
        %v2469 = vsub.f32 1.5707964, %v2467
        %v2470 = vsel %vm2468, %v2469, %v2467
        %vm2471 = vcmp.lt.f32.partialorder %v2390, 0.0
        %v2472 = vsub.f32 3.1415927, %v2470
        %v2473 = vsel %vm2471, %v2472, %v2470
        %vm2474 = vcmp.lt.s32.totalorder %v2390, 0
        %v2475 = vsel %vm2474, 3.1415927, 0.0
        %vm2476 = vcmp.eq.f32.partialorder %v2396, 0.0
        %v2477 = vsel %vm2476, %v2475, %v2473
        %vm2478 = vcmp.ne.f32.partialorder %v2390, %v2390
        %vm2479 = vcmp.ne.f32.partialorder %v2396, %v2396
        %vm2480 = vmor %vm2478, %vm2479
        %v2481 = vsel %vm2480, nan, %v2477
        %vm2482 = vcmp.lt.f32.partialorder %v2390, 0.0
        %v2483 = vsel %vm2482, 2.3561945, 0.7853982
        %vm2484 = vcmp.eq.s32.totalorder %v2444, inf
        %vm2485 = vcmp.eq.s32.totalorder %v2445, inf
        %vm2486 = vmand %vm2484, %vm2485
        %v2487 = vsel %vm2486, %v2483, %v2481
        %v2488 = vand.u32 2147483647, %v2487
        %v2489 = vand.u32 %v2396, 2147483648
        %v2490 = vor.u32 %v2488, %v2489
        %s2491 = scalar_lea.vmem %s564, 16 [#allocation15]
        %2492 = vst.msk [vmem:[%s2491] sm:$0xff] %vm1444, %v2443
        %2493 = vst.msk [vmem:[%s2491 + $0x8] sm:$0xff] %vm1444, %v2490
        %s2494 = sand.u32 %s241, 1
        %s2495 = scalar_lea.sflag [#allocation4], %s2494
        %s2496 = sand.u32 %s241, 1
        %s2497 = smul.addr %s2496, 32
        %s2498 = scalar_lea.vmem [#allocation14], %s2497
        %s2499 = sand.u32 %s269, 1
        %s2500 = scalar_lea.sflag [#allocation16], %s2499
        %s2501 = sand.u32 %s269, 1
        %s2502 = smul.addr %s2501, 32
        %s2503 = scalar_lea.vmem [#allocation15], %s2502
        // Predicated region
        $region77: #{tpu_custom_call.1} parent=47 // pred_check
          %p2504 = pneg %p251
        $region78: #{tpu_custom_call.1} parent=47 // pred_check_branch
          %2506 = sbr.rel (%p2504) target = $region80
        $region79: #{tpu_custom_call.1} parent=47 // pred_region
          %s2508 = ssub.s32 512, 512
          %2509 = vsyncadd %s2495, %s2508
          %s2510 = smul.addr %s42, 4
          %s2511 = sadd.s32 %s43, %s2510
          %s2512 = smul.addr %s2511, 128
          %s2513 = scalar_lea.hbm %s7, %s2512
          %s2514 = sshll.u32 %s2498, 4
          %s2515 = int_to_ptr.vmem [resolvable:$true] %s2514
          %2520 = dma.vmem_to_hbm [thread:$0]  %s2515, 512, %s2513, %s2495, 128, 128, 8
        $region80: #{tpu_custom_call.1} parent=47 // pred_fallthru
          _
        // Predicated region
        $region81: #{tpu_custom_call.1} parent=47 // pred_check
          %p2521 = pneg %p279
        $region82: #{tpu_custom_call.1} parent=47 // pred_check_branch
          %2523 = sbr.rel (%p2521) target = $region84
        $region83: #{tpu_custom_call.1} parent=47 // pred_region
          %s2525 = ssub.s32 512, 512
          %2526 = vsyncadd %s2500, %s2525
          %s2527 = smul.addr %s42, 4
          %s2528 = sadd.s32 %s43, %s2527
          %s2529 = smul.addr %s2528, 128
          %s2530 = scalar_lea.hbm %s8, %s2529
          %s2531 = sshll.u32 %s2503, 4
          %s2532 = int_to_ptr.vmem [resolvable:$true] %s2531
          %2537 = dma.vmem_to_hbm [thread:$0]  %s2532, 512, %s2530, %s2500, 128, 128, 8
        $region84: #{tpu_custom_call.1} parent=47 // pred_fallthru
          _
      $region48: #{tpu_custom_call.1} parent=5 // pred_fallthru
        _
      %p2538 = scmp.le.s32.totalorder 2, %s33
      // Predicated region
      $region85: #{tpu_custom_call.1} parent=5 // pred_check
        %p2539 = pneg %p2538
      $region86: #{tpu_custom_call.1} parent=5 // pred_check_branch
        %2541 = sbr.rel (%p2539) target = $region88
      $region87: #{tpu_custom_call.1} parent=5 // pred_region
        %s2542 = ssub.s32 %s33, 2
        // Predicated region
        $region89: #{tpu_custom_call.1} parent=87 // pred_check
          %p2543 = pneg %p257
        $region90: #{tpu_custom_call.1} parent=87 // pred_check_branch
          %2545 = sbr.rel (%p2543) target = $region92
        $region91: #{tpu_custom_call.1} parent=87 // pred_region
          %s2546 = sand.u32 %s242, 1
          %s2547 = scalar_lea.sflag [#allocation4], %s2546
          %s2548 = sand.u32 %s242, 1
          %s2549 = smul.addr %s2548, 32
          %s2550 = scalar_lea.vmem [#allocation14], %s2549
          %2551 = dma.done %s2547, 512
        $region92: #{tpu_custom_call.1} parent=87 // pred_fallthru
          _
        // Predicated region
        $region93: #{tpu_custom_call.1} parent=87 // pred_check
          %p2552 = pneg %p285
        $region94: #{tpu_custom_call.1} parent=87 // pred_check_branch
          %2554 = sbr.rel (%p2552) target = $region96
        $region95: #{tpu_custom_call.1} parent=87 // pred_region
          %s2555 = sand.u32 %s270, 1
          %s2556 = scalar_lea.sflag [#allocation16], %s2555
          %s2557 = sand.u32 %s270, 1
          %s2558 = smul.addr %s2557, 32
          %s2559 = scalar_lea.vmem [#allocation15], %s2558
          %2560 = dma.done %s2556, 512
        $region96: #{tpu_custom_call.1} parent=87 // pred_fallthru
          _
      $region88: #{tpu_custom_call.1} parent=5 // pred_fallthru
        _
    $region6: #{tpu_custom_call.1} parent=1 // loop_footer
      %s37 = sadd.s32 1, %s33
    $region7: #{tpu_custom_call.1} parent=1 // loop_footer_branch
      %32 = sbr.rel target = $region3
    $region8: #{tpu_custom_call.1} parent=1 // loop_exit
      _
    %2561 = vsyncpa [#allocation3], 1
    %s2562 = scalar_lea.sflag [#allocation3], 1
    %2563 = vsyncpa %s2562, 1
    %2564 = vsyncpa [#allocation6], 1
    %s2565 = scalar_lea.sflag [#allocation6], 1
    %2566 = vsyncpa %s2565, 1
    %2567 = vsyncpa [#allocation9], 1
    %s2568 = scalar_lea.sflag [#allocation9], 1
    %2569 = vsyncpa %s2568, 1
    %2570 = vsyncpa [#allocation12], 1
    %s2571 = scalar_lea.sflag [#allocation12], 1
    %2572 = vsyncpa %s2571, 1
    %2573 = vsyncpa [#allocation4], 1
    %s2574 = scalar_lea.sflag [#allocation4], 1
    %2575 = vsyncpa %s2574, 1
    %2576 = vsyncpa [#allocation16], 1
    %s2577 = scalar_lea.sflag [#allocation16], 1
    %2578 = vsyncpa %s2577, 1

// kernel: tpu_custom_call.1
$region0: #{tpu_custom_call.1}
  #allocation0 [shape = 'u32[]', space=smem, size = 0x4, offset = 0x4, fixed_abs, tag = 'smem constant byte address 0x4 - core index']
  #allocation1 [shape = 'u32[144,128]{1,0:T(1,128)}', space=vmem, size = 0x12000, scoped, tag = 'internal scratch']
  %s0 = inlined_call_operand.hbm [shape: f32[3,2,16,16], index: 0, kind: input, shape index: {}]
  %s1 = inlined_call_operand.hbm [shape: f32[3,2,16,16], index: 1, kind: input, shape index: {}]
  %s2 = inlined_call_operand.hbm [shape: f32[16,16], index: 2, kind: input, shape index: {}]
  %s3 = inlined_call_operand.hbm [shape: f32[3,16,16], index: 3, kind: input, shape index: {}]
  %s4 = inlined_call_operand.hbm [shape: f32[3,2,16,16], index: 4, kind: input, shape index: {}]
  %s5 = inlined_call_operand.hbm [shape: f32[3,2,16,16], index: 5, kind: input, shape index: {}]
  %s6 = inlined_call_operand.hbm [shape: f32[3,2,16,16], index: 6, kind: input, shape index: {}]
  %s7 = inlined_call_operand.hbm [shape: f32[3,2,16,16], index: 7, kind: output, shape index: {0}]
  %s8 = inlined_call_operand.hbm [shape: f32[3,2,16,16], index: 8, kind: output, shape index: {1}]
  %9 = xla_tuple %s7, %s8
  %s10 = sld [smem:[#allocation0]]
  $region97: #{tpu_custom_call.1} parent=0
    _
  %s12 = ssub.s32 1, %s10
  %s13 = scalar_select 0, %s12, %s10
  $region1: #{tpu_custom_call.1} parent=0
    #allocation2 [shape = 'u8[32768]{0}', space=vmem, size = 0x8000, scoped, tag = 'input window, operand 0']
    #allocation3 [shape = 's32[2]{0}', space=sflag, size = 0x8, scoped, tag = 'scoped memory for tpu_custom_call.1']
    #allocation4 [shape = 's32[2]{0}', space=sflag, size = 0x8, scoped, tag = 'scoped memory for tpu_custom_call.1']
    #allocation5 [shape = 'u8[32768]{0}', space=vmem, size = 0x8000, scoped, tag = 'input window, operand 1']
    #allocation6 [shape = 's32[2]{0}', space=sflag, size = 0x8, scoped, tag = 'scoped memory for tpu_custom_call.1']
    #allocation7 [shape = 'u8[8192]{0}', space=vmem, size = 0x2000, scoped, tag = 'input window, operand 2, single buffered']
    #allocation8 [shape = 'u8[16384]{0}', space=vmem, size = 0x4000, scoped, tag = 'input window, operand 3']
    #allocation9 [shape = 's32[2]{0}', space=sflag, size = 0x8, scoped, tag = 'scoped memory for tpu_custom_call.1']
    #allocation10 [shape = 'u8[32768]{0}', space=vmem, size = 0x8000, scoped, tag = 'input window, operand 4']
    #allocation11 [shape = 'u8[32768]{0}', space=vmem, size = 0x8000, scoped, tag = 'input window, operand 5']
    #allocation12 [shape = 's32[2]{0}', space=sflag, size = 0x8, scoped, tag = 'scoped memory for tpu_custom_call.1']
    #allocation13 [shape = 'u8[32768]{0}', space=vmem, size = 0x8000, scoped, tag = 'input window, operand 6']
    #allocation14 [shape = 'u8[32768]{0}', space=vmem, size = 0x8000, scoped, tag = 'output window, operand 0']
    #allocation15 [shape = 'u8[32768]{0}', space=vmem, size = 0x8000, scoped, tag = 'output window, operand 1']
    #allocation16 [shape = 's32[2]{0}', space=sflag, size = 0x8, scoped, tag = 'scoped memory for tpu_custom_call.1']
    %14 = vsyncpa [#allocation3], 0
    %s15 = scalar_lea.sflag [#allocation3], 1
    %16 = vsyncpa %s15, 0
    %17 = vsyncpa [#allocation6], 0
    %s18 = scalar_lea.sflag [#allocation6], 1
    %19 = vsyncpa %s18, 0
    %20 = vsyncpa [#allocation9], 0
    %s21 = scalar_lea.sflag [#allocation9], 1
    %22 = vsyncpa %s21, 0
    %23 = vsyncpa [#allocation12], 0
    %s24 = scalar_lea.sflag [#allocation12], 1
    %25 = vsyncpa %s24, 0
    %26 = vsyncpa [#allocation4], 0
    %s27 = scalar_lea.sflag [#allocation4], 1
    %28 = vsyncpa %s27, 0
    %29 = vsyncpa [#allocation16], 0
    %s30 = scalar_lea.sflag [#allocation16], 1
    %31 = vsyncpa %s30, 0
    loop: start=0, step=1, limit=5
    $region2: #{tpu_custom_call.1} parent=1 // loop_pre_header
      _
    $region3: #{tpu_custom_call.1} parent=1 // loop_header
      %s33 = sphi 0, %s37
      %p34 = scmp.ge.s32.totalorder %s33, 5
      %s40 = sphi 0, %s52
      %s41 = sphi 0, %s48
      %s42 = sphi 0, %s40
      %s43 = sphi 0, %s41
      %s44 = sphi 0, %s42
      %s45 = sphi 0, %s43
      %s55 = sphi 0, %s57
      %s58 = sphi 0, %s55
      %s59 = sphi 0, %s58
      %s75 = sphi 0, %s59
      %s81 = sphi 0, %s83
      %s84 = sphi 0, %s81
      %s85 = sphi 0, %s84
      %s101 = sphi 0, %s85
      %s105 = sphi 0, %s105
      %s107 = sphi 0, %s105
      %s108 = sphi 0, %s107
      %s122 = sphi 0, %s108
      %s128 = sphi 0, %s130
      %s131 = sphi 0, %s128
      %s132 = sphi 0, %s131
      %s148 = sphi 0, %s132
      %s154 = sphi 0, %s156
      %s157 = sphi 0, %s154
      %s158 = sphi 0, %s157
      %s174 = sphi 0, %s158
      %s182 = sphi 0, %s184
      %s185 = sphi 0, %s182
      %s186 = sphi 0, %s185
      %s202 = sphi 0, %s186
      %s210 = sphi 0, %s212
      %s213 = sphi 0, %s210
      %s214 = sphi 0, %s213
      %s230 = sphi 0, %s214
      %s238 = sphi 0, %s240
      %s241 = sphi 0, %s238
      %s242 = sphi 0, %s241
      %s258 = sphi 0, %s242
      %s266 = sphi 0, %s268
      %s269 = sphi 0, %s266
      %s270 = sphi 0, %s269
      %s286 = sphi 0, %s270
    $region4: #{tpu_custom_call.1} parent=1 // loop_header_branch
      %36 = sbr.rel (%p34) target = $region8
    $region5: #{tpu_custom_call.1} parent=1 // loop_body
      %s38 = ssub.s32 %s33, 1
      %s39 = ssub.s32 %s33, 2
      %s46 = sadd.s32 1, %s41
      %p47 = scmp.ge.s32.totalorder %s46, 1
      %s48 = scalar_select %p47, 0, %s46
      %s49 = sadd.s32 1, %s40
      %s50 = scalar_select %p47, %s49, %s40
      %p51 = scmp.ge.s32.totalorder %s50, 3
      %s52 = scalar_select %p51, 0, %s50
      %s53 = ssub.s32 %s40, %s52
      %p54 = scmp.eq.s32.totalorder %s53, 0
      %s56 = sadd.s32 %s55, 1
      %s57 = scalar_select %p54, %s55, %s56
      %p60 = pneg %p54
      %p61 = scmp.eq.s32.totalorder %s33, 2
      %p62 = por %p60, %p61
      %p63 = scmp.ne.s32.totalorder %s55, %s58
      %p64 = scmp.eq.s32.totalorder %s33, 0
      %p65 = por %p63, %p64
      %p66 = scmp.ne.s32.totalorder %s55, %s58
      %p67 = scmp.eq.s32.totalorder %s38, 2
      %p68 = por %p66, %p67
      %p69 = scmp.ne.s32.totalorder %s58, %s59
      %p70 = scmp.eq.s32.totalorder %s38, 0
      %p71 = por %p69, %p70
      %p72 = scmp.ne.s32.totalorder %s58, %s59
      %p73 = scmp.eq.s32.totalorder %s39, 2
      %p74 = por %p72, %p73
      %p76 = scmp.ne.s32.totalorder %s59, %s75
      %p77 = scmp.eq.s32.totalorder %s39, 0
      %p78 = por %p76, %p77
      %s79 = ssub.s32 %s40, %s52
      %p80 = scmp.eq.s32.totalorder %s79, 0
      %s82 = sadd.s32 %s81, 1
      %s83 = scalar_select %p80, %s81, %s82
      %p86 = pneg %p80
      %p87 = scmp.eq.s32.totalorder %s33, 2
      %p88 = por %p86, %p87
      %p89 = scmp.ne.s32.totalorder %s81, %s84
      %p90 = scmp.eq.s32.totalorder %s33, 0
      %p91 = por %p89, %p90
      %p92 = scmp.ne.s32.totalorder %s81, %s84
      %p93 = scmp.eq.s32.totalorder %s38, 2
      %p94 = por %p92, %p93
      %p95 = scmp.ne.s32.totalorder %s84, %s85
      %p96 = scmp.eq.s32.totalorder %s38, 0
      %p97 = por %p95, %p96
      %p98 = scmp.ne.s32.totalorder %s84, %s85
      %p99 = scmp.eq.s32.totalorder %s39, 2
      %p100 = por %p98, %p99
      %p102 = scmp.ne.s32.totalorder %s85, %s101
      %p103 = scmp.eq.s32.totalorder %s39, 0
      %p104 = por %p102, %p103
      %s106 = sadd.s32 %s105, 1
      %p109 = scmp.eq.s32.totalorder %s33, 2
      %p110 = scmp.ne.s32.totalorder %s105, %s107
      %p111 = scmp.eq.s32.totalorder %s33, 0
      %p112 = por %p110, %p111
      %p113 = scmp.ne.s32.totalorder %s105, %s107
      %p114 = scmp.eq.s32.totalorder %s38, 2
      %p115 = por %p113, %p114
      %p116 = scmp.ne.s32.totalorder %s107, %s108
      %p117 = scmp.eq.s32.totalorder %s38, 0
      %p118 = por %p116, %p117
      %p119 = scmp.ne.s32.totalorder %s107, %s108
      %p120 = scmp.eq.s32.totalorder %s39, 2
      %p121 = por %p119, %p120
      %p123 = scmp.ne.s32.totalorder %s108, %s122
      %p124 = scmp.eq.s32.totalorder %s39, 0
      %p125 = por %p123, %p124
      %s126 = ssub.s32 %s40, %s52
      %p127 = scmp.eq.s32.totalorder %s126, 0
      %s129 = sadd.s32 %s128, 1
      %s130 = scalar_select %p127, %s128, %s129
      %p133 = pneg %p127
      %p134 = scmp.eq.s32.totalorder %s33, 2
      %p135 = por %p133, %p134
      %p136 = scmp.ne.s32.totalorder %s128, %s131
      %p137 = scmp.eq.s32.totalorder %s33, 0
      %p138 = por %p136, %p137
      %p139 = scmp.ne.s32.totalorder %s128, %s131
      %p140 = scmp.eq.s32.totalorder %s38, 2
      %p141 = por %p139, %p140
      %p142 = scmp.ne.s32.totalorder %s131, %s132
      %p143 = scmp.eq.s32.totalorder %s38, 0
      %p144 = por %p142, %p143
      %p145 = scmp.ne.s32.totalorder %s131, %s132
      %p146 = scmp.eq.s32.totalorder %s39, 2
      %p147 = por %p145, %p146
      %p149 = scmp.ne.s32.totalorder %s132, %s148
      %p150 = scmp.eq.s32.totalorder %s39, 0
      %p151 = por %p149, %p150
      %s152 = ssub.s32 %s40, %s52
      %p153 = scmp.eq.s32.totalorder %s152, 0
      %s155 = sadd.s32 %s154, 1
      %s156 = scalar_select %p153, %s154, %s155
      %p159 = pneg %p153
      %p160 = scmp.eq.s32.totalorder %s33, 2
      %p161 = por %p159, %p160
      %p162 = scmp.ne.s32.totalorder %s154, %s157
      %p163 = scmp.eq.s32.totalorder %s33, 0
      %p164 = por %p162, %p163
      %p165 = scmp.ne.s32.totalorder %s154, %s157
      %p166 = scmp.eq.s32.totalorder %s38, 2
      %p167 = por %p165, %p166
      %p168 = scmp.ne.s32.totalorder %s157, %s158
      %p169 = scmp.eq.s32.totalorder %s38, 0
      %p170 = por %p168, %p169
      %p171 = scmp.ne.s32.totalorder %s157, %s158
      %p172 = scmp.eq.s32.totalorder %s39, 2
      %p173 = por %p171, %p172
      %p175 = scmp.ne.s32.totalorder %s158, %s174
      %p176 = scmp.eq.s32.totalorder %s39, 0
      %p177 = por %p175, %p176
      %s178 = ssub.s32 %s40, %s52
      %s179 = ssub.s32 %s41, %s48
      %s180 = sor.u32 %s178, %s179
      %p181 = scmp.eq.s32.totalorder %s180, 0
      %s183 = sadd.s32 %s182, 1
      %s184 = scalar_select %p181, %s182, %s183
      %p187 = pneg %p181
      %p188 = scmp.eq.s32.totalorder %s33, 2
      %p189 = por %p187, %p188
      %p190 = scmp.ne.s32.totalorder %s182, %s185
      %p191 = scmp.eq.s32.totalorder %s33, 0
      %p192 = por %p190, %p191
      %p193 = scmp.ne.s32.totalorder %s182, %s185
      %p194 = scmp.eq.s32.totalorder %s38, 2
      %p195 = por %p193, %p194
      %p196 = scmp.ne.s32.totalorder %s185, %s186
      %p197 = scmp.eq.s32.totalorder %s38, 0
      %p198 = por %p196, %p197
      %p199 = scmp.ne.s32.totalorder %s185, %s186
      %p200 = scmp.eq.s32.totalorder %s39, 2
      %p201 = por %p199, %p200
      %p203 = scmp.ne.s32.totalorder %s186, %s202
      %p204 = scmp.eq.s32.totalorder %s39, 0
      %p205 = por %p203, %p204
      %s206 = ssub.s32 %s40, %s52
      %s207 = ssub.s32 %s41, %s48
      %s208 = sor.u32 %s206, %s207
      %p209 = scmp.eq.s32.totalorder %s208, 0
      %s211 = sadd.s32 %s210, 1
      %s212 = scalar_select %p209, %s210, %s211
      %p215 = pneg %p209
      %p216 = scmp.eq.s32.totalorder %s33, 2
      %p217 = por %p215, %p216
      %p218 = scmp.ne.s32.totalorder %s210, %s213
      %p219 = scmp.eq.s32.totalorder %s33, 0
      %p220 = por %p218, %p219
      %p221 = scmp.ne.s32.totalorder %s210, %s213
      %p222 = scmp.eq.s32.totalorder %s38, 2
      %p223 = por %p221, %p222
      %p224 = scmp.ne.s32.totalorder %s213, %s214
      %p225 = scmp.eq.s32.totalorder %s38, 0
      %p226 = por %p224, %p225
      %p227 = scmp.ne.s32.totalorder %s213, %s214
      %p228 = scmp.eq.s32.totalorder %s39, 2
      %p229 = por %p227, %p228
      %p231 = scmp.ne.s32.totalorder %s214, %s230
      %p232 = scmp.eq.s32.totalorder %s39, 0
      %p233 = por %p231, %p232
      %s234 = ssub.s32 %s40, %s52
      %s235 = ssub.s32 %s41, %s48
      %s236 = sor.u32 %s234, %s235
      %p237 = scmp.eq.s32.totalorder %s236, 0
      %s239 = sadd.s32 %s238, 1
      %s240 = scalar_select %p237, %s238, %s239
      %p243 = pneg %p237
      %p244 = scmp.eq.s32.totalorder %s33, 2
      %p245 = por %p243, %p244
      %p246 = scmp.ne.s32.totalorder %s238, %s241
      %p247 = scmp.eq.s32.totalorder %s33, 0
      %p248 = por %p246, %p247
      %p249 = scmp.ne.s32.totalorder %s238, %s241
      %p250 = scmp.eq.s32.totalorder %s38, 2
      %p251 = por %p249, %p250
      %p252 = scmp.ne.s32.totalorder %s241, %s242
      %p253 = scmp.eq.s32.totalorder %s38, 0
      %p254 = por %p252, %p253
      %p255 = scmp.ne.s32.totalorder %s241, %s242
      %p256 = scmp.eq.s32.totalorder %s39, 2
      %p257 = por %p255, %p256
      %p259 = scmp.ne.s32.totalorder %s242, %s258
      %p260 = scmp.eq.s32.totalorder %s39, 0
      %p261 = por %p259, %p260
      %s262 = ssub.s32 %s40, %s52
      %s263 = ssub.s32 %s41, %s48
      %s264 = sor.u32 %s262, %s263
      %p265 = scmp.eq.s32.totalorder %s264, 0
      %s267 = sadd.s32 %s266, 1
      %s268 = scalar_select %p265, %s266, %s267
      %p271 = pneg %p265
      %p272 = scmp.eq.s32.totalorder %s33, 2
      %p273 = por %p271, %p272
      %p274 = scmp.ne.s32.totalorder %s266, %s269
      %p275 = scmp.eq.s32.totalorder %s33, 0
      %p276 = por %p274, %p275
      %p277 = scmp.ne.s32.totalorder %s266, %s269
      %p278 = scmp.eq.s32.totalorder %s38, 2
      %p279 = por %p277, %p278
      %p280 = scmp.ne.s32.totalorder %s269, %s270
      %p281 = scmp.eq.s32.totalorder %s38, 0
      %p282 = por %p280, %p281
      %p283 = scmp.ne.s32.totalorder %s269, %s270
      %p284 = scmp.eq.s32.totalorder %s39, 2
      %p285 = por %p283, %p284
      %p287 = scmp.ne.s32.totalorder %s270, %s286
      %p288 = scmp.eq.s32.totalorder %s39, 0
      %p289 = por %p287, %p288
      %p290 = scmp.le.s32.totalorder 1, %s33
      %p291 = scmp.lt.s32.totalorder %s33, 4
      %p292 = pnand %p290, %p291
      %p293 = pneg %p292
      // Predicated region
      $region9: #{tpu_custom_call.1} parent=5 // pred_check
        _
      $region10: #{tpu_custom_call.1} parent=5 // pred_check_branch
        %295 = sbr.rel (%p292) target = $region12
      $region11: #{tpu_custom_call.1} parent=5 // pred_region
        %s296 = ssub.s32 %s33, 1
        // Predicated region
        $region13: #{tpu_custom_call.1} parent=11 // pred_check
          %p297 = pneg %p118
        $region14: #{tpu_custom_call.1} parent=11 // pred_check_branch
          %299 = sbr.rel (%p297) target = $region16
        $region15: #{tpu_custom_call.1} parent=11 // pred_region
          %s301 = ssub.s32 256, 256
          %302 = vsyncadd [#allocation6], %s301
          %s303 = sshll.u32 [#allocation7], 4
          %s304 = int_to_ptr.vmem [resolvable:$true] %s303
          %309 = dma.hbm_to_vmem [thread:$0]  %s2, 256, %s304, [#allocation6], 128, 128, 8
        $region16: #{tpu_custom_call.1} parent=11 // pred_fallthru
          _
      $region12: #{tpu_custom_call.1} parent=5 // pred_fallthru
        _
      %p310 = scmp.lt.s32.totalorder %s33, 3
      // Predicated region
      $region17: #{tpu_custom_call.1} parent=5 // pred_check
        %p311 = pneg %p310
      $region18: #{tpu_custom_call.1} parent=5 // pred_check_branch
        %313 = sbr.rel (%p311) target = $region20
      $region19: #{tpu_custom_call.1} parent=5 // pred_region
        // Predicated region
        $region21: #{tpu_custom_call.1} parent=19 // pred_check
          %p314 = pneg %p65
        $region22: #{tpu_custom_call.1} parent=19 // pred_check_branch
          %316 = sbr.rel (%p314) target = $region24
        $region23: #{tpu_custom_call.1} parent=19 // pred_region
          %s317 = sand.u32 %s55, 1
          %s318 = scalar_lea.sflag [#allocation3], %s317
          %s319 = sand.u32 %s55, 1
          %s320 = smul.addr %s319, 32
          %s321 = scalar_lea.vmem [#allocation2], %s320
          %s323 = ssub.s32 512, 512
          %324 = vsyncadd %s318, %s323
          %s325 = smul.addr %s40, 4
          %s326 = smul.addr %s325, 128
          %s327 = scalar_lea.hbm %s0, %s326
          %s328 = sshll.u32 %s321, 4
          %s329 = int_to_ptr.vmem [resolvable:$true] %s328
          %334 = dma.hbm_to_vmem [thread:$0]  %s327, 512, %s329, %s318, 128, 128, 8
        $region24: #{tpu_custom_call.1} parent=19 // pred_fallthru
          _
        // Predicated region
        $region25: #{tpu_custom_call.1} parent=19 // pred_check
          %p335 = pneg %p91
        $region26: #{tpu_custom_call.1} parent=19 // pred_check_branch
          %337 = sbr.rel (%p335) target = $region28
        $region27: #{tpu_custom_call.1} parent=19 // pred_region
          %s338 = sand.u32 %s33, 1
          %s339 = scalar_lea.sflag [#allocation6], %s338
          %s340 = sand.u32 %s81, 1
          %s341 = smul.addr %s340, 32
          %s342 = scalar_lea.vmem [#allocation5], %s341
          %s344 = ssub.s32 512, 512
          %345 = vsyncadd %s339, %s344
          %s346 = smul.addr %s40, 4
          %s347 = smul.addr %s346, 128
          %s348 = scalar_lea.hbm %s1, %s347
          %s349 = sshll.u32 %s342, 4
          %s350 = int_to_ptr.vmem [resolvable:$true] %s349
          %355 = dma.hbm_to_vmem [thread:$0]  %s348, 512, %s350, %s339, 128, 128, 8
        $region28: #{tpu_custom_call.1} parent=19 // pred_fallthru
          _
        // Predicated region
        $region29: #{tpu_custom_call.1} parent=19 // pred_check
          %p356 = pneg %p138
        $region30: #{tpu_custom_call.1} parent=19 // pred_check_branch
          %358 = sbr.rel (%p356) target = $region32
        $region31: #{tpu_custom_call.1} parent=19 // pred_region
          %s359 = sand.u32 %s33, 1
          %s360 = scalar_lea.sflag [#allocation9], %s359
          %s361 = sand.u32 %s128, 1
          %s362 = smul.addr %s361, 16
          %s363 = scalar_lea.vmem [#allocation8], %s362
          %s365 = ssub.s32 256, 256
          %366 = vsyncadd %s360, %s365
          %s367 = smul.addr %s40, 2
          %s368 = smul.addr %s367, 128
          %s369 = scalar_lea.hbm %s3, %s368
          %s370 = sshll.u32 %s363, 4
          %s371 = int_to_ptr.vmem [resolvable:$true] %s370
          %376 = dma.hbm_to_vmem [thread:$0]  %s369, 256, %s371, %s360, 128, 128, 8
        $region32: #{tpu_custom_call.1} parent=19 // pred_fallthru
          _
        // Predicated region
        $region33: #{tpu_custom_call.1} parent=19 // pred_check
          %p377 = pneg %p164
        $region34: #{tpu_custom_call.1} parent=19 // pred_check_branch
          %379 = sbr.rel (%p377) target = $region36
        $region35: #{tpu_custom_call.1} parent=19 // pred_region
          %s380 = sand.u32 %s33, 1
          %s381 = scalar_lea.sflag [#allocation9], %s380
          %s382 = sand.u32 %s154, 1
          %s383 = smul.addr %s382, 32
          %s384 = scalar_lea.vmem [#allocation10], %s383
          %s386 = ssub.s32 512, 512
          %387 = vsyncadd %s381, %s386
          %s388 = smul.addr %s40, 4
          %s389 = smul.addr %s388, 128
          %s390 = scalar_lea.hbm %s4, %s389
          %s391 = sshll.u32 %s384, 4
          %s392 = int_to_ptr.vmem [resolvable:$true] %s391
          %397 = dma.hbm_to_vmem [thread:$0]  %s390, 512, %s392, %s381, 128, 128, 8
        $region36: #{tpu_custom_call.1} parent=19 // pred_fallthru
          _
        // Predicated region
        $region37: #{tpu_custom_call.1} parent=19 // pred_check
          %p398 = pneg %p192
        $region38: #{tpu_custom_call.1} parent=19 // pred_check_branch
          %400 = sbr.rel (%p398) target = $region40
        $region39: #{tpu_custom_call.1} parent=19 // pred_region
          %s401 = sand.u32 %s33, 1
          %s402 = scalar_lea.sflag [#allocation12], %s401
          %s403 = sand.u32 %s182, 1
          %s404 = smul.addr %s403, 32
          %s405 = scalar_lea.vmem [#allocation11], %s404
          %s407 = ssub.s32 512, 512
          %408 = vsyncadd %s402, %s407
          %s409 = smul.addr %s40, 4
          %s410 = sadd.s32 %s41, %s409
          %s411 = smul.addr %s410, 128
          %s412 = scalar_lea.hbm %s5, %s411
          %s413 = sshll.u32 %s405, 4
          %s414 = int_to_ptr.vmem [resolvable:$true] %s413
          %419 = dma.hbm_to_vmem [thread:$0]  %s412, 512, %s414, %s402, 128, 128, 8
        $region40: #{tpu_custom_call.1} parent=19 // pred_fallthru
          _
        // Predicated region
        $region41: #{tpu_custom_call.1} parent=19 // pred_check
          %p420 = pneg %p220
        $region42: #{tpu_custom_call.1} parent=19 // pred_check_branch
          %422 = sbr.rel (%p420) target = $region44
        $region43: #{tpu_custom_call.1} parent=19 // pred_region
          %s423 = sand.u32 %s33, 1
          %s424 = scalar_lea.sflag [#allocation12], %s423
          %s425 = sand.u32 %s210, 1
          %s426 = smul.addr %s425, 32
          %s427 = scalar_lea.vmem [#allocation13], %s426
          %s429 = ssub.s32 512, 512
          %430 = vsyncadd %s424, %s429
          %s431 = smul.addr %s40, 4
          %s432 = sadd.s32 %s41, %s431
          %s433 = smul.addr %s432, 128
          %s434 = scalar_lea.hbm %s6, %s433
          %s435 = sshll.u32 %s427, 4
          %s436 = int_to_ptr.vmem [resolvable:$true] %s435
          %441 = dma.hbm_to_vmem [thread:$0]  %s434, 512, %s436, %s424, 128, 128, 8
        $region44: #{tpu_custom_call.1} parent=19 // pred_fallthru
          _
      $region20: #{tpu_custom_call.1} parent=5 // pred_fallthru
        _
      %p442 = scmp.le.s32.totalorder 1, %s33
      %p443 = scmp.lt.s32.totalorder %s33, 4
      %p444 = pnand %p442, %p443
      %p445 = pneg %p444
      // Predicated region
      $region45: #{tpu_custom_call.1} parent=5 // pred_check
        _
      $region46: #{tpu_custom_call.1} parent=5 // pred_check_branch
        %447 = sbr.rel (%p444) target = $region48
      $region47: #{tpu_custom_call.1} parent=5 // pred_region
        %s448 = ssub.s32 %s33, 1
        %s449 = sand.u32 %s58, 1
        %s450 = scalar_lea.sflag [#allocation3], %s449
        %s451 = sand.u32 %s58, 1
        %s452 = smul.addr %s451, 32
        %s453 = scalar_lea.vmem [#allocation2], %s452
        // Predicated region
        $region49: #{tpu_custom_call.1} parent=47 // pred_check
          %p454 = pneg %p71
        $region50: #{tpu_custom_call.1} parent=47 // pred_check_branch
          %456 = sbr.rel (%p454) target = $region52
        $region51: #{tpu_custom_call.1} parent=47 // pred_region
          %457 = dma.done %s450, 512
        $region52: #{tpu_custom_call.1} parent=47 // pred_fallthru
          _
        %s458 = sand.u32 %s38, 1
        %s459 = scalar_lea.sflag [#allocation6], %s458
        %s460 = sand.u32 %s84, 1
        %s461 = smul.addr %s460, 32
        %s462 = scalar_lea.vmem [#allocation5], %s461
        // Predicated region
        $region53: #{tpu_custom_call.1} parent=47 // pred_check
          %p463 = pneg %p97
        $region54: #{tpu_custom_call.1} parent=47 // pred_check_branch
          %465 = sbr.rel (%p463) target = $region56
        $region55: #{tpu_custom_call.1} parent=47 // pred_region
          %466 = dma.done %s459, 512
        $region56: #{tpu_custom_call.1} parent=47 // pred_fallthru
          _
        // Predicated region
        $region57: #{tpu_custom_call.1} parent=47 // pred_check
          %p467 = pneg %p118
        $region58: #{tpu_custom_call.1} parent=47 // pred_check_branch
          %469 = sbr.rel (%p467) target = $region60
        $region59: #{tpu_custom_call.1} parent=47 // pred_region
          %470 = dma.done [#allocation6], 256
        $region60: #{tpu_custom_call.1} parent=47 // pred_fallthru
          _
        %s471 = sand.u32 %s38, 1
        %s472 = scalar_lea.sflag [#allocation9], %s471
        %s473 = sand.u32 %s131, 1
        %s474 = smul.addr %s473, 16
        %s475 = scalar_lea.vmem [#allocation8], %s474
        // Predicated region
        $region61: #{tpu_custom_call.1} parent=47 // pred_check
          %p476 = pneg %p144
        $region62: #{tpu_custom_call.1} parent=47 // pred_check_branch
          %478 = sbr.rel (%p476) target = $region64
        $region63: #{tpu_custom_call.1} parent=47 // pred_region
          %479 = dma.done %s472, 256
        $region64: #{tpu_custom_call.1} parent=47 // pred_fallthru
          _
        %s480 = sand.u32 %s38, 1
        %s481 = scalar_lea.sflag [#allocation9], %s480
        %s482 = sand.u32 %s157, 1
        %s483 = smul.addr %s482, 32
        %s484 = scalar_lea.vmem [#allocation10], %s483
        // Predicated region
        $region65: #{tpu_custom_call.1} parent=47 // pred_check
          %p485 = pneg %p170
        $region66: #{tpu_custom_call.1} parent=47 // pred_check_branch
          %487 = sbr.rel (%p485) target = $region68
        $region67: #{tpu_custom_call.1} parent=47 // pred_region
          %488 = dma.done %s481, 512
        $region68: #{tpu_custom_call.1} parent=47 // pred_fallthru
          _
        %s489 = sand.u32 %s38, 1
        %s490 = scalar_lea.sflag [#allocation12], %s489
        %s491 = sand.u32 %s185, 1
        %s492 = smul.addr %s491, 32
        %s493 = scalar_lea.vmem [#allocation11], %s492
        // Predicated region
        $region69: #{tpu_custom_call.1} parent=47 // pred_check
          %p494 = pneg %p198
        $region70: #{tpu_custom_call.1} parent=47 // pred_check_branch
          %496 = sbr.rel (%p494) target = $region72
        $region71: #{tpu_custom_call.1} parent=47 // pred_region
          %497 = dma.done %s490, 512
        $region72: #{tpu_custom_call.1} parent=47 // pred_fallthru
          _
        %s498 = sand.u32 %s38, 1
        %s499 = scalar_lea.sflag [#allocation12], %s498
        %s500 = sand.u32 %s213, 1
        %s501 = smul.addr %s500, 32
        %s502 = scalar_lea.vmem [#allocation13], %s501
        // Predicated region
        $region73: #{tpu_custom_call.1} parent=47 // pred_check
          %p503 = pneg %p226
        $region74: #{tpu_custom_call.1} parent=47 // pred_check_branch
          %505 = sbr.rel (%p503) target = $region76
        $region75: #{tpu_custom_call.1} parent=47 // pred_region
          %506 = dma.done %s499, 512
        $region76: #{tpu_custom_call.1} parent=47 // pred_fallthru
          _
        %s507 = sand.u32 %s58, 1
        %s508 = scalar_lea.sflag [#allocation3], %s507
        %s509 = sand.u32 %s58, 1
        %s510 = smul.addr %s509, 32
        %s511 = scalar_lea.vmem [#allocation2], %s510
        %p512 = pneg %p71
        %p513 = pneg %p68
        %s514 = sand.u32 %s38, 1
        %s515 = scalar_lea.sflag [#allocation6], %s514
        %s516 = sand.u32 %s84, 1
        %s517 = smul.addr %s516, 32
        %s518 = scalar_lea.vmem [#allocation5], %s517
        %p519 = pneg %p97
        %p520 = pneg %p94
        %p521 = pneg %p118
        %p522 = pneg %p115
        %s523 = sand.u32 %s38, 1
        %s524 = scalar_lea.sflag [#allocation9], %s523
        %s525 = sand.u32 %s131, 1
        %s526 = smul.addr %s525, 16
        %s527 = scalar_lea.vmem [#allocation8], %s526
        %p528 = pneg %p144
        %p529 = pneg %p141
        %s530 = sand.u32 %s38, 1
        %s531 = scalar_lea.sflag [#allocation9], %s530
        %s532 = sand.u32 %s157, 1
        %s533 = smul.addr %s532, 32
        %s534 = scalar_lea.vmem [#allocation10], %s533
        %p535 = pneg %p170
        %p536 = pneg %p167
        %s537 = sand.u32 %s38, 1
        %s538 = scalar_lea.sflag [#allocation12], %s537
        %s539 = sand.u32 %s185, 1
        %s540 = smul.addr %s539, 32
        %s541 = scalar_lea.vmem [#allocation11], %s540
        %p542 = pneg %p198
        %p543 = pneg %p195
        %s544 = sand.u32 %s38, 1
        %s545 = scalar_lea.sflag [#allocation12], %s544
        %s546 = sand.u32 %s213, 1
        %s547 = smul.addr %s546, 32
        %s548 = scalar_lea.vmem [#allocation13], %s547
        %p549 = pneg %p226
        %p550 = pneg %p223
        %p551 = pneg %p254
        %p552 = pneg %p251
        %s553 = sand.u32 %s241, 1
        %s554 = scalar_lea.sflag [#allocation4], %s553
        %s555 = sand.u32 %s241, 1
        %s556 = smul.addr %s555, 32
        %s557 = scalar_lea.vmem [#allocation14], %s556
        %p558 = pneg %p282
        %p559 = pneg %p279
        %s560 = sand.u32 %s269, 1
        %s561 = scalar_lea.sflag [#allocation16], %s560
        %s562 = sand.u32 %s269, 1
        %s563 = smul.addr %s562, 32
        %s564 = scalar_lea.vmem [#allocation15], %s563
        %v565 = vld [vmem:[%s453] sm:$0xff]
        %v566 = vld [vmem:[%s453 + $0x8] sm:$0xff]
        %v567 = vld [vmem:[%s453 + $0x10] sm:$0xff]
        %v568 = vld [vmem:[%s453 + $0x18] sm:$0xff]
        %v569 = vld [vmem:[#allocation7] sm:$0xff]
        %v570 = vld [vmem:[#allocation7 + $0x8] sm:$0xff]
        %v571 = vmul.f32 %v565, %v569
        %v572 = vmul.f32 %v566, %v570
        %v573 = vmul.f32 %v567, %v569
        %v574 = vmul.f32 %v568, %v570
        %v575 = vld [vmem:[%s462] sm:$0xff]
        %v576 = vld [vmem:[%s462 + $0x8] sm:$0xff]
        %v577 = vld [vmem:[%s462 + $0x10] sm:$0xff]
        %v578 = vld [vmem:[%s462 + $0x18] sm:$0xff]
        %v579 = vld [vmem:[%s475] sm:$0xff]
        %v580 = vld [vmem:[%s475 + $0x8] sm:$0xff]
        %v581 = vadd.f32 %v575, %v579
        %v582 = vadd.f32 %v576, %v580
        %v583 = vadd.f32 %v577, %v579
        %v584 = vadd.f32 %v578, %v580
        %v585 = vand.u32 2147483647, %v581
        %vm586 = vcmp.le.f32.partialorder %v585, 0.7853982
        %vm587 = vcmp.lt.s32.totalorder %v581, 0
        %v588 = vand.u32 %v581, 2139095040
        %v589 = vshrl.u32 %v588, 23
        %v590 = vsub.s32 %v589, 127
        %v591 = vand.u32 2147483647, %v581
        %v592 = vand.u32 %v591, 8388607
        %v593 = vor.u32 %v592, 8388608
        %v594 = vsub.s32 0, %v593
        %v595 = vadd.s32 %v590, 1
        %vm596 = vcmp.gt.s32.totalorder %v595, 0
        %v597 = vsel %vm596, %v595, 0
        %v598 = vshrl.u32 %v597, 5
        %v599 = vand.u32 %v597, 31
        %v600 = vsub.s32 32, %v599
        %v601 = vshrl.u32 683565275, %v600
        %v602 = vshll.u32 683565275, %v599
        %v603 = vshrl.u32 2475754826, %v600
        %v604 = vor.u32 %v602, %v603
        %v605 = vshll.u32 2475754826, %v599
        %v606 = vshrl.u32 2131351028, %v600
        %v607 = vor.u32 %v605, %v606
        %v608 = vshll.u32 2131351028, %v599
        %v609 = vshrl.u32 2102212464, %v600
        %v610 = vor.u32 %v608, %v609
        %v611 = vshll.u32 2102212464, %v599
        %v612 = vshrl.u32 920167782, %v600
        %v613 = vor.u32 %v611, %v612
        %v614 = vshll.u32 920167782, %v599
        %v615 = vshrl.u32 1326507024, %v600
        %v616 = vor.u32 %v614, %v615
        %vm617 = vcmp.lt.s32.totalorder %v598, 1
        %vm618 = vcmp.lt.s32.totalorder %v598, 2
        %vm619 = vcmp.lt.s32.totalorder %v598, 3
        %vm620 = vcmp.lt.s32.totalorder %v598, 4
        %v621 = vsel %vm617, %v601, %v604
        %v622 = vsel %vm620, %v610, 2102212464
        %v623 = vsel %vm619, %v607, %v622
        %v624 = vsel %vm618, %v621, %v623
        %v625 = vsel %vm617, %v604, %v607
        %v626 = vsel %vm620, %v613, 920167782
        %v627 = vsel %vm619, %v610, %v626
        %v628 = vsel %vm618, %v625, %v627
        %v629 = vsel %vm617, %v607, %v610
        %v630 = vsel %vm620, %v616, 1326507024
        %v631 = vsel %vm619, %v613, %v630
        %v632 = vsel %vm618, %v629, %v631
        %v633 = vshll.u32 %v593, 8
        %v634 = vmul.u32.u64.compose %v633, %v632
        %v635 = vextract.low.u32 %v634
        %v636 = vextract.high.u32 %v634
        %v637 = vmul.u32.u64.compose %v633, %v628
        %v638 = vextract.low.u32 %v637
        %v639 = vextract.high.u32 %v637
        %v640 = vmul.u32 %v633, %v624
        %v641 = vadd.s32 %v636, %v638
        %vm642 = vc.u32 %v636, %v638
        %v643 = vadd.s32 %v639, 1
        %v644 = vsel %vm642, %v643, %v639
        %v645 = vadd.s32 %v640, %v644
        %v646 = vadd.s32 %v645, 536870912
        %v647 = vshrl.u32 %v646, 30
        %v648 = vshll.u32 %v647, 30
        %v649 = vsub.s32 %v645, %v648
        %vm650 = vcmp.lt.s32.totalorder %v649, 0
        %v651 = vsub.s32 0, %v649
        %v652 = vsel %vm650, %v651, %v649
        %v653 = vclz %v652
        %v654 = vsub.s32 %v653, 2
        %vm655 = vcmp.gt.s32.totalorder 0, %v654
        %v656 = vsel %vm655, 0, %v654
        %v657 = vsub.s32 32, %v656
        %v658 = vshll.u32 %v649, %v656
        %v659 = vshrl.u32 %v641, %v657
        %v660 = vor.u32 %v658, %v659
        %v661 = vsub.s32 4294967266, %v656
        %v662 = vadd.s32 %v661, 127
        %v663 = vshll.u32 %v662, 23
        %v664 = vor.u32 4788187, %v663
        %v665 = vand.u32 2147483647, %v664
        %v667 = vcvt.s32.f32 %v660
        %v668 = vmul.f32 %v667, %v665
        %v669 = vxor.u32 %v668, 2147483648
        %v670 = vsel %vm587, %v669, %v668
        %v671 = vsub.s32 4, %v647
        %v672 = vsel %vm587, %v671, %v647
        %v673 = vsel %vm586, %v581, %v670
        %v674 = vsel %vm586, 0, %v672
        %v675 = vcosq.f32.pop %v673
        %v676 = vsinq.f32.pop %v673
        %vm677 = vweird.f32 %v581
        %v678 = vand.u32 %v674, 3
        %vm679 = vcmp.lt.s32.totalorder %v678, 2
        %vm680 = vcmp.eq.s32.totalorder %v678, 0
        %v681 = vxor.u32 %v676, 2147483648
        %v682 = vsel %vm680, %v675, %v681
        %vm683 = vcmp.eq.s32.totalorder %v678, 2
        %v684 = vxor.u32 %v675, 2147483648
        %v685 = vsel %vm683, %v684, %v676
        %v686 = vsel %vm679, %v682, %v685
        %v687 = vsel %vm677, nan, %v686
        %v688 = vand.u32 2147483647, %v582
        %vm689 = vcmp.le.f32.partialorder %v688, 0.7853982
        %vm690 = vcmp.lt.s32.totalorder %v582, 0
        %v691 = vand.u32 %v582, 2139095040
        %v692 = vshrl.u32 %v691, 23
        %v693 = vsub.s32 %v692, 127
        %v694 = vand.u32 2147483647, %v582
        %v695 = vand.u32 %v694, 8388607
        %v696 = vor.u32 %v695, 8388608
        %v697 = vsub.s32 0, %v696
        %v698 = vadd.s32 %v693, 1
        %vm699 = vcmp.gt.s32.totalorder %v698, 0
        %v700 = vsel %vm699, %v698, 0
        %v701 = vshrl.u32 %v700, 5
        %v702 = vand.u32 %v700, 31
        %v703 = vsub.s32 32, %v702
        %v704 = vshrl.u32 683565275, %v703
        %v705 = vshll.u32 683565275, %v702
        %v706 = vshrl.u32 2475754826, %v703
        %v707 = vor.u32 %v705, %v706
        %v708 = vshll.u32 2475754826, %v702
        %v709 = vshrl.u32 2131351028, %v703
        %v710 = vor.u32 %v708, %v709
        %v711 = vshll.u32 2131351028, %v702
        %v712 = vshrl.u32 2102212464, %v703
        %v713 = vor.u32 %v711, %v712
        %v714 = vshll.u32 2102212464, %v702
        %v715 = vshrl.u32 920167782, %v703
        %v716 = vor.u32 %v714, %v715
        %v717 = vshll.u32 920167782, %v702
        %v718 = vshrl.u32 1326507024, %v703
        %v719 = vor.u32 %v717, %v718
        %vm720 = vcmp.lt.s32.totalorder %v701, 1
        %vm721 = vcmp.lt.s32.totalorder %v701, 2
        %vm722 = vcmp.lt.s32.totalorder %v701, 3
        %vm723 = vcmp.lt.s32.totalorder %v701, 4
        %v724 = vsel %vm720, %v704, %v707
        %v725 = vsel %vm723, %v713, 2102212464
        %v726 = vsel %vm722, %v710, %v725
        %v727 = vsel %vm721, %v724, %v726
        %v728 = vsel %vm720, %v707, %v710
        %v729 = vsel %vm723, %v716, 920167782
        %v730 = vsel %vm722, %v713, %v729
        %v731 = vsel %vm721, %v728, %v730
        %v732 = vsel %vm720, %v710, %v713
        %v733 = vsel %vm723, %v719, 1326507024
        %v734 = vsel %vm722, %v716, %v733
        %v735 = vsel %vm721, %v732, %v734
        %v736 = vshll.u32 %v696, 8
        %v737 = vmul.u32.u64.compose %v736, %v735
        %v738 = vextract.low.u32 %v737
        %v739 = vextract.high.u32 %v737
        %v740 = vmul.u32.u64.compose %v736, %v731
        %v741 = vextract.low.u32 %v740
        %v742 = vextract.high.u32 %v740
        %v743 = vmul.u32 %v736, %v727
        %v744 = vadd.s32 %v739, %v741
        %vm745 = vc.u32 %v739, %v741
        %v746 = vadd.s32 %v742, 1
        %v747 = vsel %vm745, %v746, %v742
        %v748 = vadd.s32 %v743, %v747
        %v749 = vadd.s32 %v748, 536870912
        %v750 = vshrl.u32 %v749, 30
        %v751 = vshll.u32 %v750, 30
        %v752 = vsub.s32 %v748, %v751
        %vm753 = vcmp.lt.s32.totalorder %v752, 0
        %v754 = vsub.s32 0, %v752
        %v755 = vsel %vm753, %v754, %v752
        %v756 = vclz %v755
        %v757 = vsub.s32 %v756, 2
        %vm758 = vcmp.gt.s32.totalorder 0, %v757
        %v759 = vsel %vm758, 0, %v757
        %v760 = vsub.s32 32, %v759
        %v761 = vshll.u32 %v752, %v759
        %v762 = vshrl.u32 %v744, %v760
        %v763 = vor.u32 %v761, %v762
        %v764 = vsub.s32 4294967266, %v759
        %v765 = vadd.s32 %v764, 127
        %v766 = vshll.u32 %v765, 23
        %v767 = vor.u32 4788187, %v766
        %v768 = vand.u32 2147483647, %v767
        %v770 = vcvt.s32.f32 %v763
        %v771 = vmul.f32 %v770, %v768
        %v772 = vxor.u32 %v771, 2147483648
        %v773 = vsel %vm690, %v772, %v771
        %v774 = vsub.s32 4, %v750
        %v775 = vsel %vm690, %v774, %v750
        %v776 = vsel %vm689, %v582, %v773
        %v777 = vsel %vm689, 0, %v775
        %v778 = vcosq.f32.pop %v776
        %v779 = vsinq.f32.pop %v776
        %vm780 = vweird.f32 %v582
        %v781 = vand.u32 %v777, 3
        %vm782 = vcmp.lt.s32.totalorder %v781, 2
        %vm783 = vcmp.eq.s32.totalorder %v781, 0
        %v784 = vxor.u32 %v779, 2147483648
        %v785 = vsel %vm783, %v778, %v784
        %vm786 = vcmp.eq.s32.totalorder %v781, 2
        %v787 = vxor.u32 %v778, 2147483648
        %v788 = vsel %vm786, %v787, %v779
        %v789 = vsel %vm782, %v785, %v788
        %v790 = vsel %vm780, nan, %v789
        %v791 = vand.u32 2147483647, %v583
        %vm792 = vcmp.le.f32.partialorder %v791, 0.7853982
        %vm793 = vcmp.lt.s32.totalorder %v583, 0
        %v794 = vand.u32 %v583, 2139095040
        %v795 = vshrl.u32 %v794, 23
        %v796 = vsub.s32 %v795, 127
        %v797 = vand.u32 2147483647, %v583
        %v798 = vand.u32 %v797, 8388607
        %v799 = vor.u32 %v798, 8388608
        %v800 = vsub.s32 0, %v799
        %v801 = vadd.s32 %v796, 1
        %vm802 = vcmp.gt.s32.totalorder %v801, 0
        %v803 = vsel %vm802, %v801, 0
        %v804 = vshrl.u32 %v803, 5
        %v805 = vand.u32 %v803, 31
        %v806 = vsub.s32 32, %v805
        %v807 = vshrl.u32 683565275, %v806
        %v808 = vshll.u32 683565275, %v805
        %v809 = vshrl.u32 2475754826, %v806
        %v810 = vor.u32 %v808, %v809
        %v811 = vshll.u32 2475754826, %v805
        %v812 = vshrl.u32 2131351028, %v806
        %v813 = vor.u32 %v811, %v812
        %v814 = vshll.u32 2131351028, %v805
        %v815 = vshrl.u32 2102212464, %v806
        %v816 = vor.u32 %v814, %v815
        %v817 = vshll.u32 2102212464, %v805
        %v818 = vshrl.u32 920167782, %v806
        %v819 = vor.u32 %v817, %v818
        %v820 = vshll.u32 920167782, %v805
        %v821 = vshrl.u32 1326507024, %v806
        %v822 = vor.u32 %v820, %v821
        %vm823 = vcmp.lt.s32.totalorder %v804, 1
        %vm824 = vcmp.lt.s32.totalorder %v804, 2
        %vm825 = vcmp.lt.s32.totalorder %v804, 3
        %vm826 = vcmp.lt.s32.totalorder %v804, 4
        %v827 = vsel %vm823, %v807, %v810
        %v828 = vsel %vm826, %v816, 2102212464
        %v829 = vsel %vm825, %v813, %v828
        %v830 = vsel %vm824, %v827, %v829
        %v831 = vsel %vm823, %v810, %v813
        %v832 = vsel %vm826, %v819, 920167782
        %v833 = vsel %vm825, %v816, %v832
        %v834 = vsel %vm824, %v831, %v833
        %v835 = vsel %vm823, %v813, %v816
        %v836 = vsel %vm826, %v822, 1326507024
        %v837 = vsel %vm825, %v819, %v836
        %v838 = vsel %vm824, %v835, %v837
        %v839 = vshll.u32 %v799, 8
        %v840 = vmul.u32.u64.compose %v839, %v838
        %v841 = vextract.low.u32 %v840
        %v842 = vextract.high.u32 %v840
        %v843 = vmul.u32.u64.compose %v839, %v834
        %v844 = vextract.low.u32 %v843
        %v845 = vextract.high.u32 %v843
        %v846 = vmul.u32 %v839, %v830
        %v847 = vadd.s32 %v842, %v844
        %vm848 = vc.u32 %v842, %v844
        %v849 = vadd.s32 %v845, 1
        %v850 = vsel %vm848, %v849, %v845
        %v851 = vadd.s32 %v846, %v850
        %v852 = vadd.s32 %v851, 536870912
        %v853 = vshrl.u32 %v852, 30
        %v854 = vshll.u32 %v853, 30
        %v855 = vsub.s32 %v851, %v854
        %vm856 = vcmp.lt.s32.totalorder %v855, 0
        %v857 = vsub.s32 0, %v855
        %v858 = vsel %vm856, %v857, %v855
        %v859 = vclz %v858
        %v860 = vsub.s32 %v859, 2
        %vm861 = vcmp.gt.s32.totalorder 0, %v860
        %v862 = vsel %vm861, 0, %v860
        %v863 = vsub.s32 32, %v862
        %v864 = vshll.u32 %v855, %v862
        %v865 = vshrl.u32 %v847, %v863
        %v866 = vor.u32 %v864, %v865
        %v867 = vsub.s32 4294967266, %v862
        %v868 = vadd.s32 %v867, 127
        %v869 = vshll.u32 %v868, 23
        %v870 = vor.u32 4788187, %v869
        %v871 = vand.u32 2147483647, %v870
        %v873 = vcvt.s32.f32 %v866
        %v874 = vmul.f32 %v873, %v871
        %v875 = vxor.u32 %v874, 2147483648
        %v876 = vsel %vm793, %v875, %v874
        %v877 = vsub.s32 4, %v853
        %v878 = vsel %vm793, %v877, %v853
        %v879 = vsel %vm792, %v583, %v876
        %v880 = vsel %vm792, 0, %v878
        %v881 = vcosq.f32.pop %v879
        %v882 = vsinq.f32.pop %v879
        %vm883 = vweird.f32 %v583
        %v884 = vand.u32 %v880, 3
        %vm885 = vcmp.lt.s32.totalorder %v884, 2
        %vm886 = vcmp.eq.s32.totalorder %v884, 0
        %v887 = vxor.u32 %v882, 2147483648
        %v888 = vsel %vm886, %v881, %v887
        %vm889 = vcmp.eq.s32.totalorder %v884, 2
        %v890 = vxor.u32 %v881, 2147483648
        %v891 = vsel %vm889, %v890, %v882
        %v892 = vsel %vm885, %v888, %v891
        %v893 = vsel %vm883, nan, %v892
        %v894 = vand.u32 2147483647, %v584
        %vm895 = vcmp.le.f32.partialorder %v894, 0.7853982
        %vm896 = vcmp.lt.s32.totalorder %v584, 0
        %v897 = vand.u32 %v584, 2139095040
        %v898 = vshrl.u32 %v897, 23
        %v899 = vsub.s32 %v898, 127
        %v900 = vand.u32 2147483647, %v584
        %v901 = vand.u32 %v900, 8388607
        %v902 = vor.u32 %v901, 8388608
        %v903 = vsub.s32 0, %v902
        %v904 = vadd.s32 %v899, 1
        %vm905 = vcmp.gt.s32.totalorder %v904, 0
        %v906 = vsel %vm905, %v904, 0
        %v907 = vshrl.u32 %v906, 5
        %v908 = vand.u32 %v906, 31
        %v909 = vsub.s32 32, %v908
        %v910 = vshrl.u32 683565275, %v909
        %v911 = vshll.u32 683565275, %v908
        %v912 = vshrl.u32 2475754826, %v909
        %v913 = vor.u32 %v911, %v912
        %v914 = vshll.u32 2475754826, %v908
        %v915 = vshrl.u32 2131351028, %v909
        %v916 = vor.u32 %v914, %v915
        %v917 = vshll.u32 2131351028, %v908
        %v918 = vshrl.u32 2102212464, %v909
        %v919 = vor.u32 %v917, %v918
        %v920 = vshll.u32 2102212464, %v908
        %v921 = vshrl.u32 920167782, %v909
        %v922 = vor.u32 %v920, %v921
        %v923 = vshll.u32 920167782, %v908
        %v924 = vshrl.u32 1326507024, %v909
        %v925 = vor.u32 %v923, %v924
        %vm926 = vcmp.lt.s32.totalorder %v907, 1
        %vm927 = vcmp.lt.s32.totalorder %v907, 2
        %vm928 = vcmp.lt.s32.totalorder %v907, 3
        %vm929 = vcmp.lt.s32.totalorder %v907, 4
        %v930 = vsel %vm926, %v910, %v913
        %v931 = vsel %vm929, %v919, 2102212464
        %v932 = vsel %vm928, %v916, %v931
        %v933 = vsel %vm927, %v930, %v932
        %v934 = vsel %vm926, %v913, %v916
        %v935 = vsel %vm929, %v922, 920167782
        %v936 = vsel %vm928, %v919, %v935
        %v937 = vsel %vm927, %v934, %v936
        %v938 = vsel %vm926, %v916, %v919
        %v939 = vsel %vm929, %v925, 1326507024
        %v940 = vsel %vm928, %v922, %v939
        %v941 = vsel %vm927, %v938, %v940
        %v942 = vshll.u32 %v902, 8
        %v943 = vmul.u32.u64.compose %v942, %v941
        %v944 = vextract.low.u32 %v943
        %v945 = vextract.high.u32 %v943
        %v946 = vmul.u32.u64.compose %v942, %v937
        %v947 = vextract.low.u32 %v946
        %v948 = vextract.high.u32 %v946
        %v949 = vmul.u32 %v942, %v933
        %v950 = vadd.s32 %v945, %v947
        %vm951 = vc.u32 %v945, %v947
        %v952 = vadd.s32 %v948, 1
        %v953 = vsel %vm951, %v952, %v948
        %v954 = vadd.s32 %v949, %v953
        %v955 = vadd.s32 %v954, 536870912
        %v956 = vshrl.u32 %v955, 30
        %v957 = vshll.u32 %v956, 30
        %v958 = vsub.s32 %v954, %v957
        %vm959 = vcmp.lt.s32.totalorder %v958, 0
        %v960 = vsub.s32 0, %v958
        %v961 = vsel %vm959, %v960, %v958
        %v962 = vclz %v961
        %v963 = vsub.s32 %v962, 2
        %vm964 = vcmp.gt.s32.totalorder 0, %v963
        %v965 = vsel %vm964, 0, %v963
        %v966 = vsub.s32 32, %v965
        %v967 = vshll.u32 %v958, %v965
        %v968 = vshrl.u32 %v950, %v966
        %v969 = vor.u32 %v967, %v968
        %v970 = vsub.s32 4294967266, %v965
        %v971 = vadd.s32 %v970, 127
        %v972 = vshll.u32 %v971, 23
        %v973 = vor.u32 4788187, %v972
        %v974 = vand.u32 2147483647, %v973
        %v976 = vcvt.s32.f32 %v969
        %v977 = vmul.f32 %v976, %v974
        %v978 = vxor.u32 %v977, 2147483648
        %v979 = vsel %vm896, %v978, %v977
        %v980 = vsub.s32 4, %v956
        %v981 = vsel %vm896, %v980, %v956
        %v982 = vsel %vm895, %v584, %v979
        %v983 = vsel %vm895, 0, %v981
        %v984 = vcosq.f32.pop %v982
        %v985 = vsinq.f32.pop %v982
        %vm986 = vweird.f32 %v584
        %v987 = vand.u32 %v983, 3
        %vm988 = vcmp.lt.s32.totalorder %v987, 2
        %vm989 = vcmp.eq.s32.totalorder %v987, 0
        %v990 = vxor.u32 %v985, 2147483648
        %v991 = vsel %vm989, %v984, %v990
        %vm992 = vcmp.eq.s32.totalorder %v987, 2
        %v993 = vxor.u32 %v984, 2147483648
        %v994 = vsel %vm992, %v993, %v985
        %v995 = vsel %vm988, %v991, %v994
        %v996 = vsel %vm986, nan, %v995
        %v997 = vmul.f32 %v571, %v687
        %v998 = vmul.f32 %v572, %v790
        %v999 = vmul.f32 %v573, %v893
        %v1000 = vmul.f32 %v574, %v996
        %v1001 = vand.u32 2147483647, %v581
        %vm1002 = vcmp.le.f32.partialorder %v1001, 0.7853982
        %vm1003 = vcmp.lt.s32.totalorder %v581, 0
        %v1004 = vand.u32 %v581, 2139095040
        %v1005 = vshrl.u32 %v1004, 23
        %v1006 = vsub.s32 %v1005, 127
        %v1007 = vand.u32 2147483647, %v581
        %v1008 = vand.u32 %v1007, 8388607
        %v1009 = vor.u32 %v1008, 8388608
        %v1010 = vsub.s32 0, %v1009
        %v1011 = vadd.s32 %v1006, 1
        %vm1012 = vcmp.gt.s32.totalorder %v1011, 0
        %v1013 = vsel %vm1012, %v1011, 0
        %v1014 = vshrl.u32 %v1013, 5
        %v1015 = vand.u32 %v1013, 31
        %v1016 = vsub.s32 32, %v1015
        %v1017 = vshrl.u32 683565275, %v1016
        %v1018 = vshll.u32 683565275, %v1015
        %v1019 = vshrl.u32 2475754826, %v1016
        %v1020 = vor.u32 %v1018, %v1019
        %v1021 = vshll.u32 2475754826, %v1015
        %v1022 = vshrl.u32 2131351028, %v1016
        %v1023 = vor.u32 %v1021, %v1022
        %v1024 = vshll.u32 2131351028, %v1015
        %v1025 = vshrl.u32 2102212464, %v1016
        %v1026 = vor.u32 %v1024, %v1025
        %v1027 = vshll.u32 2102212464, %v1015
        %v1028 = vshrl.u32 920167782, %v1016
        %v1029 = vor.u32 %v1027, %v1028
        %v1030 = vshll.u32 920167782, %v1015
        %v1031 = vshrl.u32 1326507024, %v1016
        %v1032 = vor.u32 %v1030, %v1031
        %vm1033 = vcmp.lt.s32.totalorder %v1014, 1
        %vm1034 = vcmp.lt.s32.totalorder %v1014, 2
        %vm1035 = vcmp.lt.s32.totalorder %v1014, 3
        %vm1036 = vcmp.lt.s32.totalorder %v1014, 4
        %v1037 = vsel %vm1033, %v1017, %v1020
        %v1038 = vsel %vm1036, %v1026, 2102212464
        %v1039 = vsel %vm1035, %v1023, %v1038
        %v1040 = vsel %vm1034, %v1037, %v1039
        %v1041 = vsel %vm1033, %v1020, %v1023
        %v1042 = vsel %vm1036, %v1029, 920167782
        %v1043 = vsel %vm1035, %v1026, %v1042
        %v1044 = vsel %vm1034, %v1041, %v1043
        %v1045 = vsel %vm1033, %v1023, %v1026
        %v1046 = vsel %vm1036, %v1032, 1326507024
        %v1047 = vsel %vm1035, %v1029, %v1046
        %v1048 = vsel %vm1034, %v1045, %v1047
        %v1049 = vshll.u32 %v1009, 8
        %v1050 = vmul.u32.u64.compose %v1049, %v1048
        %v1051 = vextract.low.u32 %v1050
        %v1052 = vextract.high.u32 %v1050
        %v1053 = vmul.u32.u64.compose %v1049, %v1044
        %v1054 = vextract.low.u32 %v1053
        %v1055 = vextract.high.u32 %v1053
        %v1056 = vmul.u32 %v1049, %v1040
        %v1057 = vadd.s32 %v1052, %v1054
        %vm1058 = vc.u32 %v1052, %v1054
        %v1059 = vadd.s32 %v1055, 1
        %v1060 = vsel %vm1058, %v1059, %v1055
        %v1061 = vadd.s32 %v1056, %v1060
        %v1062 = vadd.s32 %v1061, 536870912
        %v1063 = vshrl.u32 %v1062, 30
        %v1064 = vshll.u32 %v1063, 30
        %v1065 = vsub.s32 %v1061, %v1064
        %vm1066 = vcmp.lt.s32.totalorder %v1065, 0
        %v1067 = vsub.s32 0, %v1065
        %v1068 = vsel %vm1066, %v1067, %v1065
        %v1069 = vclz %v1068
        %v1070 = vsub.s32 %v1069, 2
        %vm1071 = vcmp.gt.s32.totalorder 0, %v1070
        %v1072 = vsel %vm1071, 0, %v1070
        %v1073 = vsub.s32 32, %v1072
        %v1074 = vshll.u32 %v1065, %v1072
        %v1075 = vshrl.u32 %v1057, %v1073
        %v1076 = vor.u32 %v1074, %v1075
        %v1077 = vsub.s32 4294967266, %v1072
        %v1078 = vadd.s32 %v1077, 127
        %v1079 = vshll.u32 %v1078, 23
        %v1080 = vor.u32 4788187, %v1079
        %v1081 = vand.u32 2147483647, %v1080
        %v1083 = vcvt.s32.f32 %v1076
        %v1084 = vmul.f32 %v1083, %v1081
        %v1085 = vxor.u32 %v1084, 2147483648
        %v1086 = vsel %vm1003, %v1085, %v1084
        %v1087 = vsub.s32 4, %v1063
        %v1088 = vsel %vm1003, %v1087, %v1063
        %v1089 = vsel %vm1002, %v581, %v1086
        %v1090 = vsel %vm1002, 0, %v1088
        %v1091 = vcosq.f32.pop %v1089
        %v1092 = vsinq.f32.pop %v1089
        %vm1093 = vweird.f32 %v581
        %v1094 = vadd.s32 %v1090, 3
        %v1095 = vand.u32 %v1094, 3
        %vm1096 = vcmp.lt.s32.totalorder %v1095, 2
        %vm1097 = vcmp.eq.s32.totalorder %v1095, 0
        %v1098 = vxor.u32 %v1092, 2147483648
        %v1099 = vsel %vm1097, %v1091, %v1098
        %vm1100 = vcmp.eq.s32.totalorder %v1095, 2
        %v1101 = vxor.u32 %v1091, 2147483648
        %v1102 = vsel %vm1100, %v1101, %v1092
        %v1103 = vsel %vm1096, %v1099, %v1102
        %v1104 = vsel %vm1093, nan, %v1103
        %v1105 = vand.u32 2147483647, %v582
        %vm1106 = vcmp.le.f32.partialorder %v1105, 0.7853982
        %vm1107 = vcmp.lt.s32.totalorder %v582, 0
        %v1108 = vand.u32 %v582, 2139095040
        %v1109 = vshrl.u32 %v1108, 23
        %v1110 = vsub.s32 %v1109, 127
        %v1111 = vand.u32 2147483647, %v582
        %v1112 = vand.u32 %v1111, 8388607
        %v1113 = vor.u32 %v1112, 8388608
        %v1114 = vsub.s32 0, %v1113
        %v1115 = vadd.s32 %v1110, 1
        %vm1116 = vcmp.gt.s32.totalorder %v1115, 0
        %v1117 = vsel %vm1116, %v1115, 0
        %v1118 = vshrl.u32 %v1117, 5
        %v1119 = vand.u32 %v1117, 31
        %v1120 = vsub.s32 32, %v1119
        %v1121 = vshrl.u32 683565275, %v1120
        %v1122 = vshll.u32 683565275, %v1119
        %v1123 = vshrl.u32 2475754826, %v1120
        %v1124 = vor.u32 %v1122, %v1123
        %v1125 = vshll.u32 2475754826, %v1119
        %v1126 = vshrl.u32 2131351028, %v1120
        %v1127 = vor.u32 %v1125, %v1126
        %v1128 = vshll.u32 2131351028, %v1119
        %v1129 = vshrl.u32 2102212464, %v1120
        %v1130 = vor.u32 %v1128, %v1129
        %v1131 = vshll.u32 2102212464, %v1119
        %v1132 = vshrl.u32 920167782, %v1120
        %v1133 = vor.u32 %v1131, %v1132
        %v1134 = vshll.u32 920167782, %v1119
        %v1135 = vshrl.u32 1326507024, %v1120
        %v1136 = vor.u32 %v1134, %v1135
        %vm1137 = vcmp.lt.s32.totalorder %v1118, 1
        %vm1138 = vcmp.lt.s32.totalorder %v1118, 2
        %vm1139 = vcmp.lt.s32.totalorder %v1118, 3
        %vm1140 = vcmp.lt.s32.totalorder %v1118, 4
        %v1141 = vsel %vm1137, %v1121, %v1124
        %v1142 = vsel %vm1140, %v1130, 2102212464
        %v1143 = vsel %vm1139, %v1127, %v1142
        %v1144 = vsel %vm1138, %v1141, %v1143
        %v1145 = vsel %vm1137, %v1124, %v1127
        %v1146 = vsel %vm1140, %v1133, 920167782
        %v1147 = vsel %vm1139, %v1130, %v1146
        %v1148 = vsel %vm1138, %v1145, %v1147
        %v1149 = vsel %vm1137, %v1127, %v1130
        %v1150 = vsel %vm1140, %v1136, 1326507024
        %v1151 = vsel %vm1139, %v1133, %v1150
        %v1152 = vsel %vm1138, %v1149, %v1151
        %v1153 = vshll.u32 %v1113, 8
        %v1154 = vmul.u32.u64.compose %v1153, %v1152
        %v1155 = vextract.low.u32 %v1154
        %v1156 = vextract.high.u32 %v1154
        %v1157 = vmul.u32.u64.compose %v1153, %v1148
        %v1158 = vextract.low.u32 %v1157
        %v1159 = vextract.high.u32 %v1157
        %v1160 = vmul.u32 %v1153, %v1144
        %v1161 = vadd.s32 %v1156, %v1158
        %vm1162 = vc.u32 %v1156, %v1158
        %v1163 = vadd.s32 %v1159, 1
        %v1164 = vsel %vm1162, %v1163, %v1159
        %v1165 = vadd.s32 %v1160, %v1164
        %v1166 = vadd.s32 %v1165, 536870912
        %v1167 = vshrl.u32 %v1166, 30
        %v1168 = vshll.u32 %v1167, 30
        %v1169 = vsub.s32 %v1165, %v1168
        %vm1170 = vcmp.lt.s32.totalorder %v1169, 0
        %v1171 = vsub.s32 0, %v1169
        %v1172 = vsel %vm1170, %v1171, %v1169
        %v1173 = vclz %v1172
        %v1174 = vsub.s32 %v1173, 2
        %vm1175 = vcmp.gt.s32.totalorder 0, %v1174
        %v1176 = vsel %vm1175, 0, %v1174
        %v1177 = vsub.s32 32, %v1176
        %v1178 = vshll.u32 %v1169, %v1176
        %v1179 = vshrl.u32 %v1161, %v1177
        %v1180 = vor.u32 %v1178, %v1179
        %v1181 = vsub.s32 4294967266, %v1176
        %v1182 = vadd.s32 %v1181, 127
        %v1183 = vshll.u32 %v1182, 23
        %v1184 = vor.u32 4788187, %v1183
        %v1185 = vand.u32 2147483647, %v1184
        %v1187 = vcvt.s32.f32 %v1180
        %v1188 = vmul.f32 %v1187, %v1185
        %v1189 = vxor.u32 %v1188, 2147483648
        %v1190 = vsel %vm1107, %v1189, %v1188
        %v1191 = vsub.s32 4, %v1167
        %v1192 = vsel %vm1107, %v1191, %v1167
        %v1193 = vsel %vm1106, %v582, %v1190
        %v1194 = vsel %vm1106, 0, %v1192
        %v1195 = vcosq.f32.pop %v1193
        %v1196 = vsinq.f32.pop %v1193
        %vm1197 = vweird.f32 %v582
        %v1198 = vadd.s32 %v1194, 3
        %v1199 = vand.u32 %v1198, 3
        %vm1200 = vcmp.lt.s32.totalorder %v1199, 2
        %vm1201 = vcmp.eq.s32.totalorder %v1199, 0
        %v1202 = vxor.u32 %v1196, 2147483648
        %v1203 = vsel %vm1201, %v1195, %v1202
        %vm1204 = vcmp.eq.s32.totalorder %v1199, 2
        %v1205 = vxor.u32 %v1195, 2147483648
        %v1206 = vsel %vm1204, %v1205, %v1196
        %v1207 = vsel %vm1200, %v1203, %v1206
        %v1208 = vsel %vm1197, nan, %v1207
        %v1209 = vand.u32 2147483647, %v583
        %vm1210 = vcmp.le.f32.partialorder %v1209, 0.7853982
        %vm1211 = vcmp.lt.s32.totalorder %v583, 0
        %v1212 = vand.u32 %v583, 2139095040
        %v1213 = vshrl.u32 %v1212, 23
        %v1214 = vsub.s32 %v1213, 127
        %v1215 = vand.u32 2147483647, %v583
        %v1216 = vand.u32 %v1215, 8388607
        %v1217 = vor.u32 %v1216, 8388608
        %v1218 = vsub.s32 0, %v1217
        %v1219 = vadd.s32 %v1214, 1
        %vm1220 = vcmp.gt.s32.totalorder %v1219, 0
        %v1221 = vsel %vm1220, %v1219, 0
        %v1222 = vshrl.u32 %v1221, 5
        %v1223 = vand.u32 %v1221, 31
        %v1224 = vsub.s32 32, %v1223
        %v1225 = vshrl.u32 683565275, %v1224
        %v1226 = vshll.u32 683565275, %v1223
        %v1227 = vshrl.u32 2475754826, %v1224
        %v1228 = vor.u32 %v1226, %v1227
        %v1229 = vshll.u32 2475754826, %v1223
        %v1230 = vshrl.u32 2131351028, %v1224
        %v1231 = vor.u32 %v1229, %v1230
        %v1232 = vshll.u32 2131351028, %v1223
        %v1233 = vshrl.u32 2102212464, %v1224
        %v1234 = vor.u32 %v1232, %v1233
        %v1235 = vshll.u32 2102212464, %v1223
        %v1236 = vshrl.u32 920167782, %v1224
        %v1237 = vor.u32 %v1235, %v1236
        %v1238 = vshll.u32 920167782, %v1223
        %v1239 = vshrl.u32 1326507024, %v1224
        %v1240 = vor.u32 %v1238, %v1239
        %vm1241 = vcmp.lt.s32.totalorder %v1222, 1
        %vm1242 = vcmp.lt.s32.totalorder %v1222, 2
        %vm1243 = vcmp.lt.s32.totalorder %v1222, 3
        %vm1244 = vcmp.lt.s32.totalorder %v1222, 4
        %v1245 = vsel %vm1241, %v1225, %v1228
        %v1246 = vsel %vm1244, %v1234, 2102212464
        %v1247 = vsel %vm1243, %v1231, %v1246
        %v1248 = vsel %vm1242, %v1245, %v1247
        %v1249 = vsel %vm1241, %v1228, %v1231
        %v1250 = vsel %vm1244, %v1237, 920167782
        %v1251 = vsel %vm1243, %v1234, %v1250
        %v1252 = vsel %vm1242, %v1249, %v1251
        %v1253 = vsel %vm1241, %v1231, %v1234
        %v1254 = vsel %vm1244, %v1240, 1326507024
        %v1255 = vsel %vm1243, %v1237, %v1254
        %v1256 = vsel %vm1242, %v1253, %v1255
        %v1257 = vshll.u32 %v1217, 8
        %v1258 = vmul.u32.u64.compose %v1257, %v1256
        %v1259 = vextract.low.u32 %v1258
        %v1260 = vextract.high.u32 %v1258
        %v1261 = vmul.u32.u64.compose %v1257, %v1252
        %v1262 = vextract.low.u32 %v1261
        %v1263 = vextract.high.u32 %v1261
        %v1264 = vmul.u32 %v1257, %v1248
        %v1265 = vadd.s32 %v1260, %v1262
        %vm1266 = vc.u32 %v1260, %v1262
        %v1267 = vadd.s32 %v1263, 1
        %v1268 = vsel %vm1266, %v1267, %v1263
        %v1269 = vadd.s32 %v1264, %v1268
        %v1270 = vadd.s32 %v1269, 536870912
        %v1271 = vshrl.u32 %v1270, 30
        %v1272 = vshll.u32 %v1271, 30
        %v1273 = vsub.s32 %v1269, %v1272
        %vm1274 = vcmp.lt.s32.totalorder %v1273, 0
        %v1275 = vsub.s32 0, %v1273
        %v1276 = vsel %vm1274, %v1275, %v1273
        %v1277 = vclz %v1276
        %v1278 = vsub.s32 %v1277, 2
        %vm1279 = vcmp.gt.s32.totalorder 0, %v1278
        %v1280 = vsel %vm1279, 0, %v1278
        %v1281 = vsub.s32 32, %v1280
        %v1282 = vshll.u32 %v1273, %v1280
        %v1283 = vshrl.u32 %v1265, %v1281
        %v1284 = vor.u32 %v1282, %v1283
        %v1285 = vsub.s32 4294967266, %v1280
        %v1286 = vadd.s32 %v1285, 127
        %v1287 = vshll.u32 %v1286, 23
        %v1288 = vor.u32 4788187, %v1287
        %v1289 = vand.u32 2147483647, %v1288
        %v1291 = vcvt.s32.f32 %v1284
        %v1292 = vmul.f32 %v1291, %v1289
        %v1293 = vxor.u32 %v1292, 2147483648
        %v1294 = vsel %vm1211, %v1293, %v1292
        %v1295 = vsub.s32 4, %v1271
        %v1296 = vsel %vm1211, %v1295, %v1271
        %v1297 = vsel %vm1210, %v583, %v1294
        %v1298 = vsel %vm1210, 0, %v1296
        %v1299 = vcosq.f32.pop %v1297
        %v1300 = vsinq.f32.pop %v1297
        %vm1301 = vweird.f32 %v583
        %v1302 = vadd.s32 %v1298, 3
        %v1303 = vand.u32 %v1302, 3
        %vm1304 = vcmp.lt.s32.totalorder %v1303, 2
        %vm1305 = vcmp.eq.s32.totalorder %v1303, 0
        %v1306 = vxor.u32 %v1300, 2147483648
        %v1307 = vsel %vm1305, %v1299, %v1306
        %vm1308 = vcmp.eq.s32.totalorder %v1303, 2
        %v1309 = vxor.u32 %v1299, 2147483648
        %v1310 = vsel %vm1308, %v1309, %v1300
        %v1311 = vsel %vm1304, %v1307, %v1310
        %v1312 = vsel %vm1301, nan, %v1311
        %v1313 = vand.u32 2147483647, %v584
        %vm1314 = vcmp.le.f32.partialorder %v1313, 0.7853982
        %vm1315 = vcmp.lt.s32.totalorder %v584, 0
        %v1316 = vand.u32 %v584, 2139095040
        %v1317 = vshrl.u32 %v1316, 23
        %v1318 = vsub.s32 %v1317, 127
        %v1319 = vand.u32 2147483647, %v584
        %v1320 = vand.u32 %v1319, 8388607
        %v1321 = vor.u32 %v1320, 8388608
        %v1322 = vsub.s32 0, %v1321
        %v1323 = vadd.s32 %v1318, 1
        %vm1324 = vcmp.gt.s32.totalorder %v1323, 0
        %v1325 = vsel %vm1324, %v1323, 0
        %v1326 = vshrl.u32 %v1325, 5
        %v1327 = vand.u32 %v1325, 31
        %v1328 = vsub.s32 32, %v1327
        %v1329 = vshrl.u32 683565275, %v1328
        %v1330 = vshll.u32 683565275, %v1327
        %v1331 = vshrl.u32 2475754826, %v1328
        %v1332 = vor.u32 %v1330, %v1331
        %v1333 = vshll.u32 2475754826, %v1327
        %v1334 = vshrl.u32 2131351028, %v1328
        %v1335 = vor.u32 %v1333, %v1334
        %v1336 = vshll.u32 2131351028, %v1327
        %v1337 = vshrl.u32 2102212464, %v1328
        %v1338 = vor.u32 %v1336, %v1337
        %v1339 = vshll.u32 2102212464, %v1327
        %v1340 = vshrl.u32 920167782, %v1328
        %v1341 = vor.u32 %v1339, %v1340
        %v1342 = vshll.u32 920167782, %v1327
        %v1343 = vshrl.u32 1326507024, %v1328
        %v1344 = vor.u32 %v1342, %v1343
        %vm1345 = vcmp.lt.s32.totalorder %v1326, 1
        %vm1346 = vcmp.lt.s32.totalorder %v1326, 2
        %vm1347 = vcmp.lt.s32.totalorder %v1326, 3
        %vm1348 = vcmp.lt.s32.totalorder %v1326, 4
        %v1349 = vsel %vm1345, %v1329, %v1332
        %v1350 = vsel %vm1348, %v1338, 2102212464
        %v1351 = vsel %vm1347, %v1335, %v1350
        %v1352 = vsel %vm1346, %v1349, %v1351
        %v1353 = vsel %vm1345, %v1332, %v1335
        %v1354 = vsel %vm1348, %v1341, 920167782
        %v1355 = vsel %vm1347, %v1338, %v1354
        %v1356 = vsel %vm1346, %v1353, %v1355
        %v1357 = vsel %vm1345, %v1335, %v1338
        %v1358 = vsel %vm1348, %v1344, 1326507024
        %v1359 = vsel %vm1347, %v1341, %v1358
        %v1360 = vsel %vm1346, %v1357, %v1359
        %v1361 = vshll.u32 %v1321, 8
        %v1362 = vmul.u32.u64.compose %v1361, %v1360
        %v1363 = vextract.low.u32 %v1362
        %v1364 = vextract.high.u32 %v1362
        %v1365 = vmul.u32.u64.compose %v1361, %v1356
        %v1366 = vextract.low.u32 %v1365
        %v1367 = vextract.high.u32 %v1365
        %v1368 = vmul.u32 %v1361, %v1352
        %v1369 = vadd.s32 %v1364, %v1366
        %vm1370 = vc.u32 %v1364, %v1366
        %v1371 = vadd.s32 %v1367, 1
        %v1372 = vsel %vm1370, %v1371, %v1367
        %v1373 = vadd.s32 %v1368, %v1372
        %v1374 = vadd.s32 %v1373, 536870912
        %v1375 = vshrl.u32 %v1374, 30
        %v1376 = vshll.u32 %v1375, 30
        %v1377 = vsub.s32 %v1373, %v1376
        %vm1378 = vcmp.lt.s32.totalorder %v1377, 0
        %v1379 = vsub.s32 0, %v1377
        %v1380 = vsel %vm1378, %v1379, %v1377
        %v1381 = vclz %v1380
        %v1382 = vsub.s32 %v1381, 2
        %vm1383 = vcmp.gt.s32.totalorder 0, %v1382
        %v1384 = vsel %vm1383, 0, %v1382
        %v1385 = vsub.s32 32, %v1384
        %v1386 = vshll.u32 %v1377, %v1384
        %v1387 = vshrl.u32 %v1369, %v1385
        %v1388 = vor.u32 %v1386, %v1387
        %v1389 = vsub.s32 4294967266, %v1384
        %v1390 = vadd.s32 %v1389, 127
        %v1391 = vshll.u32 %v1390, 23
        %v1392 = vor.u32 4788187, %v1391
        %v1393 = vand.u32 2147483647, %v1392
        %v1395 = vcvt.s32.f32 %v1388
        %v1396 = vmul.f32 %v1395, %v1393
        %v1397 = vxor.u32 %v1396, 2147483648
        %v1398 = vsel %vm1315, %v1397, %v1396
        %v1399 = vsub.s32 4, %v1375
        %v1400 = vsel %vm1315, %v1399, %v1375
        %v1401 = vsel %vm1314, %v584, %v1398
        %v1402 = vsel %vm1314, 0, %v1400
        %v1403 = vcosq.f32.pop %v1401
        %v1404 = vsinq.f32.pop %v1401
        %vm1405 = vweird.f32 %v584
        %v1406 = vadd.s32 %v1402, 3
        %v1407 = vand.u32 %v1406, 3
        %vm1408 = vcmp.lt.s32.totalorder %v1407, 2
        %vm1409 = vcmp.eq.s32.totalorder %v1407, 0
        %v1410 = vxor.u32 %v1404, 2147483648
        %v1411 = vsel %vm1409, %v1403, %v1410
        %vm1412 = vcmp.eq.s32.totalorder %v1407, 2
        %v1413 = vxor.u32 %v1403, 2147483648
        %v1414 = vsel %vm1412, %v1413, %v1404
        %v1415 = vsel %vm1408, %v1411, %v1414
        %v1416 = vsel %vm1405, nan, %v1415
        %v1417 = vmul.f32 %v571, %v1104
        %v1418 = vmul.f32 %v572, %v1208
        %v1419 = vmul.f32 %v573, %v1312
        %v1420 = vmul.f32 %v574, %v1416
        %v1421 = vld [vmem:[%s493] sm:$0xff]
        %v1422 = vld [vmem:[%s493 + $0x8] sm:$0xff]
        %s1423 = scalar_lea.vmem %s493, 16 [#allocation11]
        %v1424 = vld [vmem:[%s1423] sm:$0xff]
        %v1425 = vld [vmem:[%s1423 + $0x8] sm:$0xff]
        %v1426 = vadd.f32 %v1421, %v1424
        %v1427 = vadd.f32 %v1422, %v1425
        %v1428 = vld [vmem:[%s484] sm:$0xff]
        %v1429 = vld [vmem:[%s484 + $0x8] sm:$0xff]
        %s1430 = scalar_lea.vmem %s484, 16 [#allocation10]
        %v1431 = vld [vmem:[%s1430] sm:$0xff]
        %v1432 = vld [vmem:[%s1430 + $0x8] sm:$0xff]
        %v1433 = vadd.f32 %v1428, %v1431
        %v1434 = vadd.f32 %v1429, %v1432
        %v1435 = vld [vmem:[%s502] sm:$0xff]
        %v1436 = vld [vmem:[%s502 + $0x8] sm:$0xff]
        %s1437 = scalar_lea.vmem %s502, 16 [#allocation13]
        %v1438 = vld [vmem:[%s1437] sm:$0xff]
        %v1439 = vld [vmem:[%s1437 + $0x8] sm:$0xff]
        %v1440 = vadd.f32 %v997, %v1417
        %v1441 = vadd.f32 %v998, %v1418
        %v1442 = vadd.f32 %v999, %v1419
        %v1443 = vadd.f32 %v1000, %v1420
        %vm1444 = vcmask 130048
        %v1446 = vsel %vm1444, %v997, 0
        %v1449 = vsel %vm1444, %v998, 0
        %v1452 = vsel %vm1444, %v999, 0
        %v1455 = vsel %vm1444, %v1000, 0
        %1457 = vmatprep.subr.mxu0 0.0
        %1458 = vmatpush1.msra.mxu0 %v1421
        %1459 = vmatprep.subr.mxu0 0.0
        %1460 = vmatpush1.msra.mxu0 %v1422
        %1461 = vmatprep.subr.mxu0 0.0
        %1462 = vmatpush1.msra.mxu0 0.0
        %1463 = vmatprep.subr.mxu0 0.0
        %1464 = vmatpush1.msra.mxu0 0.0
        %1465 = vmatprep.subr.mxu0 0.0
        %1466 = vmatpush1.msra.mxu0 0.0
        %1467 = vmatprep.subr.mxu0 0.0
        %1468 = vmatpush1.msra.mxu0 0.0
        %1469 = vmatprep.subr.mxu0 0.0
        %1470 = vmatpush1.msra.mxu0 0.0
        %1471 = vmatprep.subr.mxu0 0.0
        %1472 = vmatpush1.msra.mxu0 0.0
        %1473 = vmatprep.subr.mxu0 0.0
        %1474 = vmatpush1.msra.mxu0 0.0
        %1475 = vmatprep.subr.mxu0 0.0
        %1476 = vmatpush1.msra.mxu0 0.0
        %1477 = vmatprep.subr.mxu0 0.0
        %1478 = vmatpush1.msra.mxu0 0.0
        %1479 = vmatprep.subr.mxu0 0.0
        %1480 = vmatpush1.msra.mxu0 0.0
        %1481 = vmatprep.subr.mxu0 0.0
        %1482 = vmatpush1.msra.mxu0 0.0
        %1483 = vmatprep.subr.mxu0 0.0
        %1484 = vmatpush1.msra.mxu0 0.0
        %1485 = vmatprep.subr.mxu0 0.0
        %1486 = vmatpush1.msra.mxu0 0.0
        %1487 = vmatprep.subr.mxu0 0.0
        %1488 = vmatpush1.msra.mxu0 0.0
        %1489 = vmatprep.subr.mxu0 0.0
        %1490 = vmatpush1.msra.mxu0 0.0
        %1491 = vmatprep.subr.mxu0 0.0
        %1492 = vmatpush1.msra.mxu0 0.0
        %1493 = vmatprep.subr.mxu0 0.0
        %1494 = vmatpush1.msra.mxu0 0.0
        %1495 = vmatprep.subr.mxu0 0.0
        %1496 = vmatpush1.msra.mxu0 0.0
        %1497 = vmatprep.subr.mxu0 0.0
        %1498 = vmatpush1.msra.mxu0 0.0
        %1499 = vmatprep.subr.mxu0 0.0
        %1500 = vmatpush1.msra.mxu0 0.0
        %1501 = vmatprep.subr.mxu0 0.0
        %1502 = vmatpush1.msra.mxu0 0.0
        %1503 = vmatprep.subr.mxu0 0.0
        %1504 = vmatpush1.msra.mxu0 0.0
        %1505 = vmatprep.subr.mxu0 0.0
        %1506 = vmatpush1.msra.mxu0 0.0
        %1507 = vmatprep.subr.mxu0 0.0
        %1508 = vmatpush1.msra.mxu0 0.0
        %1509 = vmatprep.subr.mxu0 0.0
        %1510 = vmatpush1.msra.mxu0 0.0
        %1511 = vmatprep.subr.mxu0 0.0
        %1512 = vmatpush1.msra.mxu0 0.0
        %1513 = vmatprep.subr.mxu0 0.0
        %1514 = vmatpush1.msra.mxu0 0.0
        %1515 = vmatprep.subr.mxu0 0.0
        %1516 = vmatpush1.msra.mxu0 0.0
        %1517 = vmatprep.subr.mxu0 0.0
        %1518 = vmatpush1.msra.mxu0 0.0
        %1519 = vmatprep.subr.mxu0 0.0
        %1520 = vmatpush1.msra.mxu0 0.0
        %1521 = vmatprep.mubr.f32.mxu0 0.0
        %1522 = vmatmul.mubr.f32.gmra.mrb[0].mxu0 %v1446
        %v1523 = vpop.f32.mrb[0].mxu0
        %v1524 = vadd.f32 0.0, %v1523
        %v1525 = vpop.f32.mrb[0].mxu0
        %1526 = vmatprep.mubr.f32.mxu0 0.0
        %1527 = vmatmul.mubr.f32.gmra.mrb[0].mxu0 %v1449
        %v1528 = vpop.f32.mrb[0].mxu0
        %v1529 = vadd.f32 0.0, %v1528
        %v1530 = vpop.f32.mrb[0].mxu0
        %1531 = vmatprep.mubr.f32.mxu0 0.0
        %1532 = vmatmul.mubr.f32.gmra.mrb[0].mxu0 %v1452
        %v1533 = vpop.f32.mrb[0].mxu0
        %v1534 = vadd.f32 0.0, %v1533
        %v1535 = vpop.f32.mrb[0].mxu0
        %1536 = vmatprep.mubr.f32.mxu0 0.0
        %1537 = vmatmul.mubr.f32.gmra.mrb[0].mxu0 %v1455
        %v1538 = vpop.f32.mrb[0].mxu0
        %v1539 = vadd.f32 0.0, %v1538
        %v1540 = vpop.f32.mrb[0].mxu0
        %1541 = vdwg.mxu0
        %v1543 = vsel %vm1444, %v1417, 0
        %v1546 = vsel %vm1444, %v1418, 0
        %v1549 = vsel %vm1444, %v1419, 0
        %v1552 = vsel %vm1444, %v1420, 0
        %1554 = vmatprep.subr.mxu0 0.0
        %1555 = vmatpush1.msra.mxu0 %v1424
        %1556 = vmatprep.subr.mxu0 0.0
        %1557 = vmatpush1.msra.mxu0 %v1425
        %1558 = vmatprep.subr.mxu0 0.0
        %1559 = vmatpush1.msra.mxu0 0.0
        %1560 = vmatprep.subr.mxu0 0.0
        %1561 = vmatpush1.msra.mxu0 0.0
        %1562 = vmatprep.subr.mxu0 0.0
        %1563 = vmatpush1.msra.mxu0 0.0
        %1564 = vmatprep.subr.mxu0 0.0
        %1565 = vmatpush1.msra.mxu0 0.0
        %1566 = vmatprep.subr.mxu0 0.0
        %1567 = vmatpush1.msra.mxu0 0.0
        %1568 = vmatprep.subr.mxu0 0.0
        %1569 = vmatpush1.msra.mxu0 0.0
        %1570 = vmatprep.subr.mxu0 0.0
        %1571 = vmatpush1.msra.mxu0 0.0
        %1572 = vmatprep.subr.mxu0 0.0
        %1573 = vmatpush1.msra.mxu0 0.0
        %1574 = vmatprep.subr.mxu0 0.0
        %1575 = vmatpush1.msra.mxu0 0.0
        %1576 = vmatprep.subr.mxu0 0.0
        %1577 = vmatpush1.msra.mxu0 0.0
        %1578 = vmatprep.subr.mxu0 0.0
        %1579 = vmatpush1.msra.mxu0 0.0
        %1580 = vmatprep.subr.mxu0 0.0
        %1581 = vmatpush1.msra.mxu0 0.0
        %1582 = vmatprep.subr.mxu0 0.0
        %1583 = vmatpush1.msra.mxu0 0.0
        %1584 = vmatprep.subr.mxu0 0.0
        %1585 = vmatpush1.msra.mxu0 0.0
        %1586 = vmatprep.subr.mxu0 0.0
        %1587 = vmatpush1.msra.mxu0 0.0
        %1588 = vmatprep.subr.mxu0 0.0
        %1589 = vmatpush1.msra.mxu0 0.0
        %1590 = vmatprep.subr.mxu0 0.0
        %1591 = vmatpush1.msra.mxu0 0.0
        %1592 = vmatprep.subr.mxu0 0.0
        %1593 = vmatpush1.msra.mxu0 0.0
        %1594 = vmatprep.subr.mxu0 0.0
        %1595 = vmatpush1.msra.mxu0 0.0
        %1596 = vmatprep.subr.mxu0 0.0
        %1597 = vmatpush1.msra.mxu0 0.0
        %1598 = vmatprep.subr.mxu0 0.0
        %1599 = vmatpush1.msra.mxu0 0.0
        %1600 = vmatprep.subr.mxu0 0.0
        %1601 = vmatpush1.msra.mxu0 0.0
        %1602 = vmatprep.subr.mxu0 0.0
        %1603 = vmatpush1.msra.mxu0 0.0
        %1604 = vmatprep.subr.mxu0 0.0
        %1605 = vmatpush1.msra.mxu0 0.0
        %1606 = vmatprep.subr.mxu0 0.0
        %1607 = vmatpush1.msra.mxu0 0.0
        %1608 = vmatprep.subr.mxu0 0.0
        %1609 = vmatpush1.msra.mxu0 0.0
        %1610 = vmatprep.subr.mxu0 0.0
        %1611 = vmatpush1.msra.mxu0 0.0
        %1612 = vmatprep.subr.mxu0 0.0
        %1613 = vmatpush1.msra.mxu0 0.0
        %1614 = vmatprep.subr.mxu0 0.0
        %1615 = vmatpush1.msra.mxu0 0.0
        %1616 = vmatprep.subr.mxu0 0.0
        %1617 = vmatpush1.msra.mxu0 0.0
        %1618 = vmatprep.mubr.f32.mxu0 0.0
        %1619 = vmatmul.mubr.f32.gmra.mrb[0].mxu0 %v1543
        %v1620 = vpop.f32.mrb[0].mxu0
        %v1621 = vadd.f32 0.0, %v1620
        %v1622 = vpop.f32.mrb[0].mxu0
        %1623 = vmatprep.mubr.f32.mxu0 0.0
        %1624 = vmatmul.mubr.f32.gmra.mrb[0].mxu0 %v1546
        %v1625 = vpop.f32.mrb[0].mxu0
        %v1626 = vadd.f32 0.0, %v1625
        %v1627 = vpop.f32.mrb[0].mxu0
        %1628 = vmatprep.mubr.f32.mxu0 0.0
        %1629 = vmatmul.mubr.f32.gmra.mrb[0].mxu0 %v1549
        %v1630 = vpop.f32.mrb[0].mxu0
        %v1631 = vadd.f32 0.0, %v1630
        %v1632 = vpop.f32.mrb[0].mxu0
        %1633 = vmatprep.mubr.f32.mxu0 0.0
        %1634 = vmatmul.mubr.f32.gmra.mrb[0].mxu0 %v1552
        %v1635 = vpop.f32.mrb[0].mxu0
        %v1636 = vadd.f32 0.0, %v1635
        %v1637 = vpop.f32.mrb[0].mxu0
        %1638 = vdwg.mxu0
        %v1640 = vsel %vm1444, %v1440, 0
        %v1643 = vsel %vm1444, %v1441, 0
        %v1646 = vsel %vm1444, %v1442, 0
        %v1649 = vsel %vm1444, %v1443, 0
        %1651 = vmatprep.subr.mxu0 0.0
        %1652 = vmatpush1.msra.mxu0 %v1426
        %1653 = vmatprep.subr.mxu0 0.0
        %1654 = vmatpush1.msra.mxu0 %v1427
        %1655 = vmatprep.subr.mxu0 0.0
        %1656 = vmatpush1.msra.mxu0 0.0
        %1657 = vmatprep.subr.mxu0 0.0
        %1658 = vmatpush1.msra.mxu0 0.0
        %1659 = vmatprep.subr.mxu0 0.0
        %1660 = vmatpush1.msra.mxu0 0.0
        %1661 = vmatprep.subr.mxu0 0.0
        %1662 = vmatpush1.msra.mxu0 0.0
        %1663 = vmatprep.subr.mxu0 0.0
        %1664 = vmatpush1.msra.mxu0 0.0
        %1665 = vmatprep.subr.mxu0 0.0
        %1666 = vmatpush1.msra.mxu0 0.0
        %1667 = vmatprep.subr.mxu0 0.0
        %1668 = vmatpush1.msra.mxu0 0.0
        %1669 = vmatprep.subr.mxu0 0.0
        %1670 = vmatpush1.msra.mxu0 0.0
        %1671 = vmatprep.subr.mxu0 0.0
        %1672 = vmatpush1.msra.mxu0 0.0
        %1673 = vmatprep.subr.mxu0 0.0
        %1674 = vmatpush1.msra.mxu0 0.0
        %1675 = vmatprep.subr.mxu0 0.0
        %1676 = vmatpush1.msra.mxu0 0.0
        %1677 = vmatprep.subr.mxu0 0.0
        %1678 = vmatpush1.msra.mxu0 0.0
        %1679 = vmatprep.subr.mxu0 0.0
        %1680 = vmatpush1.msra.mxu0 0.0
        %1681 = vmatprep.subr.mxu0 0.0
        %1682 = vmatpush1.msra.mxu0 0.0
        %1683 = vmatprep.subr.mxu0 0.0
        %1684 = vmatpush1.msra.mxu0 0.0
        %1685 = vmatprep.subr.mxu0 0.0
        %1686 = vmatpush1.msra.mxu0 0.0
        %1687 = vmatprep.subr.mxu0 0.0
        %1688 = vmatpush1.msra.mxu0 0.0
        %1689 = vmatprep.subr.mxu0 0.0
        %1690 = vmatpush1.msra.mxu0 0.0
        %1691 = vmatprep.subr.mxu0 0.0
        %1692 = vmatpush1.msra.mxu0 0.0
        %1693 = vmatprep.subr.mxu0 0.0
        %1694 = vmatpush1.msra.mxu0 0.0
        %1695 = vmatprep.subr.mxu0 0.0
        %1696 = vmatpush1.msra.mxu0 0.0
        %1697 = vmatprep.subr.mxu0 0.0
        %1698 = vmatpush1.msra.mxu0 0.0
        %1699 = vmatprep.subr.mxu0 0.0
        %1700 = vmatpush1.msra.mxu0 0.0
        %1701 = vmatprep.subr.mxu0 0.0
        %1702 = vmatpush1.msra.mxu0 0.0
        %1703 = vmatprep.subr.mxu0 0.0
        %1704 = vmatpush1.msra.mxu0 0.0
        %1705 = vmatprep.subr.mxu0 0.0
        %1706 = vmatpush1.msra.mxu0 0.0
        %1707 = vmatprep.subr.mxu0 0.0
        %1708 = vmatpush1.msra.mxu0 0.0
        %1709 = vmatprep.subr.mxu0 0.0
        %1710 = vmatpush1.msra.mxu0 0.0
        %1711 = vmatprep.subr.mxu0 0.0
        %1712 = vmatpush1.msra.mxu0 0.0
        %1713 = vmatprep.subr.mxu0 0.0
        %1714 = vmatpush1.msra.mxu0 0.0
        %1715 = vmatprep.mubr.f32.mxu0 0.0
        %1716 = vmatmul.mubr.f32.gmra.mrb[0].mxu0 %v1640
        %v1717 = vpop.f32.mrb[0].mxu0
        %v1718 = vadd.f32 0.0, %v1717
        %v1719 = vpop.f32.mrb[0].mxu0
        %1720 = vmatprep.mubr.f32.mxu0 0.0
        %1721 = vmatmul.mubr.f32.gmra.mrb[0].mxu0 %v1643
        %v1722 = vpop.f32.mrb[0].mxu0
        %v1723 = vadd.f32 0.0, %v1722
        %v1724 = vpop.f32.mrb[0].mxu0
        %1725 = vmatprep.mubr.f32.mxu0 0.0
        %1726 = vmatmul.mubr.f32.gmra.mrb[0].mxu0 %v1646
        %v1727 = vpop.f32.mrb[0].mxu0
        %v1728 = vadd.f32 0.0, %v1727
        %v1729 = vpop.f32.mrb[0].mxu0
        %1730 = vmatprep.mubr.f32.mxu0 0.0
        %1731 = vmatmul.mubr.f32.gmra.mrb[0].mxu0 %v1649
        %v1732 = vpop.f32.mrb[0].mxu0
        %v1733 = vadd.f32 0.0, %v1732
        %v1734 = vpop.f32.mrb[0].mxu0
        %1735 = vdwg.mxu0
        %v1736 = vsub.f32 %v1524, %v1621
        %v1737 = vsub.f32 %v1529, %v1626
        %v1738 = vsub.f32 %v1534, %v1631
        %v1739 = vsub.f32 %v1539, %v1636
        %v1740 = vsub.f32 %v1718, %v1524
        %v1741 = vsub.f32 %v1723, %v1529
        %v1742 = vsub.f32 %v1728, %v1534
        %v1743 = vsub.f32 %v1733, %v1539
        %v1744 = vsub.f32 %v1740, %v1621
        %v1745 = vsub.f32 %v1741, %v1626
        %v1746 = vsub.f32 %v1742, %v1631
        %v1747 = vsub.f32 %v1743, %v1636
        %v1748 = vadd.f32 %v1736, %v1744
        %v1749 = vadd.f32 %v1737, %v1745
        %v1751 = vsel %vm1444, %v1428, 0
        %v1754 = vsel %vm1444, %v1429, 0
        %1756 = vmatprep.subr.mxu0 0.0
        %1757 = vmatpush1.msra.mxu0 %v1736
        %1758 = vmatprep.subr.mxu0 0.0
        %1759 = vmatpush1.msra.mxu0 %v1737
        %1760 = vmatprep.subr.mxu0 0.0
        %1761 = vmatpush1.msra.mxu0 0.0
        %1762 = vmatprep.subr.mxu0 0.0
        %1763 = vmatpush1.msra.mxu0 0.0
        %1764 = vmatprep.subr.mxu0 0.0
        %1765 = vmatpush1.msra.mxu0 0.0
        %1766 = vmatprep.subr.mxu0 0.0
        %1767 = vmatpush1.msra.mxu0 0.0
        %1768 = vmatprep.subr.mxu0 0.0
        %1769 = vmatpush1.msra.mxu0 0.0
        %1770 = vmatprep.subr.mxu0 0.0
        %1771 = vmatpush1.msra.mxu0 0.0
        %1772 = vmatprep.subr.mxu0 0.0
        %1773 = vmatpush1.msra.mxu0 0.0
        %1774 = vmatprep.subr.mxu0 0.0
        %1775 = vmatpush1.msra.mxu0 0.0
        %1776 = vmatprep.subr.mxu0 0.0
        %1777 = vmatpush1.msra.mxu0 0.0
        %1778 = vmatprep.subr.mxu0 0.0
        %1779 = vmatpush1.msra.mxu0 0.0
        %1780 = vmatprep.subr.mxu0 0.0
        %1781 = vmatpush1.msra.mxu0 0.0
        %1782 = vmatprep.subr.mxu0 0.0
        %1783 = vmatpush1.msra.mxu0 0.0
        %1784 = vmatprep.subr.mxu0 0.0
        %1785 = vmatpush1.msra.mxu0 0.0
        %1786 = vmatprep.subr.mxu0 0.0
        %1787 = vmatpush1.msra.mxu0 0.0
        %1788 = vmatprep.subr.mxu0 0.0
        %1789 = vmatpush1.msra.mxu0 0.0
        %1790 = vmatprep.subr.mxu0 0.0
        %1791 = vmatpush1.msra.mxu0 0.0
        %1792 = vmatprep.subr.mxu0 0.0
        %1793 = vmatpush1.msra.mxu0 0.0
        %1794 = vmatprep.subr.mxu0 0.0
        %1795 = vmatpush1.msra.mxu0 0.0
        %1796 = vmatprep.subr.mxu0 0.0
        %1797 = vmatpush1.msra.mxu0 0.0
        %1798 = vmatprep.subr.mxu0 0.0
        %1799 = vmatpush1.msra.mxu0 0.0
        %1800 = vmatprep.subr.mxu0 0.0
        %1801 = vmatpush1.msra.mxu0 0.0
        %1802 = vmatprep.subr.mxu0 0.0
        %1803 = vmatpush1.msra.mxu0 0.0
        %1804 = vmatprep.subr.mxu0 0.0
        %1805 = vmatpush1.msra.mxu0 0.0
        %1806 = vmatprep.subr.mxu0 0.0
        %1807 = vmatpush1.msra.mxu0 0.0
        %1808 = vmatprep.subr.mxu0 0.0
        %1809 = vmatpush1.msra.mxu0 0.0
        %1810 = vmatprep.subr.mxu0 0.0
        %1811 = vmatpush1.msra.mxu0 0.0
        %1812 = vmatprep.subr.mxu0 0.0
        %1813 = vmatpush1.msra.mxu0 0.0
        %1814 = vmatprep.subr.mxu0 0.0
        %1815 = vmatpush1.msra.mxu0 0.0
        %1816 = vmatprep.subr.mxu0 0.0
        %1817 = vmatpush1.msra.mxu0 0.0
        %1818 = vmatprep.subr.mxu0 0.0
        %1819 = vmatpush1.msra.mxu0 0.0
        %1820 = vmatprep.mubr.f32.mxu0 0.0
        %1821 = vmatmul.mubr.f32.gmra.mrb[0].mxu0 %v1751
        %v1822 = vpop.f32.mrb[0].mxu0
        %v1823 = vadd.f32 0.0, %v1822
        %v1824 = vpop.f32.mrb[0].mxu0
        %1825 = vmatprep.mubr.f32.mxu0 0.0
        %1826 = vmatmul.mubr.f32.gmra.mrb[0].mxu0 %v1754
        %v1827 = vpop.f32.mrb[0].mxu0
        %v1828 = vadd.f32 0.0, %v1827
        %v1829 = vpop.f32.mrb[0].mxu0
        %1830 = vdwg.mxu0
        %v1832 = vsel %vm1444, %v1431, 0
        %v1835 = vsel %vm1444, %v1432, 0
        %1837 = vmatprep.subr.mxu0 0.0
        %1838 = vmatpush1.msra.mxu0 %v1744
        %1839 = vmatprep.subr.mxu0 0.0
        %1840 = vmatpush1.msra.mxu0 %v1745
        %1841 = vmatprep.subr.mxu0 0.0
        %1842 = vmatpush1.msra.mxu0 0.0
        %1843 = vmatprep.subr.mxu0 0.0
        %1844 = vmatpush1.msra.mxu0 0.0
        %1845 = vmatprep.subr.mxu0 0.0
        %1846 = vmatpush1.msra.mxu0 0.0
        %1847 = vmatprep.subr.mxu0 0.0
        %1848 = vmatpush1.msra.mxu0 0.0
        %1849 = vmatprep.subr.mxu0 0.0
        %1850 = vmatpush1.msra.mxu0 0.0
        %1851 = vmatprep.subr.mxu0 0.0
        %1852 = vmatpush1.msra.mxu0 0.0
        %1853 = vmatprep.subr.mxu0 0.0
        %1854 = vmatpush1.msra.mxu0 0.0
        %1855 = vmatprep.subr.mxu0 0.0
        %1856 = vmatpush1.msra.mxu0 0.0
        %1857 = vmatprep.subr.mxu0 0.0
        %1858 = vmatpush1.msra.mxu0 0.0
        %1859 = vmatprep.subr.mxu0 0.0
        %1860 = vmatpush1.msra.mxu0 0.0
        %1861 = vmatprep.subr.mxu0 0.0
        %1862 = vmatpush1.msra.mxu0 0.0
        %1863 = vmatprep.subr.mxu0 0.0
        %1864 = vmatpush1.msra.mxu0 0.0
        %1865 = vmatprep.subr.mxu0 0.0
        %1866 = vmatpush1.msra.mxu0 0.0
        %1867 = vmatprep.subr.mxu0 0.0
        %1868 = vmatpush1.msra.mxu0 0.0
        %1869 = vmatprep.subr.mxu0 0.0
        %1870 = vmatpush1.msra.mxu0 0.0
        %1871 = vmatprep.subr.mxu0 0.0
        %1872 = vmatpush1.msra.mxu0 0.0
        %1873 = vmatprep.subr.mxu0 0.0
        %1874 = vmatpush1.msra.mxu0 0.0
        %1875 = vmatprep.subr.mxu0 0.0
        %1876 = vmatpush1.msra.mxu0 0.0
        %1877 = vmatprep.subr.mxu0 0.0
        %1878 = vmatpush1.msra.mxu0 0.0
        %1879 = vmatprep.subr.mxu0 0.0
        %1880 = vmatpush1.msra.mxu0 0.0
        %1881 = vmatprep.subr.mxu0 0.0
        %1882 = vmatpush1.msra.mxu0 0.0
        %1883 = vmatprep.subr.mxu0 0.0
        %1884 = vmatpush1.msra.mxu0 0.0
        %1885 = vmatprep.subr.mxu0 0.0
        %1886 = vmatpush1.msra.mxu0 0.0
        %1887 = vmatprep.subr.mxu0 0.0
        %1888 = vmatpush1.msra.mxu0 0.0
        %1889 = vmatprep.subr.mxu0 0.0
        %1890 = vmatpush1.msra.mxu0 0.0
        %1891 = vmatprep.subr.mxu0 0.0
        %1892 = vmatpush1.msra.mxu0 0.0
        %1893 = vmatprep.subr.mxu0 0.0
        %1894 = vmatpush1.msra.mxu0 0.0
        %1895 = vmatprep.subr.mxu0 0.0
        %1896 = vmatpush1.msra.mxu0 0.0
        %1897 = vmatprep.subr.mxu0 0.0
        %1898 = vmatpush1.msra.mxu0 0.0
        %1899 = vmatprep.subr.mxu0 0.0
        %1900 = vmatpush1.msra.mxu0 0.0
        %1901 = vmatprep.mubr.f32.mxu0 0.0
        %1902 = vmatmul.mubr.f32.gmra.mrb[0].mxu0 %v1832
        %v1903 = vpop.f32.mrb[0].mxu0
        %v1904 = vadd.f32 0.0, %v1903
        %v1905 = vpop.f32.mrb[0].mxu0
        %1906 = vmatprep.mubr.f32.mxu0 0.0
        %1907 = vmatmul.mubr.f32.gmra.mrb[0].mxu0 %v1835
        %v1908 = vpop.f32.mrb[0].mxu0
        %v1909 = vadd.f32 0.0, %v1908
        %v1910 = vpop.f32.mrb[0].mxu0
        %1911 = vdwg.mxu0
        %v1913 = vsel %vm1444, %v1433, 0
        %v1916 = vsel %vm1444, %v1434, 0
        %1918 = vmatprep.subr.mxu0 0.0
        %1919 = vmatpush1.msra.mxu0 %v1748
        %1920 = vmatprep.subr.mxu0 0.0
        %1921 = vmatpush1.msra.mxu0 %v1749
        %1922 = vmatprep.subr.mxu0 0.0
        %1923 = vmatpush1.msra.mxu0 0.0
        %1924 = vmatprep.subr.mxu0 0.0
        %1925 = vmatpush1.msra.mxu0 0.0
        %1926 = vmatprep.subr.mxu0 0.0
        %1927 = vmatpush1.msra.mxu0 0.0
        %1928 = vmatprep.subr.mxu0 0.0
        %1929 = vmatpush1.msra.mxu0 0.0
        %1930 = vmatprep.subr.mxu0 0.0
        %1931 = vmatpush1.msra.mxu0 0.0
        %1932 = vmatprep.subr.mxu0 0.0
        %1933 = vmatpush1.msra.mxu0 0.0
        %1934 = vmatprep.subr.mxu0 0.0
        %1935 = vmatpush1.msra.mxu0 0.0
        %1936 = vmatprep.subr.mxu0 0.0
        %1937 = vmatpush1.msra.mxu0 0.0
        %1938 = vmatprep.subr.mxu0 0.0
        %1939 = vmatpush1.msra.mxu0 0.0
        %1940 = vmatprep.subr.mxu0 0.0
        %1941 = vmatpush1.msra.mxu0 0.0
        %1942 = vmatprep.subr.mxu0 0.0
        %1943 = vmatpush1.msra.mxu0 0.0
        %1944 = vmatprep.subr.mxu0 0.0
        %1945 = vmatpush1.msra.mxu0 0.0
        %1946 = vmatprep.subr.mxu0 0.0
        %1947 = vmatpush1.msra.mxu0 0.0
        %1948 = vmatprep.subr.mxu0 0.0
        %1949 = vmatpush1.msra.mxu0 0.0
        %1950 = vmatprep.subr.mxu0 0.0
        %1951 = vmatpush1.msra.mxu0 0.0
        %1952 = vmatprep.subr.mxu0 0.0
        %1953 = vmatpush1.msra.mxu0 0.0
        %1954 = vmatprep.subr.mxu0 0.0
        %1955 = vmatpush1.msra.mxu0 0.0
        %1956 = vmatprep.subr.mxu0 0.0
        %1957 = vmatpush1.msra.mxu0 0.0
        %1958 = vmatprep.subr.mxu0 0.0
        %1959 = vmatpush1.msra.mxu0 0.0
        %1960 = vmatprep.subr.mxu0 0.0
        %1961 = vmatpush1.msra.mxu0 0.0
        %1962 = vmatprep.subr.mxu0 0.0
        %1963 = vmatpush1.msra.mxu0 0.0
        %1964 = vmatprep.subr.mxu0 0.0
        %1965 = vmatpush1.msra.mxu0 0.0
        %1966 = vmatprep.subr.mxu0 0.0
        %1967 = vmatpush1.msra.mxu0 0.0
        %1968 = vmatprep.subr.mxu0 0.0
        %1969 = vmatpush1.msra.mxu0 0.0
        %1970 = vmatprep.subr.mxu0 0.0
        %1971 = vmatpush1.msra.mxu0 0.0
        %1972 = vmatprep.subr.mxu0 0.0
        %1973 = vmatpush1.msra.mxu0 0.0
        %1974 = vmatprep.subr.mxu0 0.0
        %1975 = vmatpush1.msra.mxu0 0.0
        %1976 = vmatprep.subr.mxu0 0.0
        %1977 = vmatpush1.msra.mxu0 0.0
        %1978 = vmatprep.subr.mxu0 0.0
        %1979 = vmatpush1.msra.mxu0 0.0
        %1980 = vmatprep.subr.mxu0 0.0
        %1981 = vmatpush1.msra.mxu0 0.0
        %1982 = vmatprep.mubr.f32.mxu0 0.0
        %1983 = vmatmul.mubr.f32.gmra.mrb[0].mxu0 %v1913
        %v1984 = vpop.f32.mrb[0].mxu0
        %v1985 = vadd.f32 0.0, %v1984
        %v1986 = vpop.f32.mrb[0].mxu0
        %1987 = vmatprep.mubr.f32.mxu0 0.0
        %1988 = vmatmul.mubr.f32.gmra.mrb[0].mxu0 %v1916
        %v1989 = vpop.f32.mrb[0].mxu0
        %v1990 = vadd.f32 0.0, %v1989
        %v1991 = vpop.f32.mrb[0].mxu0
        %1992 = vdwg.mxu0
        %v1993 = vsub.f32 %v1823, %v1904
        %v1994 = vsub.f32 %v1828, %v1909
        %v1995 = vsub.f32 %v1985, %v1823
        %v1996 = vsub.f32 %v1990, %v1828
        %v1997 = vsub.f32 %v1995, %v1904
        %v1998 = vsub.f32 %v1996, %v1909
        %v1999 = vmul.f32 %v1993, %v1435
        %v2000 = vmul.f32 %v1994, %v1436
        %v2001 = vmul.f32 %v1997, %v1438
        %v2002 = vmul.f32 %v1998, %v1439
        %v2003 = vsub.f32 %v1999, %v2001
        %v2004 = vsub.f32 %v2000, %v2002
        %2005 = vst.msk [vmem:[%s557] sm:$0xff] %vm1444, %v2003
        %2006 = vst.msk [vmem:[%s557 + $0x8] sm:$0xff] %vm1444, %v2004
        %v2007 = vmul.f32 %v1993, %v1438
        %v2008 = vmul.f32 %v1994, %v1439
        %v2009 = vmul.f32 %v1997, %v1435
        %v2010 = vmul.f32 %v1998, %v1436
        %v2011 = vadd.f32 %v2007, %v2009
        %v2012 = vadd.f32 %v2008, %v2010
        %2013 = vst.msk [vmem:[%s564] sm:$0xff] %vm1444, %v2011
        %2014 = vst.msk [vmem:[%s564 + $0x8] sm:$0xff] %vm1444, %v2012
        %v2015 = vadd.f32 %v1738, %v1746
        %v2016 = vadd.f32 %v1739, %v1747
        %2017 = vmatprep.subr.mxu0 0.0
        %2018 = vmatpush1.msra.mxu0 %v1738
        %2019 = vmatprep.subr.mxu0 0.0
        %2020 = vmatpush1.msra.mxu0 %v1739
        %2021 = vmatprep.subr.mxu0 0.0
        %2022 = vmatpush1.msra.mxu0 0.0
        %2023 = vmatprep.subr.mxu0 0.0
        %2024 = vmatpush1.msra.mxu0 0.0
        %2025 = vmatprep.subr.mxu0 0.0
        %2026 = vmatpush1.msra.mxu0 0.0
        %2027 = vmatprep.subr.mxu0 0.0
        %2028 = vmatpush1.msra.mxu0 0.0
        %2029 = vmatprep.subr.mxu0 0.0
        %2030 = vmatpush1.msra.mxu0 0.0
        %2031 = vmatprep.subr.mxu0 0.0
        %2032 = vmatpush1.msra.mxu0 0.0
        %2033 = vmatprep.subr.mxu0 0.0
        %2034 = vmatpush1.msra.mxu0 0.0
        %2035 = vmatprep.subr.mxu0 0.0
        %2036 = vmatpush1.msra.mxu0 0.0
        %2037 = vmatprep.subr.mxu0 0.0
        %2038 = vmatpush1.msra.mxu0 0.0
        %2039 = vmatprep.subr.mxu0 0.0
        %2040 = vmatpush1.msra.mxu0 0.0
        %2041 = vmatprep.subr.mxu0 0.0
        %2042 = vmatpush1.msra.mxu0 0.0
        %2043 = vmatprep.subr.mxu0 0.0
        %2044 = vmatpush1.msra.mxu0 0.0
        %2045 = vmatprep.subr.mxu0 0.0
        %2046 = vmatpush1.msra.mxu0 0.0
        %2047 = vmatprep.subr.mxu0 0.0
        %2048 = vmatpush1.msra.mxu0 0.0
        %2049 = vmatprep.subr.mxu0 0.0
        %2050 = vmatpush1.msra.mxu0 0.0
        %2051 = vmatprep.subr.mxu0 0.0
        %2052 = vmatpush1.msra.mxu0 0.0
        %2053 = vmatprep.subr.mxu0 0.0
        %2054 = vmatpush1.msra.mxu0 0.0
        %2055 = vmatprep.subr.mxu0 0.0
        %2056 = vmatpush1.msra.mxu0 0.0
        %2057 = vmatprep.subr.mxu0 0.0
        %2058 = vmatpush1.msra.mxu0 0.0
        %2059 = vmatprep.subr.mxu0 0.0
        %2060 = vmatpush1.msra.mxu0 0.0
        %2061 = vmatprep.subr.mxu0 0.0
        %2062 = vmatpush1.msra.mxu0 0.0
        %2063 = vmatprep.subr.mxu0 0.0
        %2064 = vmatpush1.msra.mxu0 0.0
        %2065 = vmatprep.subr.mxu0 0.0
        %2066 = vmatpush1.msra.mxu0 0.0
        %2067 = vmatprep.subr.mxu0 0.0
        %2068 = vmatpush1.msra.mxu0 0.0
        %2069 = vmatprep.subr.mxu0 0.0
        %2070 = vmatpush1.msra.mxu0 0.0
        %2071 = vmatprep.subr.mxu0 0.0
        %2072 = vmatpush1.msra.mxu0 0.0
        %2073 = vmatprep.subr.mxu0 0.0
        %2074 = vmatpush1.msra.mxu0 0.0
        %2075 = vmatprep.subr.mxu0 0.0
        %2076 = vmatpush1.msra.mxu0 0.0
        %2077 = vmatprep.subr.mxu0 0.0
        %2078 = vmatpush1.msra.mxu0 0.0
        %2079 = vmatprep.subr.mxu0 0.0
        %2080 = vmatpush1.msra.mxu0 0.0
        %2081 = vmatprep.mubr.f32.mxu0 0.0
        %2082 = vmatmul.mubr.f32.gmra.mrb[0].mxu0 %v1751
        %v2083 = vpop.f32.mrb[0].mxu0
        %v2084 = vadd.f32 0.0, %v2083
        %v2085 = vpop.f32.mrb[0].mxu0
        %2086 = vmatprep.mubr.f32.mxu0 0.0
        %2087 = vmatmul.mubr.f32.gmra.mrb[0].mxu0 %v1754
        %v2088 = vpop.f32.mrb[0].mxu0
        %v2089 = vadd.f32 0.0, %v2088
        %v2090 = vpop.f32.mrb[0].mxu0
        %2091 = vdwg.mxu0
        %2092 = vmatprep.subr.mxu0 0.0
        %2093 = vmatpush1.msra.mxu0 %v1746
        %2094 = vmatprep.subr.mxu0 0.0
        %2095 = vmatpush1.msra.mxu0 %v1747
        %2096 = vmatprep.subr.mxu0 0.0
        %2097 = vmatpush1.msra.mxu0 0.0
        %2098 = vmatprep.subr.mxu0 0.0
        %2099 = vmatpush1.msra.mxu0 0.0
        %2100 = vmatprep.subr.mxu0 0.0
        %2101 = vmatpush1.msra.mxu0 0.0
        %2102 = vmatprep.subr.mxu0 0.0
        %2103 = vmatpush1.msra.mxu0 0.0
        %2104 = vmatprep.subr.mxu0 0.0
        %2105 = vmatpush1.msra.mxu0 0.0
        %2106 = vmatprep.subr.mxu0 0.0
        %2107 = vmatpush1.msra.mxu0 0.0
        %2108 = vmatprep.subr.mxu0 0.0
        %2109 = vmatpush1.msra.mxu0 0.0
        %2110 = vmatprep.subr.mxu0 0.0
        %2111 = vmatpush1.msra.mxu0 0.0
        %2112 = vmatprep.subr.mxu0 0.0
        %2113 = vmatpush1.msra.mxu0 0.0
        %2114 = vmatprep.subr.mxu0 0.0
        %2115 = vmatpush1.msra.mxu0 0.0
        %2116 = vmatprep.subr.mxu0 0.0
        %2117 = vmatpush1.msra.mxu0 0.0
        %2118 = vmatprep.subr.mxu0 0.0
        %2119 = vmatpush1.msra.mxu0 0.0
        %2120 = vmatprep.subr.mxu0 0.0
        %2121 = vmatpush1.msra.mxu0 0.0
        %2122 = vmatprep.subr.mxu0 0.0
        %2123 = vmatpush1.msra.mxu0 0.0
        %2124 = vmatprep.subr.mxu0 0.0
        %2125 = vmatpush1.msra.mxu0 0.0
        %2126 = vmatprep.subr.mxu0 0.0
        %2127 = vmatpush1.msra.mxu0 0.0
        %2128 = vmatprep.subr.mxu0 0.0
        %2129 = vmatpush1.msra.mxu0 0.0
        %2130 = vmatprep.subr.mxu0 0.0
        %2131 = vmatpush1.msra.mxu0 0.0
        %2132 = vmatprep.subr.mxu0 0.0
        %2133 = vmatpush1.msra.mxu0 0.0
        %2134 = vmatprep.subr.mxu0 0.0
        %2135 = vmatpush1.msra.mxu0 0.0
        %2136 = vmatprep.subr.mxu0 0.0
        %2137 = vmatpush1.msra.mxu0 0.0
        %2138 = vmatprep.subr.mxu0 0.0
        %2139 = vmatpush1.msra.mxu0 0.0
        %2140 = vmatprep.subr.mxu0 0.0
        %2141 = vmatpush1.msra.mxu0 0.0
        %2142 = vmatprep.subr.mxu0 0.0
        %2143 = vmatpush1.msra.mxu0 0.0
        %2144 = vmatprep.subr.mxu0 0.0
        %2145 = vmatpush1.msra.mxu0 0.0
        %2146 = vmatprep.subr.mxu0 0.0
        %2147 = vmatpush1.msra.mxu0 0.0
        %2148 = vmatprep.subr.mxu0 0.0
        %2149 = vmatpush1.msra.mxu0 0.0
        %2150 = vmatprep.subr.mxu0 0.0
        %2151 = vmatpush1.msra.mxu0 0.0
        %2152 = vmatprep.subr.mxu0 0.0
        %2153 = vmatpush1.msra.mxu0 0.0
        %2154 = vmatprep.subr.mxu0 0.0
        %2155 = vmatpush1.msra.mxu0 0.0
        %2156 = vmatprep.mubr.f32.mxu0 0.0
        %2157 = vmatmul.mubr.f32.gmra.mrb[0].mxu0 %v1832
        %v2158 = vpop.f32.mrb[0].mxu0
        %v2159 = vadd.f32 0.0, %v2158
        %v2160 = vpop.f32.mrb[0].mxu0
        %2161 = vmatprep.mubr.f32.mxu0 0.0
        %2162 = vmatmul.mubr.f32.gmra.mrb[0].mxu0 %v1835
        %v2163 = vpop.f32.mrb[0].mxu0
        %v2164 = vadd.f32 0.0, %v2163
        %v2165 = vpop.f32.mrb[0].mxu0
        %2166 = vdwg.mxu0
        %2167 = vmatprep.subr.mxu0 0.0
        %2168 = vmatpush1.msra.mxu0 %v2015
        %2169 = vmatprep.subr.mxu0 0.0
        %2170 = vmatpush1.msra.mxu0 %v2016
        %2171 = vmatprep.subr.mxu0 0.0
        %2172 = vmatpush1.msra.mxu0 0.0
        %2173 = vmatprep.subr.mxu0 0.0
        %2174 = vmatpush1.msra.mxu0 0.0
        %2175 = vmatprep.subr.mxu0 0.0
        %2176 = vmatpush1.msra.mxu0 0.0
        %2177 = vmatprep.subr.mxu0 0.0
        %2178 = vmatpush1.msra.mxu0 0.0
        %2179 = vmatprep.subr.mxu0 0.0
        %2180 = vmatpush1.msra.mxu0 0.0
        %2181 = vmatprep.subr.mxu0 0.0
        %2182 = vmatpush1.msra.mxu0 0.0
        %2183 = vmatprep.subr.mxu0 0.0
        %2184 = vmatpush1.msra.mxu0 0.0
        %2185 = vmatprep.subr.mxu0 0.0
        %2186 = vmatpush1.msra.mxu0 0.0
        %2187 = vmatprep.subr.mxu0 0.0
        %2188 = vmatpush1.msra.mxu0 0.0
        %2189 = vmatprep.subr.mxu0 0.0
        %2190 = vmatpush1.msra.mxu0 0.0
        %2191 = vmatprep.subr.mxu0 0.0
        %2192 = vmatpush1.msra.mxu0 0.0
        %2193 = vmatprep.subr.mxu0 0.0
        %2194 = vmatpush1.msra.mxu0 0.0
        %2195 = vmatprep.subr.mxu0 0.0
        %2196 = vmatpush1.msra.mxu0 0.0
        %2197 = vmatprep.subr.mxu0 0.0
        %2198 = vmatpush1.msra.mxu0 0.0
        %2199 = vmatprep.subr.mxu0 0.0
        %2200 = vmatpush1.msra.mxu0 0.0
        %2201 = vmatprep.subr.mxu0 0.0
        %2202 = vmatpush1.msra.mxu0 0.0
        %2203 = vmatprep.subr.mxu0 0.0
        %2204 = vmatpush1.msra.mxu0 0.0
        %2205 = vmatprep.subr.mxu0 0.0
        %2206 = vmatpush1.msra.mxu0 0.0
        %2207 = vmatprep.subr.mxu0 0.0
        %2208 = vmatpush1.msra.mxu0 0.0
        %2209 = vmatprep.subr.mxu0 0.0
        %2210 = vmatpush1.msra.mxu0 0.0
        %2211 = vmatprep.subr.mxu0 0.0
        %2212 = vmatpush1.msra.mxu0 0.0
        %2213 = vmatprep.subr.mxu0 0.0
        %2214 = vmatpush1.msra.mxu0 0.0
        %2215 = vmatprep.subr.mxu0 0.0
        %2216 = vmatpush1.msra.mxu0 0.0
        %2217 = vmatprep.subr.mxu0 0.0
        %2218 = vmatpush1.msra.mxu0 0.0
        %2219 = vmatprep.subr.mxu0 0.0
        %2220 = vmatpush1.msra.mxu0 0.0
        %2221 = vmatprep.subr.mxu0 0.0
        %2222 = vmatpush1.msra.mxu0 0.0
        %2223 = vmatprep.subr.mxu0 0.0
        %2224 = vmatpush1.msra.mxu0 0.0
        %2225 = vmatprep.subr.mxu0 0.0
        %2226 = vmatpush1.msra.mxu0 0.0
        %2227 = vmatprep.subr.mxu0 0.0
        %2228 = vmatpush1.msra.mxu0 0.0
        %2229 = vmatprep.subr.mxu0 0.0
        %2230 = vmatpush1.msra.mxu0 0.0
        %2231 = vmatprep.mubr.f32.mxu0 0.0
        %2232 = vmatmul.mubr.f32.gmra.mrb[0].mxu0 %v1913
        %v2233 = vpop.f32.mrb[0].mxu0
        %v2234 = vadd.f32 0.0, %v2233
        %v2235 = vpop.f32.mrb[0].mxu0
        %2236 = vmatprep.mubr.f32.mxu0 0.0
        %2237 = vmatmul.mubr.f32.gmra.mrb[0].mxu0 %v1916
        %v2238 = vpop.f32.mrb[0].mxu0
        %v2239 = vadd.f32 0.0, %v2238
        %v2240 = vpop.f32.mrb[0].mxu0
        %2241 = vdwg.mxu0
        %v2242 = vsub.f32 %v2084, %v2159
        %v2243 = vsub.f32 %v2089, %v2164
        %v2244 = vsub.f32 %v2234, %v2084
        %v2245 = vsub.f32 %v2239, %v2089
        %v2246 = vsub.f32 %v2244, %v2159
        %v2247 = vsub.f32 %v2245, %v2164
        %v2248 = vmul.f32 %v2242, %v1435
        %v2249 = vmul.f32 %v2243, %v1436
        %v2250 = vmul.f32 %v2246, %v1438
        %v2251 = vmul.f32 %v2247, %v1439
        %v2252 = vsub.f32 %v2248, %v2250
        %v2253 = vsub.f32 %v2249, %v2251
        %s2254 = scalar_lea.vmem %s557, 16 [#allocation14]
        %2255 = vst.msk [vmem:[%s2254] sm:$0xff] %vm1444, %v2252
        %2256 = vst.msk [vmem:[%s2254 + $0x8] sm:$0xff] %vm1444, %v2253
        %v2257 = vmul.f32 %v2242, %v1438
        %v2258 = vmul.f32 %v2243, %v1439
        %v2259 = vmul.f32 %v2246, %v1435
        %v2260 = vmul.f32 %v2247, %v1436
        %v2261 = vadd.f32 %v2257, %v2259
        %v2262 = vadd.f32 %v2258, %v2260
        %s2263 = scalar_lea.vmem %s564, 16 [#allocation15]
        %2264 = vst.msk [vmem:[%s2263] sm:$0xff] %vm1444, %v2261
        %2265 = vst.msk [vmem:[%s2263 + $0x8] sm:$0xff] %vm1444, %v2262
        %s2266 = sand.u32 %s241, 1
        %s2267 = scalar_lea.sflag [#allocation4], %s2266
        %s2268 = sand.u32 %s241, 1
        %s2269 = smul.addr %s2268, 32
        %s2270 = scalar_lea.vmem [#allocation14], %s2269
        %s2271 = sand.u32 %s269, 1
        %s2272 = scalar_lea.sflag [#allocation16], %s2271
        %s2273 = sand.u32 %s269, 1
        %s2274 = smul.addr %s2273, 32
        %s2275 = scalar_lea.vmem [#allocation15], %s2274
        // Predicated region
        $region77: #{tpu_custom_call.1} parent=47 // pred_check
          %p2276 = pneg %p251
        $region78: #{tpu_custom_call.1} parent=47 // pred_check_branch
          %2278 = sbr.rel (%p2276) target = $region80
        $region79: #{tpu_custom_call.1} parent=47 // pred_region
          %s2280 = ssub.s32 512, 512
          %2281 = vsyncadd %s2267, %s2280
          %s2282 = smul.addr %s42, 4
          %s2283 = sadd.s32 %s43, %s2282
          %s2284 = smul.addr %s2283, 128
          %s2285 = scalar_lea.hbm %s7, %s2284
          %s2286 = sshll.u32 %s2270, 4
          %s2287 = int_to_ptr.vmem [resolvable:$true] %s2286
          %2292 = dma.vmem_to_hbm [thread:$0]  %s2287, 512, %s2285, %s2267, 128, 128, 8
        $region80: #{tpu_custom_call.1} parent=47 // pred_fallthru
          _
        // Predicated region
        $region81: #{tpu_custom_call.1} parent=47 // pred_check
          %p2293 = pneg %p279
        $region82: #{tpu_custom_call.1} parent=47 // pred_check_branch
          %2295 = sbr.rel (%p2293) target = $region84
        $region83: #{tpu_custom_call.1} parent=47 // pred_region
          %s2297 = ssub.s32 512, 512
          %2298 = vsyncadd %s2272, %s2297
          %s2299 = smul.addr %s42, 4
          %s2300 = sadd.s32 %s43, %s2299
          %s2301 = smul.addr %s2300, 128
          %s2302 = scalar_lea.hbm %s8, %s2301
          %s2303 = sshll.u32 %s2275, 4
          %s2304 = int_to_ptr.vmem [resolvable:$true] %s2303
          %2309 = dma.vmem_to_hbm [thread:$0]  %s2304, 512, %s2302, %s2272, 128, 128, 8
        $region84: #{tpu_custom_call.1} parent=47 // pred_fallthru
          _
      $region48: #{tpu_custom_call.1} parent=5 // pred_fallthru
        _
      %p2310 = scmp.le.s32.totalorder 2, %s33
      // Predicated region
      $region85: #{tpu_custom_call.1} parent=5 // pred_check
        %p2311 = pneg %p2310
      $region86: #{tpu_custom_call.1} parent=5 // pred_check_branch
        %2313 = sbr.rel (%p2311) target = $region88
      $region87: #{tpu_custom_call.1} parent=5 // pred_region
        %s2314 = ssub.s32 %s33, 2
        // Predicated region
        $region89: #{tpu_custom_call.1} parent=87 // pred_check
          %p2315 = pneg %p257
        $region90: #{tpu_custom_call.1} parent=87 // pred_check_branch
          %2317 = sbr.rel (%p2315) target = $region92
        $region91: #{tpu_custom_call.1} parent=87 // pred_region
          %s2318 = sand.u32 %s242, 1
          %s2319 = scalar_lea.sflag [#allocation4], %s2318
          %s2320 = sand.u32 %s242, 1
          %s2321 = smul.addr %s2320, 32
          %s2322 = scalar_lea.vmem [#allocation14], %s2321
          %2323 = dma.done %s2319, 512
        $region92: #{tpu_custom_call.1} parent=87 // pred_fallthru
          _
        // Predicated region
        $region93: #{tpu_custom_call.1} parent=87 // pred_check
          %p2324 = pneg %p285
        $region94: #{tpu_custom_call.1} parent=87 // pred_check_branch
          %2326 = sbr.rel (%p2324) target = $region96
        $region95: #{tpu_custom_call.1} parent=87 // pred_region
          %s2327 = sand.u32 %s270, 1
          %s2328 = scalar_lea.sflag [#allocation16], %s2327
          %s2329 = sand.u32 %s270, 1
          %s2330 = smul.addr %s2329, 32
          %s2331 = scalar_lea.vmem [#allocation15], %s2330
          %2332 = dma.done %s2328, 512
        $region96: #{tpu_custom_call.1} parent=87 // pred_fallthru
          _
      $region88: #{tpu_custom_call.1} parent=5 // pred_fallthru
        _
    $region6: #{tpu_custom_call.1} parent=1 // loop_footer
      %s37 = sadd.s32 1, %s33
    $region7: #{tpu_custom_call.1} parent=1 // loop_footer_branch
      %32 = sbr.rel target = $region3
    $region8: #{tpu_custom_call.1} parent=1 // loop_exit
      _
    %2333 = vsyncpa [#allocation3], 1
    %s2334 = scalar_lea.sflag [#allocation3], 1
    %2335 = vsyncpa %s2334, 1
    %2336 = vsyncpa [#allocation6], 1
    %s2337 = scalar_lea.sflag [#allocation6], 1
    %2338 = vsyncpa %s2337, 1
    %2339 = vsyncpa [#allocation9], 1
    %s2340 = scalar_lea.sflag [#allocation9], 1
    %2341 = vsyncpa %s2340, 1
    %2342 = vsyncpa [#allocation12], 1
    %s2343 = scalar_lea.sflag [#allocation12], 1
    %2344 = vsyncpa %s2343, 1
    %2345 = vsyncpa [#allocation4], 1
    %s2346 = scalar_lea.sflag [#allocation4], 1
    %2347 = vsyncpa %s2346, 1
    %2348 = vsyncpa [#allocation16], 1
    %s2349 = scalar_lea.sflag [#allocation16], 1
    %2350 = vsyncpa %s2349, 1

</llo_original>
